<compile_context>
chip_gen: v5e
topology: v5e:2x2
jax: 0.10.0
libtpu: 0.0.40
codegen_flags: <defaults>
</compile_context>

<pallas_src>
import jax
import jax.numpy as jnp
from jax.experimental import pallas as pl
from jax.experimental.pallas import tpu as pltpu


_LANE = 128                                  # TPU lane width
_DEFAULT_VMEM_CAP_BYTES = 64 * 1024 * 1024   # v7x per-TC capacity: safe lower bound


# --------------------------------------------------------------------------- #
# Kernel bodies
# --------------------------------------------------------------------------- #
def _kernel_ref_strided(x_ref, o_ref):
    """Fused deinterleave via lane-stride-2 ref loads. x_ref: (tb, 2*tl)."""
    tl = o_ref.shape[-1]
    o_ref[...] = (x_ref[:, pl.ds(0, tl, stride=2)]
                  - x_ref[:, pl.ds(1, tl, stride=2)])


def _kernel_value_strided(x_ref, o_ref):
    """Fused deinterleave via a strided slice on the loaded value."""
    v = x_ref[...]
    o_ref[...] = v[:, 0::2] - v[:, 1::2]


def _kernel_value_reshape(x_ref, o_ref):
    """Fused deinterleave via an in-register (tb, tl, 2) reshape."""
    tb, tl = o_ref.shape
    v = x_ref[...].reshape(tb, tl, 2)
    o_ref[...] = v[:, :, 0] - v[:, :, 1]


def _planes_kernel(x_ref, o_ref):
    """Compatibility path: pre-separated planes. x_ref: (2, tb, tl)."""
    o_ref[...] = x_ref[0] - x_ref[1]


# --------------------------------------------------------------------------- #
# Hardware-aware parameters
# --------------------------------------------------------------------------- #
def _chip_params():
    """(block working-set budget, scoped-VMEM limit, auto-path crossover bytes)."""
    try:
        cap = int(pltpu.get_tpu_info().vmem_capacity_bytes)
    except Exception:
        cap = _DEFAULT_VMEM_CAP_BYTES
    budget = min(cap // 4, 32 * 1024 * 1024)   # double-buffered blocks
    limit = min(cap // 2, 64 * 1024 * 1024)    # explicit Mosaic scoped-VMEM limit
    # Small-VMEM / high-bandwidth parts (v7x: 64 MiB per TC, 3.2 TB/s) have a much
    # higher crossover vs. XLA's fused slice-subtract than v5e/v6e.
    min_auto = 4 * 1024 * 1024 if cap <= 64 * 1024 * 1024 else 2 * 1024 * 1024
    return budget, limit, min_auto


def _sublane_quantum(dtype) -> int:
    """Packed sublane quantum: 8 for f32, 16 for bf16, 32 for int8/fp8."""
    return max(8, 32 // jnp.dtype(dtype).itemsize)


def _choose_tiles(B, M, itemsize, sub_q, budget_bytes):
    """Pick (tb, tl) for a cdiv grid: prefer full rows, stay in the VMEM budget."""
    # Per grid step: input block (tb, 2*tl) + output block (tb, tl), both
    # double-buffered by the pipeline -> ~6 * tb * tl resident elements.
    budget_elems = max(budget_bytes // (6 * itemsize), sub_q * _LANE)

    if M * sub_q <= budget_elems:
        # Full measurement rows: contiguous input and output DMA streams.
        tl = M
        tb = (budget_elems // M) // sub_q * sub_q
        if B <= tb:
            tb = B                      # tb == full B is always layout-legal
    else:
        tb = B if B < sub_q else sub_q
        tl = (budget_elems // tb) // _LANE * _LANE
        tl = min(M, max(_LANE, tl))

    # Ensure >=2 blocks so both v7x TensorCores get independent DMA streams.
    if pl.cdiv(B, tb) * pl.cdiv(M, tl) < 2:
        if tl == M and M >= 2 * _LANE:
            tl = pl.cdiv(pl.cdiv(M, 2), _LANE) * _LANE
        elif tb == B and B >= 2 * sub_q:
            tb = pl.cdiv(pl.cdiv(B, 2), sub_q) * sub_q
    return tb, tl


# --------------------------------------------------------------------------- #
# pallas_call builders
# --------------------------------------------------------------------------- #
def _fused_call(body, x2, B, M, tb, tl, vmem_limit):
    """Kernel reads contiguous (tb, 2*tl) blocks of the raw (B, 2M) array."""
    grid = (pl.cdiv(B, tb), pl.cdiv(M, tl))
    return pl.pallas_call(
        body,
        out_shape=jax.ShapeDtypeStruct((B, M), x2.dtype),
        grid=grid,
        in_specs=[pl.BlockSpec((tb, 2 * tl), lambda i, j: (i, j))],
        out_specs=pl.BlockSpec((tb, tl), lambda i, j: (i, j)),
        compiler_params=pltpu.CompilerParams(
            dimension_semantics=("parallel", "parallel"),
            vmem_limit_bytes=vmem_limit,
        ),
    )(x2)


def _planes_call(xsep, B, M, tb, tl, vmem_limit):
    """Compatibility path: kernel reads lane-dense (2, tb, tl) plane blocks."""
    grid = (pl.cdiv(B, tb), pl.cdiv(M, tl))
    return pl.pallas_call(
        _planes_kernel,
        out_shape=jax.ShapeDtypeStruct((B, M), xsep.dtype),
        grid=grid,
        in_specs=[pl.BlockSpec((2, tb, tl), lambda i, j: (0, i, j))],
        out_specs=pl.BlockSpec((tb, tl), lambda i, j: (i, j)),
        compiler_params=pltpu.CompilerParams(
            dimension_semantics=("parallel", "parallel"),
            vmem_limit_bytes=vmem_limit,
        ),
    )(xsep)


# --------------------------------------------------------------------------- #
# One-time probe: which fused-deinterleave formulation does Mosaic lower?
# --------------------------------------------------------------------------- #
_FUSED_BODY_CACHE = {}


def _fused_body(dtype):
    key = jnp.dtype(dtype).name
    if key in _FUSED_BODY_CACHE:
        return _FUSED_BODY_CACHE[key]

    Bp, Mp, tbp, tlp = 16, 512, 8, 128   # multi-step grid, spans several vregs
    xp = (jax.random.normal(jax.random.PRNGKey(1234), (Bp, 2 * Mp), jnp.float32)
          * 8.0).astype(dtype)
    ref = xp[:, 0::2] - xp[:, 1::2]

    chosen = None
    for body in (_kernel_ref_strided, _kernel_value_strided, _kernel_value_reshape):
        try:
            out = jax.block_until_ready(
                _fused_call(body, xp, Bp, Mp, tbp, tlp, 32 * 1024 * 1024))
            if out.shape == ref.shape and bool(
                    jnp.allclose(out, ref, atol=1e-6, rtol=1e-6)):
                chosen = body
                break
        except Exception:
            continue

    _FUSED_BODY_CACHE[key] = chosen
    return chosen


# --------------------------------------------------------------------------- #
# Public wrapper
# --------------------------------------------------------------------------- #
def split_forward(x: jax.Array, *, use_pallas=None) -> jax.Array:
    """out = x[..., 0::2] - x[..., 1::2] (Split.forward).

    use_pallas: None -> auto (Pallas only when it is expected to win),
                True -> force the Pallas path, False -> force the XLA path.
    """
    *lead, two_m = x.shape
    if two_m % 2:
        raise ValueError("last dimension must have even size (2*M)")
    M = two_m // 2
    B = 1
    for d in lead:
        B *= d

    def xla_path():
        return x[..., 0::2] - x[..., 1::2]

    if use_pallas is False or B == 0 or M == 0:
        return xla_path()

    budget, vmem_limit, min_auto_bytes = _chip_params()

    # Small-input crossover: Pallas launch + pipeline prologue dwarfs the copy.
    if use_pallas is None and x.size * x.dtype.itemsize < min_auto_bytes:
        return xla_path()

    body = _fused_body(x.dtype)
    if body is None and use_pallas is None:
        # Without in-kernel deinterleave, a Pallas path needs an extra HBM
        # round trip for the transpose; XLA's fused slice-subtract is faster.
        return xla_path()

    sub_q = _sublane_quantum(x.dtype)
    tb, tl = _choose_tiles(B, M, x.dtype.itemsize, sub_q, budget)
    x2 = x.reshape(B, 2 * M)

    if body is not None:
        out = _fused_call(body, x2, B, M, tb, tl, vmem_limit)
    else:
        # TODO(synk): retire this path (extra transpose pass ~2x HBM traffic)
        # once Mosaic lowers lane-stride-2 slices on every supported version.
        xsep = jnp.transpose(x2.reshape(B, M, 2), (2, 0, 1))   # [0]=y+, [1]=y-
        out = _planes_call(xsep, B, M, tb, tl, vmem_limit)

    return out.reshape(*lead, M)


if __name__ == "__main__":
    key = jax.random.PRNGKey(0)

    # Batch of split measurement vectors (*, 2M) with * = (2, 4), M = 8192.
    x = jax.random.normal(key, (2, 4, 2 * 8192), dtype=jnp.float32)
    out = jax.block_until_ready(split_forward(x, use_pallas=True))
    ref = x[..., 0::2] - x[..., 1::2]
    assert out.shape == ref.shape == (2, 4, 8192)
    assert jnp.allclose(out, ref, atol=1e-6, rtol=1e-6)

    # Tiny input exercises the auto (XLA fast-path) branch.
    x_small = jax.random.normal(jax.random.PRNGKey(1), (2, 4, 512), dtype=jnp.float32)
    out_small = jax.block_until_ready(split_forward(x_small))
    ref_small = x_small[..., 0::2] - x_small[..., 1::2]
    assert out_small.shape == (2, 4, 256)
    assert jnp.allclose(out_small, ref_small, atol=1e-6, rtol=1e-6)

    print("KERNEL_OK")
</pallas_src>

<mosaic_0001>
module attributes {stable_mosaic.version = 11 : i64} {
  func.func @_kernel_ref_strided(%arg0: i32, %arg1: i32, %arg2: memref<8x256xf32, #tpu.memory_space<vmem>>, %arg3: memref<8x128xf32, #tpu.memory_space<vmem>>) attributes {dimension_semantics = [#tpu.dimension_semantics<parallel>, #tpu.dimension_semantics<parallel>], iteration_bounds = array<i64: 2, 4>, scalar_prefetch = 0 : i64, scratch_operands = 0 : i64, tpu.core_type = #tpu.core_type<tc>, window_params = [{transform_indices = @transform_0, window_bounds = array<i64: 8, 256>}, {transform_indices = @transform_1, window_bounds = array<i64: 8, 128>}]} {
    %c0 = arith.constant 0 : index
    %c0_0 = arith.constant 0 : index
    %0 = tpu.strided_load %arg2[%c0, %c0_0] {strides = array<i32: 1, 2>} : memref<8x256xf32, #tpu.memory_space<vmem>>, vector<8x128xf32>
    %c0_1 = arith.constant 0 : index
    %c1 = arith.constant 1 : index
    %1 = tpu.strided_load %arg2[%c0_1, %c1] {strides = array<i32: 1, 2>} : memref<8x256xf32, #tpu.memory_space<vmem>>, vector<8x128xf32>
    %2 = arith.subf %0, %1 : vector<8x128xf32>
    %c0_2 = arith.constant 0 : index
    %c0_3 = arith.constant 0 : index
    %3 = vector.load %arg3[%c0_2, %c0_3] : memref<8x128xf32, #tpu.memory_space<vmem>>, vector<8x128xf32>
    tpu.vector_store %arg3[%c0_2, %c0_3], %2 {strides = array<i32>} : memref<8x128xf32, #tpu.memory_space<vmem>>, vector<8x128xf32>,
    return
  }
  func.func @transform_0(%arg0: i32, %arg1: i32) -> (i32, i32) {
    %c0_i32 = arith.constant 0 : i32
    return %arg0, %arg1 : i32, i32
  }
  func.func @transform_1(%arg0: i32, %arg1: i32) -> (i32, i32) {
    %c0_i32 = arith.constant 0 : i32
    return %arg0, %arg1 : i32, i32
  }
}

module attributes {stable_mosaic.version = 11 : i64} {
  func.func @_kernel_value_reshape(%arg0: i32, %arg1: i32, %arg2: memref<8x256xf32, #tpu.memory_space<vmem>>, %arg3: memref<8x128xf32, #tpu.memory_space<vmem>>) attributes {dimension_semantics = [#tpu.dimension_semantics<parallel>, #tpu.dimension_semantics<parallel>], iteration_bounds = array<i64: 2, 4>, scalar_prefetch = 0 : i64, scratch_operands = 0 : i64, tpu.core_type = #tpu.core_type<tc>, window_params = [{transform_indices = @transform_0, window_bounds = array<i64: 8, 256>}, {transform_indices = @transform_1, window_bounds = array<i64: 8, 128>}]} {
    %c0 = arith.constant 0 : index
    %c0_0 = arith.constant 0 : index
    %0 = vector.load %arg2[%c0, %c0_0] : memref<8x256xf32, #tpu.memory_space<vmem>>, vector<8x256xf32>
    %1 = vector.shape_cast %0 : vector<8x256xf32> to vector<8x128x2xf32>
    %2 = vector.extract_strided_slice %1 {offsets = [0, 0, 0], sizes = [8, 128, 1], strides = [1, 1, 1]} : vector<8x128x2xf32> to vector<8x128x1xf32>
    %3 = vector.shape_cast %2 : vector<8x128x1xf32> to vector<8x128xf32>
    %4 = vector.extract_strided_slice %1 {offsets = [0, 0, 1], sizes = [8, 128, 1], strides = [1, 1, 1]} : vector<8x128x2xf32> to vector<8x128x1xf32>
    %5 = vector.shape_cast %4 : vector<8x128x1xf32> to vector<8x128xf32>
    %6 = arith.subf %3, %5 : vector<8x128xf32>
    %c0_1 = arith.constant 0 : index
    %c0_2 = arith.constant 0 : index
    %7 = vector.load %arg3[%c0_1, %c0_2] : memref<8x128xf32, #tpu.memory_space<vmem>>, vector<8x128xf32>
    tpu.vector_store %arg3[%c0_1, %c0_2], %6 {strides = array<i32>} : memref<8x128xf32, #tpu.memory_space<vmem>>, vector<8x128xf32>,
    return
  }
  func.func @transform_0(%arg0: i32, %arg1: i32) -> (i32, i32) {
    %c0_i32 = arith.constant 0 : i32
    return %arg0, %arg1 : i32, i32
  }
  func.func @transform_1(%arg0: i32, %arg1: i32) -> (i32, i32) {
    %c0_i32 = arith.constant 0 : i32
    return %arg0, %arg1 : i32, i32
  }
}

module attributes {stable_mosaic.version = 11 : i64} {
  func.func @_planes_kernel(%arg0: i32, %arg1: i32, %arg2: memref<2x8x4096xf32, #tpu.memory_space<vmem>>, %arg3: memref<8x4096xf32, #tpu.memory_space<vmem>>) attributes {dimension_semantics = [#tpu.dimension_semantics<parallel>, #tpu.dimension_semantics<parallel>], iteration_bounds = array<i64: 1, 2>, scalar_prefetch = 0 : i64, scratch_operands = 0 : i64, tpu.core_type = #tpu.core_type<tc>, window_params = [{transform_indices = @transform_0, window_bounds = array<i64: 2, 8, 4096>}, {transform_indices = @transform_1, window_bounds = array<i64: 8, 4096>}]} {
    %c0 = arith.constant 0 : index
    %c0_0 = arith.constant 0 : index
    %c0_1 = arith.constant 0 : index
    %0 = vector.load %arg2[%c0, %c0_0, %c0_1] : memref<2x8x4096xf32, #tpu.memory_space<vmem>>, vector<1x8x4096xf32>
    %1 = vector.shape_cast %0 : vector<1x8x4096xf32> to vector<8x4096xf32>
    %c1 = arith.constant 1 : index
    %c0_2 = arith.constant 0 : index
    %c0_3 = arith.constant 0 : index
    %2 = vector.load %arg2[%c1, %c0_2, %c0_3] : memref<2x8x4096xf32, #tpu.memory_space<vmem>>, vector<1x8x4096xf32>
    %3 = vector.shape_cast %2 : vector<1x8x4096xf32> to vector<8x4096xf32>
    %4 = arith.subf %1, %3 : vector<8x4096xf32>
    %c0_4 = arith.constant 0 : index
    %c0_5 = arith.constant 0 : index
    %5 = vector.load %arg3[%c0_4, %c0_5] : memref<8x4096xf32, #tpu.memory_space<vmem>>, vector<8x4096xf32>
    tpu.vector_store %arg3[%c0_4, %c0_5], %4 {strides = array<i32>} : memref<8x4096xf32, #tpu.memory_space<vmem>>, vector<8x4096xf32>,
    return
  }
  func.func @transform_0(%arg0: i32, %arg1: i32) -> (i32, i32, i32) {
    %c0_i32 = arith.constant 0 : i32
    %c0_i32_0 = arith.constant 0 : i32
    return %c0_i32, %arg0, %arg1 : i32, i32, i32
  }
  func.func @transform_1(%arg0: i32, %arg1: i32) -> (i32, i32) {
    %c0_i32 = arith.constant 0 : i32
    return %arg0, %arg1 : i32, i32
  }
}

</mosaic_0001>

<llo_original>
// kernel: tpu_custom_call.1
$region0: #{tpu_custom_call.1}
  #allocation0 [shape = 'u32[]', space=smem, size = 0x4, offset = 0x4, fixed_abs, tag = 'smem constant byte address 0x4 - core index']
  #allocation1 [shape = 'u32[72,128]{1,0:T(1,128)}', space=vmem, size = 0x9000, scoped, tag = 'internal scratch']
  %s0 = inlined_call_operand.hbm [shape: f32[16,1024], index: 0, kind: input, shape index: {}]
  %s1 = inlined_call_operand.hbm [shape: f32[16,512], index: 1, kind: output, shape index: {}]
  %s2 = sld [smem:[#allocation0]]
  $region41: #{tpu_custom_call.1} parent=0
    _
  %s4 = ssub.s32 1, %s2
  %s5 = scalar_select 0, %s4, %s2
  $region1: #{tpu_custom_call.1} parent=0
    #allocation2 [shape = 'u8[16384]{0}', space=vmem, size = 0x4000, scoped, tag = 'input window, operand 0']
    #allocation3 [shape = 's32[2]{0}', space=sflag, size = 0x8, scoped, tag = 'scoped memory for tpu_custom_call.1']
    #allocation4 [shape = 's32[2]{0}', space=sflag, size = 0x8, scoped, tag = 'scoped memory for tpu_custom_call.1']
    #allocation5 [shape = 'u8[8192]{0}', space=vmem, size = 0x2000, scoped, tag = 'output window, operand 0']
    %6 = vsyncpa [#allocation3], 0
    %s7 = scalar_lea.sflag [#allocation3], 1
    %8 = vsyncpa %s7, 0
    %9 = vsyncpa [#allocation4], 0
    %s10 = scalar_lea.sflag [#allocation4], 1
    %11 = vsyncpa %s10, 0
    loop: start=0, step=1, limit=10
    $region2: #{tpu_custom_call.1} parent=1 // loop_pre_header
      _
    $region3: #{tpu_custom_call.1} parent=1 // loop_header
      %s13 = sphi 0, %s17
      %p14 = scmp.ge.s32.totalorder %s13, 10
      %s20 = sphi 0, %s32
      %s21 = sphi 0, %s28
      %s22 = sphi 0, %s20
      %s23 = sphi 0, %s21
      %s24 = sphi 0, %s22
      %s25 = sphi 0, %s23
      %s37 = sphi 0, %s39
      %s40 = sphi 0, %s37
      %s41 = sphi 0, %s40
      %s57 = sphi 0, %s41
      %s65 = sphi 0, %s67
      %s68 = sphi 0, %s65
      %s69 = sphi 0, %s68
      %s85 = sphi 0, %s69
    $region4: #{tpu_custom_call.1} parent=1 // loop_header_branch
      %16 = sbr.rel (%p14) target = $region8
    $region5: #{tpu_custom_call.1} parent=1 // loop_body
      %s18 = ssub.s32 %s13, 1
      %s19 = ssub.s32 %s13, 2
      %s26 = sadd.s32 1, %s21
      %p27 = scmp.ge.s32.totalorder %s26, 4
      %s28 = scalar_select %p27, 0, %s26
      %s29 = sadd.s32 1, %s20
      %s30 = scalar_select %p27, %s29, %s20
      %p31 = scmp.ge.s32.totalorder %s30, 2
      %s32 = scalar_select %p31, 0, %s30
      %s33 = ssub.s32 %s20, %s32
      %s34 = ssub.s32 %s21, %s28
      %s35 = sor.u32 %s33, %s34
      %p36 = scmp.eq.s32.totalorder %s35, 0
      %s38 = sadd.s32 %s37, 1
      %s39 = scalar_select %p36, %s37, %s38
      %p42 = pneg %p36
      %p43 = scmp.eq.s32.totalorder %s13, 7
      %p44 = por %p42, %p43
      %p45 = scmp.ne.s32.totalorder %s37, %s40
      %p46 = scmp.eq.s32.totalorder %s13, 0
      %p47 = por %p45, %p46
      %p48 = scmp.ne.s32.totalorder %s37, %s40
      %p49 = scmp.eq.s32.totalorder %s18, 7
      %p50 = por %p48, %p49
      %p51 = scmp.ne.s32.totalorder %s40, %s41
      %p52 = scmp.eq.s32.totalorder %s18, 0
      %p53 = por %p51, %p52
      %p54 = scmp.ne.s32.totalorder %s40, %s41
      %p55 = scmp.eq.s32.totalorder %s19, 7
      %p56 = por %p54, %p55
      %p58 = scmp.ne.s32.totalorder %s41, %s57
      %p59 = scmp.eq.s32.totalorder %s19, 0
      %p60 = por %p58, %p59
      %s61 = ssub.s32 %s20, %s32
      %s62 = ssub.s32 %s21, %s28
      %s63 = sor.u32 %s61, %s62
      %p64 = scmp.eq.s32.totalorder %s63, 0
      %s66 = sadd.s32 %s65, 1
      %s67 = scalar_select %p64, %s65, %s66
      %p70 = pneg %p64
      %p71 = scmp.eq.s32.totalorder %s13, 7
      %p72 = por %p70, %p71
      %p73 = scmp.ne.s32.totalorder %s65, %s68
      %p74 = scmp.eq.s32.totalorder %s13, 0
      %p75 = por %p73, %p74
      %p76 = scmp.ne.s32.totalorder %s65, %s68
      %p77 = scmp.eq.s32.totalorder %s18, 7
      %p78 = por %p76, %p77
      %p79 = scmp.ne.s32.totalorder %s68, %s69
      %p80 = scmp.eq.s32.totalorder %s18, 0
      %p81 = por %p79, %p80
      %p82 = scmp.ne.s32.totalorder %s68, %s69
      %p83 = scmp.eq.s32.totalorder %s19, 7
      %p84 = por %p82, %p83
      %p86 = scmp.ne.s32.totalorder %s69, %s85
      %p87 = scmp.eq.s32.totalorder %s19, 0
      %p88 = por %p86, %p87
      %p89 = scmp.le.s32.totalorder 1, %s13
      %p90 = scmp.lt.s32.totalorder %s13, 9
      %p91 = pnand %p89, %p90
      %p92 = pneg %p91
      // Predicated region
      $region9: #{tpu_custom_call.1} parent=5 // pred_check
        _
      $region10: #{tpu_custom_call.1} parent=5 // pred_check_branch
        %94 = sbr.rel (%p91) target = $region12
      $region11: #{tpu_custom_call.1} parent=5 // pred_region
        %s95 = ssub.s32 %s13, 1
      $region12: #{tpu_custom_call.1} parent=5 // pred_fallthru
        _
      %p96 = scmp.lt.s32.totalorder %s13, 8
      // Predicated region
      $region13: #{tpu_custom_call.1} parent=5 // pred_check
        %p97 = pneg %p96
      $region14: #{tpu_custom_call.1} parent=5 // pred_check_branch
        %99 = sbr.rel (%p97) target = $region16
      $region15: #{tpu_custom_call.1} parent=5 // pred_region
        // Predicated region
        $region17: #{tpu_custom_call.1} parent=15 // pred_check
          %p100 = pneg %p47
        $region18: #{tpu_custom_call.1} parent=15 // pred_check_branch
          %102 = sbr.rel (%p100) target = $region20
        $region19: #{tpu_custom_call.1} parent=15 // pred_region
          %s103 = sand.u32 %s37, 1
          %s104 = scalar_lea.sflag [#allocation3], %s103
          %s105 = sand.u32 %s37, 1
          %s106 = smul.addr %s105, 16
          %s107 = scalar_lea.vmem [#allocation2], %s106
          %s108 = smul.u32 2, %s21
          %110 = vsyncadd %s104, 0
          %s111 = smul.addr %s20, 8
          %s112 = sadd.s32 %s108, %s111
          %s113 = smul.addr %s112, 8
          %s114 = scalar_lea.hbm %s0, %s113
          %s116 = sshll.u32 %s114, 4
          %s117 = int_to_ptr.hbm [resolvable:$true] %s116
          %s118 = sshll.u32 %s107, 4
          %s119 = int_to_ptr.vmem [resolvable:$true] %s118
          %121 = dma.hbm_to_vmem [thread:$0]  %s117, 256, %s119, %s104
        $region20: #{tpu_custom_call.1} parent=15 // pred_fallthru
          _
      $region16: #{tpu_custom_call.1} parent=5 // pred_fallthru
        _
      %p122 = scmp.le.s32.totalorder 1, %s13
      %p123 = scmp.lt.s32.totalorder %s13, 9
      %p124 = pnand %p122, %p123
      %p125 = pneg %p124
      // Predicated region
      $region21: #{tpu_custom_call.1} parent=5 // pred_check
        _
      $region22: #{tpu_custom_call.1} parent=5 // pred_check_branch
        %127 = sbr.rel (%p124) target = $region24
      $region23: #{tpu_custom_call.1} parent=5 // pred_region
        %s128 = ssub.s32 %s13, 1
        %s129 = sand.u32 %s40, 1
        %s130 = scalar_lea.sflag [#allocation3], %s129
        %s131 = sand.u32 %s40, 1
        %s132 = smul.addr %s131, 16
        %s133 = scalar_lea.vmem [#allocation2], %s132
        // Predicated region
        $region25: #{tpu_custom_call.1} parent=23 // pred_check
          %p134 = pneg %p53
        $region26: #{tpu_custom_call.1} parent=23 // pred_check_branch
          %136 = sbr.rel (%p134) target = $region28
        $region27: #{tpu_custom_call.1} parent=23 // pred_region
          %138 = dma.done %s130, 256
        $region28: #{tpu_custom_call.1} parent=23 // pred_fallthru
          _
        %s139 = sand.u32 %s40, 1
        %s140 = scalar_lea.sflag [#allocation3], %s139
        %s141 = sand.u32 %s40, 1
        %s142 = smul.addr %s141, 16
        %s143 = scalar_lea.vmem [#allocation2], %s142
        %p144 = pneg %p53
        %p145 = pneg %p50
        %p146 = pneg %p81
        %p147 = pneg %p78
        %s148 = sand.u32 %s68, 1
        %s149 = scalar_lea.sflag [#allocation4], %s148
        %s150 = sand.u32 %s68, 1
        %s151 = smul.addr %s150, 8
        %s152 = scalar_lea.vmem [#allocation5], %s151
        %s153 = smul.u32 2, %s23
        %v154 = vld [vmem:[%s133] sm:$0xff]
        %v155 = vld [vmem:[%s133 + $0x8] sm:$0xff]
        %157 = vrot.lane.b32.xlu0 %v154, 126
        %v158 = vpop.permute.xlu0 %157
        %160 = vrot.lane.b32.xlu0 %v154, 124
        %v161 = vpop.permute.xlu0 %160
        %163 = vrot.lane.b32.xlu0 %v154, 122
        %v164 = vpop.permute.xlu0 %163
        %166 = vrot.lane.b32.xlu0 %v154, 120
        %v167 = vpop.permute.xlu0 %166
        %169 = vrot.lane.b32.xlu0 %v154, 118
        %v170 = vpop.permute.xlu0 %169
        %172 = vrot.lane.b32.xlu0 %v154, 116
        %v173 = vpop.permute.xlu0 %172
        %175 = vrot.lane.b32.xlu0 %v154, 114
        %v176 = vpop.permute.xlu0 %175
        %178 = vrot.lane.b32.xlu0 %v154, 112
        %v179 = vpop.permute.xlu0 %178
        %181 = vrot.lane.b32.xlu0 %v154, 110
        %v182 = vpop.permute.xlu0 %181
        %184 = vrot.lane.b32.xlu0 %v154, 108
        %v185 = vpop.permute.xlu0 %184
        %187 = vrot.lane.b32.xlu0 %v154, 106
        %v188 = vpop.permute.xlu0 %187
        %190 = vrot.lane.b32.xlu0 %v154, 104
        %v191 = vpop.permute.xlu0 %190
        %193 = vrot.lane.b32.xlu0 %v154, 102
        %v194 = vpop.permute.xlu0 %193
        %196 = vrot.lane.b32.xlu0 %v154, 100
        %v197 = vpop.permute.xlu0 %196
        %199 = vrot.lane.b32.xlu0 %v154, 98
        %v200 = vpop.permute.xlu0 %199
        %202 = vrot.lane.b32.xlu0 %v154, 96
        %v203 = vpop.permute.xlu0 %202
        %205 = vrot.lane.b32.xlu0 %v154, 94
        %v206 = vpop.permute.xlu0 %205
        %208 = vrot.lane.b32.xlu0 %v154, 92
        %v209 = vpop.permute.xlu0 %208
        %211 = vrot.lane.b32.xlu0 %v154, 90
        %v212 = vpop.permute.xlu0 %211
        %214 = vrot.lane.b32.xlu0 %v154, 88
        %v215 = vpop.permute.xlu0 %214
        %217 = vrot.lane.b32.xlu0 %v154, 86
        %v218 = vpop.permute.xlu0 %217
        %220 = vrot.lane.b32.xlu0 %v154, 84
        %v221 = vpop.permute.xlu0 %220
        %223 = vrot.lane.b32.xlu0 %v154, 82
        %v224 = vpop.permute.xlu0 %223
        %226 = vrot.lane.b32.xlu0 %v154, 80
        %v227 = vpop.permute.xlu0 %226
        %229 = vrot.lane.b32.xlu0 %v154, 78
        %v230 = vpop.permute.xlu0 %229
        %232 = vrot.lane.b32.xlu0 %v154, 76
        %v233 = vpop.permute.xlu0 %232
        %235 = vrot.lane.b32.xlu0 %v154, 74
        %v236 = vpop.permute.xlu0 %235
        %238 = vrot.lane.b32.xlu0 %v154, 72
        %v239 = vpop.permute.xlu0 %238
        %241 = vrot.lane.b32.xlu0 %v154, 70
        %v242 = vpop.permute.xlu0 %241
        %244 = vrot.lane.b32.xlu0 %v154, 68
        %v245 = vpop.permute.xlu0 %244
        %247 = vrot.lane.b32.xlu0 %v154, 66
        %v248 = vpop.permute.xlu0 %247
        %250 = vrot.lane.b32.xlu0 %v154, 64
        %v251 = vpop.permute.xlu0 %250
        %253 = vrot.lane.b32.xlu0 %v154, 62
        %v254 = vpop.permute.xlu0 %253
        %256 = vrot.lane.b32.xlu0 %v154, 60
        %v257 = vpop.permute.xlu0 %256
        %259 = vrot.lane.b32.xlu0 %v154, 58
        %v260 = vpop.permute.xlu0 %259
        %262 = vrot.lane.b32.xlu0 %v154, 56
        %v263 = vpop.permute.xlu0 %262
        %265 = vrot.lane.b32.xlu0 %v154, 54
        %v266 = vpop.permute.xlu0 %265
        %268 = vrot.lane.b32.xlu0 %v154, 52
        %v269 = vpop.permute.xlu0 %268
        %271 = vrot.lane.b32.xlu0 %v154, 50
        %v272 = vpop.permute.xlu0 %271
        %274 = vrot.lane.b32.xlu0 %v154, 48
        %v275 = vpop.permute.xlu0 %274
        %277 = vrot.lane.b32.xlu0 %v154, 46
        %v278 = vpop.permute.xlu0 %277
        %280 = vrot.lane.b32.xlu0 %v154, 44
        %v281 = vpop.permute.xlu0 %280
        %283 = vrot.lane.b32.xlu0 %v154, 42
        %v284 = vpop.permute.xlu0 %283
        %286 = vrot.lane.b32.xlu0 %v154, 40
        %v287 = vpop.permute.xlu0 %286
        %289 = vrot.lane.b32.xlu0 %v154, 38
        %v290 = vpop.permute.xlu0 %289
        %292 = vrot.lane.b32.xlu0 %v154, 36
        %v293 = vpop.permute.xlu0 %292
        %295 = vrot.lane.b32.xlu0 %v154, 34
        %v296 = vpop.permute.xlu0 %295
        %298 = vrot.lane.b32.xlu0 %v154, 32
        %v299 = vpop.permute.xlu0 %298
        %301 = vrot.lane.b32.xlu0 %v154, 30
        %v302 = vpop.permute.xlu0 %301
        %304 = vrot.lane.b32.xlu0 %v154, 28
        %v305 = vpop.permute.xlu0 %304
        %307 = vrot.lane.b32.xlu0 %v154, 26
        %v308 = vpop.permute.xlu0 %307
        %310 = vrot.lane.b32.xlu0 %v154, 24
        %v311 = vpop.permute.xlu0 %310
        %313 = vrot.lane.b32.xlu0 %v154, 22
        %v314 = vpop.permute.xlu0 %313
        %316 = vrot.lane.b32.xlu0 %v154, 20
        %v317 = vpop.permute.xlu0 %316
        %319 = vrot.lane.b32.xlu0 %v154, 18
        %v320 = vpop.permute.xlu0 %319
        %322 = vrot.lane.b32.xlu0 %v154, 16
        %v323 = vpop.permute.xlu0 %322
        %325 = vrot.lane.b32.xlu0 %v154, 14
        %v326 = vpop.permute.xlu0 %325
        %328 = vrot.lane.b32.xlu0 %v154, 12
        %v329 = vpop.permute.xlu0 %328
        %331 = vrot.lane.b32.xlu0 %v154, 10
        %v332 = vpop.permute.xlu0 %331
        %334 = vrot.lane.b32.xlu0 %v154, 8
        %v335 = vpop.permute.xlu0 %334
        %337 = vrot.lane.b32.xlu0 %v154, 6
        %v338 = vpop.permute.xlu0 %337
        %340 = vrot.lane.b32.xlu0 %v154, 4
        %v341 = vpop.permute.xlu0 %340
        %343 = vrot.lane.b32.xlu0 %v154, 2
        %v344 = vpop.permute.xlu0 %343
        %347 = vrot.lane.b32.xlu0 %v155, 126
        %v348 = vpop.permute.xlu0 %347
        %350 = vrot.lane.b32.xlu0 %v155, 124
        %v351 = vpop.permute.xlu0 %350
        %353 = vrot.lane.b32.xlu0 %v155, 122
        %v354 = vpop.permute.xlu0 %353
        %356 = vrot.lane.b32.xlu0 %v155, 120
        %v357 = vpop.permute.xlu0 %356
        %359 = vrot.lane.b32.xlu0 %v155, 118
        %v360 = vpop.permute.xlu0 %359
        %362 = vrot.lane.b32.xlu0 %v155, 116
        %v363 = vpop.permute.xlu0 %362
        %365 = vrot.lane.b32.xlu0 %v155, 114
        %v366 = vpop.permute.xlu0 %365
        %368 = vrot.lane.b32.xlu0 %v155, 112
        %v369 = vpop.permute.xlu0 %368
        %371 = vrot.lane.b32.xlu0 %v155, 110
        %v372 = vpop.permute.xlu0 %371
        %374 = vrot.lane.b32.xlu0 %v155, 108
        %v375 = vpop.permute.xlu0 %374
        %377 = vrot.lane.b32.xlu0 %v155, 106
        %v378 = vpop.permute.xlu0 %377
        %380 = vrot.lane.b32.xlu0 %v155, 104
        %v381 = vpop.permute.xlu0 %380
        %383 = vrot.lane.b32.xlu0 %v155, 102
        %v384 = vpop.permute.xlu0 %383
        %386 = vrot.lane.b32.xlu0 %v155, 100
        %v387 = vpop.permute.xlu0 %386
        %389 = vrot.lane.b32.xlu0 %v155, 98
        %v390 = vpop.permute.xlu0 %389
        %392 = vrot.lane.b32.xlu0 %v155, 96
        %v393 = vpop.permute.xlu0 %392
        %395 = vrot.lane.b32.xlu0 %v155, 94
        %v396 = vpop.permute.xlu0 %395
        %398 = vrot.lane.b32.xlu0 %v155, 92
        %v399 = vpop.permute.xlu0 %398
        %401 = vrot.lane.b32.xlu0 %v155, 90
        %v402 = vpop.permute.xlu0 %401
        %404 = vrot.lane.b32.xlu0 %v155, 88
        %v405 = vpop.permute.xlu0 %404
        %407 = vrot.lane.b32.xlu0 %v155, 86
        %v408 = vpop.permute.xlu0 %407
        %410 = vrot.lane.b32.xlu0 %v155, 84
        %v411 = vpop.permute.xlu0 %410
        %413 = vrot.lane.b32.xlu0 %v155, 82
        %v414 = vpop.permute.xlu0 %413
        %416 = vrot.lane.b32.xlu0 %v155, 80
        %v417 = vpop.permute.xlu0 %416
        %419 = vrot.lane.b32.xlu0 %v155, 78
        %v420 = vpop.permute.xlu0 %419
        %422 = vrot.lane.b32.xlu0 %v155, 76
        %v423 = vpop.permute.xlu0 %422
        %425 = vrot.lane.b32.xlu0 %v155, 74
        %v426 = vpop.permute.xlu0 %425
        %428 = vrot.lane.b32.xlu0 %v155, 72
        %v429 = vpop.permute.xlu0 %428
        %431 = vrot.lane.b32.xlu0 %v155, 70
        %v432 = vpop.permute.xlu0 %431
        %434 = vrot.lane.b32.xlu0 %v155, 68
        %v435 = vpop.permute.xlu0 %434
        %437 = vrot.lane.b32.xlu0 %v155, 66
        %v438 = vpop.permute.xlu0 %437
        %440 = vrot.lane.b32.xlu0 %v155, 64
        %v441 = vpop.permute.xlu0 %440
        %443 = vrot.lane.b32.xlu0 %v155, 62
        %v444 = vpop.permute.xlu0 %443
        %446 = vrot.lane.b32.xlu0 %v155, 60
        %v447 = vpop.permute.xlu0 %446
        %449 = vrot.lane.b32.xlu0 %v155, 58
        %v450 = vpop.permute.xlu0 %449
        %452 = vrot.lane.b32.xlu0 %v155, 56
        %v453 = vpop.permute.xlu0 %452
        %455 = vrot.lane.b32.xlu0 %v155, 54
        %v456 = vpop.permute.xlu0 %455
        %458 = vrot.lane.b32.xlu0 %v155, 52
        %v459 = vpop.permute.xlu0 %458
        %461 = vrot.lane.b32.xlu0 %v155, 50
        %v462 = vpop.permute.xlu0 %461
        %464 = vrot.lane.b32.xlu0 %v155, 48
        %v465 = vpop.permute.xlu0 %464
        %467 = vrot.lane.b32.xlu0 %v155, 46
        %v468 = vpop.permute.xlu0 %467
        %470 = vrot.lane.b32.xlu0 %v155, 44
        %v471 = vpop.permute.xlu0 %470
        %473 = vrot.lane.b32.xlu0 %v155, 42
        %v474 = vpop.permute.xlu0 %473
        %476 = vrot.lane.b32.xlu0 %v155, 40
        %v477 = vpop.permute.xlu0 %476
        %479 = vrot.lane.b32.xlu0 %v155, 38
        %v480 = vpop.permute.xlu0 %479
        %482 = vrot.lane.b32.xlu0 %v155, 36
        %v483 = vpop.permute.xlu0 %482
        %485 = vrot.lane.b32.xlu0 %v155, 34
        %v486 = vpop.permute.xlu0 %485
        %488 = vrot.lane.b32.xlu0 %v155, 32
        %v489 = vpop.permute.xlu0 %488
        %491 = vrot.lane.b32.xlu0 %v155, 30
        %v492 = vpop.permute.xlu0 %491
        %494 = vrot.lane.b32.xlu0 %v155, 28
        %v495 = vpop.permute.xlu0 %494
        %497 = vrot.lane.b32.xlu0 %v155, 26
        %v498 = vpop.permute.xlu0 %497
        %500 = vrot.lane.b32.xlu0 %v155, 24
        %v501 = vpop.permute.xlu0 %500
        %503 = vrot.lane.b32.xlu0 %v155, 22
        %v504 = vpop.permute.xlu0 %503
        %506 = vrot.lane.b32.xlu0 %v155, 20
        %v507 = vpop.permute.xlu0 %506
        %509 = vrot.lane.b32.xlu0 %v155, 18
        %v510 = vpop.permute.xlu0 %509
        %512 = vrot.lane.b32.xlu0 %v155, 16
        %v513 = vpop.permute.xlu0 %512
        %515 = vrot.lane.b32.xlu0 %v155, 14
        %v516 = vpop.permute.xlu0 %515
        %518 = vrot.lane.b32.xlu0 %v155, 12
        %v519 = vpop.permute.xlu0 %518
        %521 = vrot.lane.b32.xlu0 %v155, 10
        %v522 = vpop.permute.xlu0 %521
        %524 = vrot.lane.b32.xlu0 %v155, 8
        %v525 = vpop.permute.xlu0 %524
        %527 = vrot.lane.b32.xlu0 %v155, 6
        %v528 = vpop.permute.xlu0 %527
        %530 = vrot.lane.b32.xlu0 %v155, 4
        %v531 = vpop.permute.xlu0 %530
        %533 = vrot.lane.b32.xlu0 %v155, 2
        %v534 = vpop.permute.xlu0 %533
        %v536 = vrot.slane %v161, 4
        %vm537 = vcmask 1047556
        %v538 = vsel %vm537, %v536, %v154
        %v539 = vrot.slane %v154, 4
        %v540 = vsel %vm537, %v161, %v539
        %v542 = vunpack.c.l.s4 1983009808
        %v543 = vunpack.c.0.s8 %v542
        %v544 = vperm.slane %v538, %v543
        %v546 = vunpack.c.l.s4 1983009808
        %v547 = vunpack.c.0.s8 %v546
        %v548 = vperm.slane %v540, %v547
        %v549 = vrot.slane %v164, 4
        %v550 = vsel %vm537, %v549, %v158
        %v551 = vrot.slane %v158, 4
        %v552 = vsel %vm537, %v164, %v551
        %v554 = vunpack.c.l.s4 1983009808
        %v555 = vunpack.c.0.s8 %v554
        %v556 = vperm.slane %v550, %v555
        %v558 = vunpack.c.l.s4 1983009808
        %v559 = vunpack.c.0.s8 %v558
        %v560 = vperm.slane %v552, %v559
        %v561 = vrot.slane %v173, 4
        %v562 = vsel %vm537, %v561, %v167
        %v563 = vrot.slane %v167, 4
        %v564 = vsel %vm537, %v173, %v563
        %v566 = vunpack.c.l.s4 1983009808
        %v567 = vunpack.c.0.s8 %v566
        %v568 = vperm.slane %v562, %v567
        %v570 = vunpack.c.l.s4 1983009808
        %v571 = vunpack.c.0.s8 %v570
        %v572 = vperm.slane %v564, %v571
        %v573 = vrot.slane %v176, 4
        %v574 = vsel %vm537, %v573, %v170
        %v575 = vrot.slane %v170, 4
        %v576 = vsel %vm537, %v176, %v575
        %v578 = vunpack.c.l.s4 1983009808
        %v579 = vunpack.c.0.s8 %v578
        %v580 = vperm.slane %v574, %v579
        %v582 = vunpack.c.l.s4 1983009808
        %v583 = vunpack.c.0.s8 %v582
        %v584 = vperm.slane %v576, %v583
        %v585 = vrot.slane %v556, 4
        %v586 = vsel %vm537, %v585, %v544
        %v587 = vrot.slane %v544, 4
        %v588 = vsel %vm537, %v556, %v587
        %v590 = vunpack.c.l.s4 1934713408
        %v591 = vunpack.c.0.s8 %v590
        %v592 = vperm.slane %v586, %v591
        %v594 = vunpack.c.l.s4 1934713408
        %v595 = vunpack.c.0.s8 %v594
        %v596 = vperm.slane %v588, %v595
        %v597 = vrot.slane %v560, 4
        %v598 = vsel %vm537, %v597, %v548
        %v599 = vrot.slane %v548, 4
        %v600 = vsel %vm537, %v560, %v599
        %v602 = vunpack.c.l.s4 1934713408
        %v603 = vunpack.c.0.s8 %v602
        %v604 = vperm.slane %v598, %v603
        %v606 = vunpack.c.l.s4 1934713408
        %v607 = vunpack.c.0.s8 %v606
        %v608 = vperm.slane %v600, %v607
        %v609 = vrot.slane %v580, 4
        %v610 = vsel %vm537, %v609, %v568
        %v611 = vrot.slane %v568, 4
        %v612 = vsel %vm537, %v580, %v611
        %v614 = vunpack.c.l.s4 1934713408
        %v615 = vunpack.c.0.s8 %v614
        %v616 = vperm.slane %v610, %v615
        %v618 = vunpack.c.l.s4 1934713408
        %v619 = vunpack.c.0.s8 %v618
        %v620 = vperm.slane %v612, %v619
        %v621 = vrot.slane %v584, 4
        %v622 = vsel %vm537, %v621, %v572
        %v623 = vrot.slane %v572, 4
        %v624 = vsel %vm537, %v584, %v623
        %v626 = vunpack.c.l.s4 1934713408
        %v627 = vunpack.c.0.s8 %v626
        %v628 = vperm.slane %v622, %v627
        %v630 = vunpack.c.l.s4 1934713408
        %v631 = vunpack.c.0.s8 %v630
        %v632 = vperm.slane %v624, %v631
        %v633 = vrot.slane %v616, 4
        %v634 = vsel %vm537, %v633, %v592
        %v635 = vrot.slane %v592, 4
        %v636 = vsel %vm537, %v616, %v635
        %v637 = vrot.slane %v620, 4
        %v638 = vsel %vm537, %v637, %v596
        %v639 = vrot.slane %v596, 4
        %v640 = vsel %vm537, %v620, %v639
        %v641 = vrot.slane %v628, 4
        %v642 = vsel %vm537, %v641, %v604
        %v643 = vrot.slane %v604, 4
        %v644 = vsel %vm537, %v628, %v643
        %v645 = vrot.slane %v632, 4
        %v646 = vsel %vm537, %v645, %v608
        %v647 = vrot.slane %v608, 4
        %v648 = vsel %vm537, %v632, %v647
        %v649 = vrot.slane %v185, 4
        %v650 = vsel %vm537, %v649, %v179
        %v651 = vrot.slane %v179, 4
        %v652 = vsel %vm537, %v185, %v651
        %v654 = vunpack.c.l.s4 1983009808
        %v655 = vunpack.c.0.s8 %v654
        %v656 = vperm.slane %v650, %v655
        %v658 = vunpack.c.l.s4 1983009808
        %v659 = vunpack.c.0.s8 %v658
        %v660 = vperm.slane %v652, %v659
        %v661 = vrot.slane %v188, 4
        %v662 = vsel %vm537, %v661, %v182
        %v663 = vrot.slane %v182, 4
        %v664 = vsel %vm537, %v188, %v663
        %v666 = vunpack.c.l.s4 1983009808
        %v667 = vunpack.c.0.s8 %v666
        %v668 = vperm.slane %v662, %v667
        %v670 = vunpack.c.l.s4 1983009808
        %v671 = vunpack.c.0.s8 %v670
        %v672 = vperm.slane %v664, %v671
        %v673 = vrot.slane %v197, 4
        %v674 = vsel %vm537, %v673, %v191
        %v675 = vrot.slane %v191, 4
        %v676 = vsel %vm537, %v197, %v675
        %v678 = vunpack.c.l.s4 1983009808
        %v679 = vunpack.c.0.s8 %v678
        %v680 = vperm.slane %v674, %v679
        %v682 = vunpack.c.l.s4 1983009808
        %v683 = vunpack.c.0.s8 %v682
        %v684 = vperm.slane %v676, %v683
        %v685 = vrot.slane %v200, 4
        %v686 = vsel %vm537, %v685, %v194
        %v687 = vrot.slane %v194, 4
        %v688 = vsel %vm537, %v200, %v687
        %v690 = vunpack.c.l.s4 1983009808
        %v691 = vunpack.c.0.s8 %v690
        %v692 = vperm.slane %v686, %v691
        %v694 = vunpack.c.l.s4 1983009808
        %v695 = vunpack.c.0.s8 %v694
        %v696 = vperm.slane %v688, %v695
        %v697 = vrot.slane %v668, 4
        %v698 = vsel %vm537, %v697, %v656
        %v699 = vrot.slane %v656, 4
        %v700 = vsel %vm537, %v668, %v699
        %v702 = vunpack.c.l.s4 1934713408
        %v703 = vunpack.c.0.s8 %v702
        %v704 = vperm.slane %v698, %v703
        %v706 = vunpack.c.l.s4 1934713408
        %v707 = vunpack.c.0.s8 %v706
        %v708 = vperm.slane %v700, %v707
        %v709 = vrot.slane %v672, 4
        %v710 = vsel %vm537, %v709, %v660
        %v711 = vrot.slane %v660, 4
        %v712 = vsel %vm537, %v672, %v711
        %v714 = vunpack.c.l.s4 1934713408
        %v715 = vunpack.c.0.s8 %v714
        %v716 = vperm.slane %v710, %v715
        %v718 = vunpack.c.l.s4 1934713408
        %v719 = vunpack.c.0.s8 %v718
        %v720 = vperm.slane %v712, %v719
        %v721 = vrot.slane %v692, 4
        %v722 = vsel %vm537, %v721, %v680
        %v723 = vrot.slane %v680, 4
        %v724 = vsel %vm537, %v692, %v723
        %v726 = vunpack.c.l.s4 1934713408
        %v727 = vunpack.c.0.s8 %v726
        %v728 = vperm.slane %v722, %v727
        %v730 = vunpack.c.l.s4 1934713408
        %v731 = vunpack.c.0.s8 %v730
        %v732 = vperm.slane %v724, %v731
        %v733 = vrot.slane %v696, 4
        %v734 = vsel %vm537, %v733, %v684
        %v735 = vrot.slane %v684, 4
        %v736 = vsel %vm537, %v696, %v735
        %v738 = vunpack.c.l.s4 1934713408
        %v739 = vunpack.c.0.s8 %v738
        %v740 = vperm.slane %v734, %v739
        %v742 = vunpack.c.l.s4 1934713408
        %v743 = vunpack.c.0.s8 %v742
        %v744 = vperm.slane %v736, %v743
        %v745 = vrot.slane %v728, 4
        %v746 = vsel %vm537, %v745, %v704
        %v747 = vrot.slane %v704, 4
        %v748 = vsel %vm537, %v728, %v747
        %v749 = vrot.slane %v732, 4
        %v750 = vsel %vm537, %v749, %v708
        %v751 = vrot.slane %v708, 4
        %v752 = vsel %vm537, %v732, %v751
        %v753 = vrot.slane %v740, 4
        %v754 = vsel %vm537, %v753, %v716
        %v755 = vrot.slane %v716, 4
        %v756 = vsel %vm537, %v740, %v755
        %v757 = vrot.slane %v744, 4
        %v758 = vsel %vm537, %v757, %v720
        %v759 = vrot.slane %v720, 4
        %v760 = vsel %vm537, %v744, %v759
        %v761 = vrot.slane %v209, 4
        %v762 = vsel %vm537, %v761, %v203
        %v763 = vrot.slane %v203, 4
        %v764 = vsel %vm537, %v209, %v763
        %v766 = vunpack.c.l.s4 1983009808
        %v767 = vunpack.c.0.s8 %v766
        %v768 = vperm.slane %v762, %v767
        %v770 = vunpack.c.l.s4 1983009808
        %v771 = vunpack.c.0.s8 %v770
        %v772 = vperm.slane %v764, %v771
        %v773 = vrot.slane %v212, 4
        %v774 = vsel %vm537, %v773, %v206
        %v775 = vrot.slane %v206, 4
        %v776 = vsel %vm537, %v212, %v775
        %v778 = vunpack.c.l.s4 1983009808
        %v779 = vunpack.c.0.s8 %v778
        %v780 = vperm.slane %v774, %v779
        %v782 = vunpack.c.l.s4 1983009808
        %v783 = vunpack.c.0.s8 %v782
        %v784 = vperm.slane %v776, %v783
        %v785 = vrot.slane %v221, 4
        %v786 = vsel %vm537, %v785, %v215
        %v787 = vrot.slane %v215, 4
        %v788 = vsel %vm537, %v221, %v787
        %v790 = vunpack.c.l.s4 1983009808
        %v791 = vunpack.c.0.s8 %v790
        %v792 = vperm.slane %v786, %v791
        %v794 = vunpack.c.l.s4 1983009808
        %v795 = vunpack.c.0.s8 %v794
        %v796 = vperm.slane %v788, %v795
        %v797 = vrot.slane %v224, 4
        %v798 = vsel %vm537, %v797, %v218
        %v799 = vrot.slane %v218, 4
        %v800 = vsel %vm537, %v224, %v799
        %v802 = vunpack.c.l.s4 1983009808
        %v803 = vunpack.c.0.s8 %v802
        %v804 = vperm.slane %v798, %v803
        %v806 = vunpack.c.l.s4 1983009808
        %v807 = vunpack.c.0.s8 %v806
        %v808 = vperm.slane %v800, %v807
        %v809 = vrot.slane %v780, 4
        %v810 = vsel %vm537, %v809, %v768
        %v811 = vrot.slane %v768, 4
        %v812 = vsel %vm537, %v780, %v811
        %v814 = vunpack.c.l.s4 1934713408
        %v815 = vunpack.c.0.s8 %v814
        %v816 = vperm.slane %v810, %v815
        %v818 = vunpack.c.l.s4 1934713408
        %v819 = vunpack.c.0.s8 %v818
        %v820 = vperm.slane %v812, %v819
        %v821 = vrot.slane %v784, 4
        %v822 = vsel %vm537, %v821, %v772
        %v823 = vrot.slane %v772, 4
        %v824 = vsel %vm537, %v784, %v823
        %v826 = vunpack.c.l.s4 1934713408
        %v827 = vunpack.c.0.s8 %v826
        %v828 = vperm.slane %v822, %v827
        %v830 = vunpack.c.l.s4 1934713408
        %v831 = vunpack.c.0.s8 %v830
        %v832 = vperm.slane %v824, %v831
        %v833 = vrot.slane %v804, 4
        %v834 = vsel %vm537, %v833, %v792
        %v835 = vrot.slane %v792, 4
        %v836 = vsel %vm537, %v804, %v835
        %v838 = vunpack.c.l.s4 1934713408
        %v839 = vunpack.c.0.s8 %v838
        %v840 = vperm.slane %v834, %v839
        %v842 = vunpack.c.l.s4 1934713408
        %v843 = vunpack.c.0.s8 %v842
        %v844 = vperm.slane %v836, %v843
        %v845 = vrot.slane %v808, 4
        %v846 = vsel %vm537, %v845, %v796
        %v847 = vrot.slane %v796, 4
        %v848 = vsel %vm537, %v808, %v847
        %v850 = vunpack.c.l.s4 1934713408
        %v851 = vunpack.c.0.s8 %v850
        %v852 = vperm.slane %v846, %v851
        %v854 = vunpack.c.l.s4 1934713408
        %v855 = vunpack.c.0.s8 %v854
        %v856 = vperm.slane %v848, %v855
        %v857 = vrot.slane %v840, 4
        %v858 = vsel %vm537, %v857, %v816
        %v859 = vrot.slane %v816, 4
        %v860 = vsel %vm537, %v840, %v859
        %v861 = vrot.slane %v844, 4
        %v862 = vsel %vm537, %v861, %v820
        %v863 = vrot.slane %v820, 4
        %v864 = vsel %vm537, %v844, %v863
        %v865 = vrot.slane %v852, 4
        %v866 = vsel %vm537, %v865, %v828
        %v867 = vrot.slane %v828, 4
        %v868 = vsel %vm537, %v852, %v867
        %v869 = vrot.slane %v856, 4
        %v870 = vsel %vm537, %v869, %v832
        %v871 = vrot.slane %v832, 4
        %v872 = vsel %vm537, %v856, %v871
        %v873 = vrot.slane %v233, 4
        %v874 = vsel %vm537, %v873, %v227
        %v875 = vrot.slane %v227, 4
        %v876 = vsel %vm537, %v233, %v875
        %v878 = vunpack.c.l.s4 1983009808
        %v879 = vunpack.c.0.s8 %v878
        %v880 = vperm.slane %v874, %v879
        %v882 = vunpack.c.l.s4 1983009808
        %v883 = vunpack.c.0.s8 %v882
        %v884 = vperm.slane %v876, %v883
        %v885 = vrot.slane %v236, 4
        %v886 = vsel %vm537, %v885, %v230
        %v887 = vrot.slane %v230, 4
        %v888 = vsel %vm537, %v236, %v887
        %v890 = vunpack.c.l.s4 1983009808
        %v891 = vunpack.c.0.s8 %v890
        %v892 = vperm.slane %v886, %v891
        %v894 = vunpack.c.l.s4 1983009808
        %v895 = vunpack.c.0.s8 %v894
        %v896 = vperm.slane %v888, %v895
        %v897 = vrot.slane %v245, 4
        %v898 = vsel %vm537, %v897, %v239
        %v899 = vrot.slane %v239, 4
        %v900 = vsel %vm537, %v245, %v899
        %v902 = vunpack.c.l.s4 1983009808
        %v903 = vunpack.c.0.s8 %v902
        %v904 = vperm.slane %v898, %v903
        %v906 = vunpack.c.l.s4 1983009808
        %v907 = vunpack.c.0.s8 %v906
        %v908 = vperm.slane %v900, %v907
        %v909 = vrot.slane %v248, 4
        %v910 = vsel %vm537, %v909, %v242
        %v911 = vrot.slane %v242, 4
        %v912 = vsel %vm537, %v248, %v911
        %v914 = vunpack.c.l.s4 1983009808
        %v915 = vunpack.c.0.s8 %v914
        %v916 = vperm.slane %v910, %v915
        %v918 = vunpack.c.l.s4 1983009808
        %v919 = vunpack.c.0.s8 %v918
        %v920 = vperm.slane %v912, %v919
        %v921 = vrot.slane %v892, 4
        %v922 = vsel %vm537, %v921, %v880
        %v923 = vrot.slane %v880, 4
        %v924 = vsel %vm537, %v892, %v923
        %v926 = vunpack.c.l.s4 1934713408
        %v927 = vunpack.c.0.s8 %v926
        %v928 = vperm.slane %v922, %v927
        %v930 = vunpack.c.l.s4 1934713408
        %v931 = vunpack.c.0.s8 %v930
        %v932 = vperm.slane %v924, %v931
        %v933 = vrot.slane %v896, 4
        %v934 = vsel %vm537, %v933, %v884
        %v935 = vrot.slane %v884, 4
        %v936 = vsel %vm537, %v896, %v935
        %v938 = vunpack.c.l.s4 1934713408
        %v939 = vunpack.c.0.s8 %v938
        %v940 = vperm.slane %v934, %v939
        %v942 = vunpack.c.l.s4 1934713408
        %v943 = vunpack.c.0.s8 %v942
        %v944 = vperm.slane %v936, %v943
        %v945 = vrot.slane %v916, 4
        %v946 = vsel %vm537, %v945, %v904
        %v947 = vrot.slane %v904, 4
        %v948 = vsel %vm537, %v916, %v947
        %v950 = vunpack.c.l.s4 1934713408
        %v951 = vunpack.c.0.s8 %v950
        %v952 = vperm.slane %v946, %v951
        %v954 = vunpack.c.l.s4 1934713408
        %v955 = vunpack.c.0.s8 %v954
        %v956 = vperm.slane %v948, %v955
        %v957 = vrot.slane %v920, 4
        %v958 = vsel %vm537, %v957, %v908
        %v959 = vrot.slane %v908, 4
        %v960 = vsel %vm537, %v920, %v959
        %v962 = vunpack.c.l.s4 1934713408
        %v963 = vunpack.c.0.s8 %v962
        %v964 = vperm.slane %v958, %v963
        %v966 = vunpack.c.l.s4 1934713408
        %v967 = vunpack.c.0.s8 %v966
        %v968 = vperm.slane %v960, %v967
        %v969 = vrot.slane %v952, 4
        %v970 = vsel %vm537, %v969, %v928
        %v971 = vrot.slane %v928, 4
        %v972 = vsel %vm537, %v952, %v971
        %v973 = vrot.slane %v956, 4
        %v974 = vsel %vm537, %v973, %v932
        %v975 = vrot.slane %v932, 4
        %v976 = vsel %vm537, %v956, %v975
        %v977 = vrot.slane %v964, 4
        %v978 = vsel %vm537, %v977, %v940
        %v979 = vrot.slane %v940, 4
        %v980 = vsel %vm537, %v964, %v979
        %v981 = vrot.slane %v968, 4
        %v982 = vsel %vm537, %v981, %v944
        %v983 = vrot.slane %v944, 4
        %v984 = vsel %vm537, %v968, %v983
        %v985 = vrot.slane %v257, 4
        %v986 = vsel %vm537, %v985, %v251
        %v987 = vrot.slane %v251, 4
        %v988 = vsel %vm537, %v257, %v987
        %v990 = vunpack.c.l.s4 1983009808
        %v991 = vunpack.c.0.s8 %v990
        %v992 = vperm.slane %v986, %v991
        %v994 = vunpack.c.l.s4 1983009808
        %v995 = vunpack.c.0.s8 %v994
        %v996 = vperm.slane %v988, %v995
        %v997 = vrot.slane %v260, 4
        %v998 = vsel %vm537, %v997, %v254
        %v999 = vrot.slane %v254, 4
        %v1000 = vsel %vm537, %v260, %v999
        %v1002 = vunpack.c.l.s4 1983009808
        %v1003 = vunpack.c.0.s8 %v1002
        %v1004 = vperm.slane %v998, %v1003
        %v1006 = vunpack.c.l.s4 1983009808
        %v1007 = vunpack.c.0.s8 %v1006
        %v1008 = vperm.slane %v1000, %v1007
        %v1009 = vrot.slane %v269, 4
        %v1010 = vsel %vm537, %v1009, %v263
        %v1011 = vrot.slane %v263, 4
        %v1012 = vsel %vm537, %v269, %v1011
        %v1014 = vunpack.c.l.s4 1983009808
        %v1015 = vunpack.c.0.s8 %v1014
        %v1016 = vperm.slane %v1010, %v1015
        %v1018 = vunpack.c.l.s4 1983009808
        %v1019 = vunpack.c.0.s8 %v1018
        %v1020 = vperm.slane %v1012, %v1019
        %v1021 = vrot.slane %v272, 4
        %v1022 = vsel %vm537, %v1021, %v266
        %v1023 = vrot.slane %v266, 4
        %v1024 = vsel %vm537, %v272, %v1023
        %v1026 = vunpack.c.l.s4 1983009808
        %v1027 = vunpack.c.0.s8 %v1026
        %v1028 = vperm.slane %v1022, %v1027
        %v1030 = vunpack.c.l.s4 1983009808
        %v1031 = vunpack.c.0.s8 %v1030
        %v1032 = vperm.slane %v1024, %v1031
        %v1033 = vrot.slane %v1004, 4
        %v1034 = vsel %vm537, %v1033, %v992
        %v1035 = vrot.slane %v992, 4
        %v1036 = vsel %vm537, %v1004, %v1035
        %v1038 = vunpack.c.l.s4 1934713408
        %v1039 = vunpack.c.0.s8 %v1038
        %v1040 = vperm.slane %v1034, %v1039
        %v1042 = vunpack.c.l.s4 1934713408
        %v1043 = vunpack.c.0.s8 %v1042
        %v1044 = vperm.slane %v1036, %v1043
        %v1045 = vrot.slane %v1008, 4
        %v1046 = vsel %vm537, %v1045, %v996
        %v1047 = vrot.slane %v996, 4
        %v1048 = vsel %vm537, %v1008, %v1047
        %v1050 = vunpack.c.l.s4 1934713408
        %v1051 = vunpack.c.0.s8 %v1050
        %v1052 = vperm.slane %v1046, %v1051
        %v1054 = vunpack.c.l.s4 1934713408
        %v1055 = vunpack.c.0.s8 %v1054
        %v1056 = vperm.slane %v1048, %v1055
        %v1057 = vrot.slane %v1028, 4
        %v1058 = vsel %vm537, %v1057, %v1016
        %v1059 = vrot.slane %v1016, 4
        %v1060 = vsel %vm537, %v1028, %v1059
        %v1062 = vunpack.c.l.s4 1934713408
        %v1063 = vunpack.c.0.s8 %v1062
        %v1064 = vperm.slane %v1058, %v1063
        %v1066 = vunpack.c.l.s4 1934713408
        %v1067 = vunpack.c.0.s8 %v1066
        %v1068 = vperm.slane %v1060, %v1067
        %v1069 = vrot.slane %v1032, 4
        %v1070 = vsel %vm537, %v1069, %v1020
        %v1071 = vrot.slane %v1020, 4
        %v1072 = vsel %vm537, %v1032, %v1071
        %v1074 = vunpack.c.l.s4 1934713408
        %v1075 = vunpack.c.0.s8 %v1074
        %v1076 = vperm.slane %v1070, %v1075
        %v1078 = vunpack.c.l.s4 1934713408
        %v1079 = vunpack.c.0.s8 %v1078
        %v1080 = vperm.slane %v1072, %v1079
        %v1081 = vrot.slane %v1064, 4
        %v1082 = vsel %vm537, %v1081, %v1040
        %v1083 = vrot.slane %v1040, 4
        %v1084 = vsel %vm537, %v1064, %v1083
        %v1085 = vrot.slane %v1068, 4
        %v1086 = vsel %vm537, %v1085, %v1044
        %v1087 = vrot.slane %v1044, 4
        %v1088 = vsel %vm537, %v1068, %v1087
        %v1089 = vrot.slane %v1076, 4
        %v1090 = vsel %vm537, %v1089, %v1052
        %v1091 = vrot.slane %v1052, 4
        %v1092 = vsel %vm537, %v1076, %v1091
        %v1093 = vrot.slane %v1080, 4
        %v1094 = vsel %vm537, %v1093, %v1056
        %v1095 = vrot.slane %v1056, 4
        %v1096 = vsel %vm537, %v1080, %v1095
        %v1097 = vrot.slane %v281, 4
        %v1098 = vsel %vm537, %v1097, %v275
        %v1099 = vrot.slane %v275, 4
        %v1100 = vsel %vm537, %v281, %v1099
        %v1102 = vunpack.c.l.s4 1983009808
        %v1103 = vunpack.c.0.s8 %v1102
        %v1104 = vperm.slane %v1098, %v1103
        %v1106 = vunpack.c.l.s4 1983009808
        %v1107 = vunpack.c.0.s8 %v1106
        %v1108 = vperm.slane %v1100, %v1107
        %v1109 = vrot.slane %v284, 4
        %v1110 = vsel %vm537, %v1109, %v278
        %v1111 = vrot.slane %v278, 4
        %v1112 = vsel %vm537, %v284, %v1111
        %v1114 = vunpack.c.l.s4 1983009808
        %v1115 = vunpack.c.0.s8 %v1114
        %v1116 = vperm.slane %v1110, %v1115
        %v1118 = vunpack.c.l.s4 1983009808
        %v1119 = vunpack.c.0.s8 %v1118
        %v1120 = vperm.slane %v1112, %v1119
        %v1121 = vrot.slane %v293, 4
        %v1122 = vsel %vm537, %v1121, %v287
        %v1123 = vrot.slane %v287, 4
        %v1124 = vsel %vm537, %v293, %v1123
        %v1126 = vunpack.c.l.s4 1983009808
        %v1127 = vunpack.c.0.s8 %v1126
        %v1128 = vperm.slane %v1122, %v1127
        %v1130 = vunpack.c.l.s4 1983009808
        %v1131 = vunpack.c.0.s8 %v1130
        %v1132 = vperm.slane %v1124, %v1131
        %v1133 = vrot.slane %v296, 4
        %v1134 = vsel %vm537, %v1133, %v290
        %v1135 = vrot.slane %v290, 4
        %v1136 = vsel %vm537, %v296, %v1135
        %v1138 = vunpack.c.l.s4 1983009808
        %v1139 = vunpack.c.0.s8 %v1138
        %v1140 = vperm.slane %v1134, %v1139
        %v1142 = vunpack.c.l.s4 1983009808
        %v1143 = vunpack.c.0.s8 %v1142
        %v1144 = vperm.slane %v1136, %v1143
        %v1145 = vrot.slane %v1116, 4
        %v1146 = vsel %vm537, %v1145, %v1104
        %v1147 = vrot.slane %v1104, 4
        %v1148 = vsel %vm537, %v1116, %v1147
        %v1150 = vunpack.c.l.s4 1934713408
        %v1151 = vunpack.c.0.s8 %v1150
        %v1152 = vperm.slane %v1146, %v1151
        %v1154 = vunpack.c.l.s4 1934713408
        %v1155 = vunpack.c.0.s8 %v1154
        %v1156 = vperm.slane %v1148, %v1155
        %v1157 = vrot.slane %v1120, 4
        %v1158 = vsel %vm537, %v1157, %v1108
        %v1159 = vrot.slane %v1108, 4
        %v1160 = vsel %vm537, %v1120, %v1159
        %v1162 = vunpack.c.l.s4 1934713408
        %v1163 = vunpack.c.0.s8 %v1162
        %v1164 = vperm.slane %v1158, %v1163
        %v1166 = vunpack.c.l.s4 1934713408
        %v1167 = vunpack.c.0.s8 %v1166
        %v1168 = vperm.slane %v1160, %v1167
        %v1169 = vrot.slane %v1140, 4
        %v1170 = vsel %vm537, %v1169, %v1128
        %v1171 = vrot.slane %v1128, 4
        %v1172 = vsel %vm537, %v1140, %v1171
        %v1174 = vunpack.c.l.s4 1934713408
        %v1175 = vunpack.c.0.s8 %v1174
        %v1176 = vperm.slane %v1170, %v1175
        %v1178 = vunpack.c.l.s4 1934713408
        %v1179 = vunpack.c.0.s8 %v1178
        %v1180 = vperm.slane %v1172, %v1179
        %v1181 = vrot.slane %v1144, 4
        %v1182 = vsel %vm537, %v1181, %v1132
        %v1183 = vrot.slane %v1132, 4
        %v1184 = vsel %vm537, %v1144, %v1183
        %v1186 = vunpack.c.l.s4 1934713408
        %v1187 = vunpack.c.0.s8 %v1186
        %v1188 = vperm.slane %v1182, %v1187
        %v1190 = vunpack.c.l.s4 1934713408
        %v1191 = vunpack.c.0.s8 %v1190
        %v1192 = vperm.slane %v1184, %v1191
        %v1193 = vrot.slane %v1176, 4
        %v1194 = vsel %vm537, %v1193, %v1152
        %v1195 = vrot.slane %v1152, 4
        %v1196 = vsel %vm537, %v1176, %v1195
        %v1197 = vrot.slane %v1180, 4
        %v1198 = vsel %vm537, %v1197, %v1156
        %v1199 = vrot.slane %v1156, 4
        %v1200 = vsel %vm537, %v1180, %v1199
        %v1201 = vrot.slane %v1188, 4
        %v1202 = vsel %vm537, %v1201, %v1164
        %v1203 = vrot.slane %v1164, 4
        %v1204 = vsel %vm537, %v1188, %v1203
        %v1205 = vrot.slane %v1192, 4
        %v1206 = vsel %vm537, %v1205, %v1168
        %v1207 = vrot.slane %v1168, 4
        %v1208 = vsel %vm537, %v1192, %v1207
        %v1209 = vrot.slane %v305, 4
        %v1210 = vsel %vm537, %v1209, %v299
        %v1211 = vrot.slane %v299, 4
        %v1212 = vsel %vm537, %v305, %v1211
        %v1214 = vunpack.c.l.s4 1983009808
        %v1215 = vunpack.c.0.s8 %v1214
        %v1216 = vperm.slane %v1210, %v1215
        %v1218 = vunpack.c.l.s4 1983009808
        %v1219 = vunpack.c.0.s8 %v1218
        %v1220 = vperm.slane %v1212, %v1219
        %v1221 = vrot.slane %v308, 4
        %v1222 = vsel %vm537, %v1221, %v302
        %v1223 = vrot.slane %v302, 4
        %v1224 = vsel %vm537, %v308, %v1223
        %v1226 = vunpack.c.l.s4 1983009808
        %v1227 = vunpack.c.0.s8 %v1226
        %v1228 = vperm.slane %v1222, %v1227
        %v1230 = vunpack.c.l.s4 1983009808
        %v1231 = vunpack.c.0.s8 %v1230
        %v1232 = vperm.slane %v1224, %v1231
        %v1233 = vrot.slane %v317, 4
        %v1234 = vsel %vm537, %v1233, %v311
        %v1235 = vrot.slane %v311, 4
        %v1236 = vsel %vm537, %v317, %v1235
        %v1238 = vunpack.c.l.s4 1983009808
        %v1239 = vunpack.c.0.s8 %v1238
        %v1240 = vperm.slane %v1234, %v1239
        %v1242 = vunpack.c.l.s4 1983009808
        %v1243 = vunpack.c.0.s8 %v1242
        %v1244 = vperm.slane %v1236, %v1243
        %v1245 = vrot.slane %v320, 4
        %v1246 = vsel %vm537, %v1245, %v314
        %v1247 = vrot.slane %v314, 4
        %v1248 = vsel %vm537, %v320, %v1247
        %v1250 = vunpack.c.l.s4 1983009808
        %v1251 = vunpack.c.0.s8 %v1250
        %v1252 = vperm.slane %v1246, %v1251
        %v1254 = vunpack.c.l.s4 1983009808
        %v1255 = vunpack.c.0.s8 %v1254
        %v1256 = vperm.slane %v1248, %v1255
        %v1257 = vrot.slane %v1228, 4
        %v1258 = vsel %vm537, %v1257, %v1216
        %v1259 = vrot.slane %v1216, 4
        %v1260 = vsel %vm537, %v1228, %v1259
        %v1262 = vunpack.c.l.s4 1934713408
        %v1263 = vunpack.c.0.s8 %v1262
        %v1264 = vperm.slane %v1258, %v1263
        %v1266 = vunpack.c.l.s4 1934713408
        %v1267 = vunpack.c.0.s8 %v1266
        %v1268 = vperm.slane %v1260, %v1267
        %v1269 = vrot.slane %v1232, 4
        %v1270 = vsel %vm537, %v1269, %v1220
        %v1271 = vrot.slane %v1220, 4
        %v1272 = vsel %vm537, %v1232, %v1271
        %v1274 = vunpack.c.l.s4 1934713408
        %v1275 = vunpack.c.0.s8 %v1274
        %v1276 = vperm.slane %v1270, %v1275
        %v1278 = vunpack.c.l.s4 1934713408
        %v1279 = vunpack.c.0.s8 %v1278
        %v1280 = vperm.slane %v1272, %v1279
        %v1281 = vrot.slane %v1252, 4
        %v1282 = vsel %vm537, %v1281, %v1240
        %v1283 = vrot.slane %v1240, 4
        %v1284 = vsel %vm537, %v1252, %v1283
        %v1286 = vunpack.c.l.s4 1934713408
        %v1287 = vunpack.c.0.s8 %v1286
        %v1288 = vperm.slane %v1282, %v1287
        %v1290 = vunpack.c.l.s4 1934713408
        %v1291 = vunpack.c.0.s8 %v1290
        %v1292 = vperm.slane %v1284, %v1291
        %v1293 = vrot.slane %v1256, 4
        %v1294 = vsel %vm537, %v1293, %v1244
        %v1295 = vrot.slane %v1244, 4
        %v1296 = vsel %vm537, %v1256, %v1295
        %v1298 = vunpack.c.l.s4 1934713408
        %v1299 = vunpack.c.0.s8 %v1298
        %v1300 = vperm.slane %v1294, %v1299
        %v1302 = vunpack.c.l.s4 1934713408
        %v1303 = vunpack.c.0.s8 %v1302
        %v1304 = vperm.slane %v1296, %v1303
        %v1305 = vrot.slane %v1288, 4
        %v1306 = vsel %vm537, %v1305, %v1264
        %v1307 = vrot.slane %v1264, 4
        %v1308 = vsel %vm537, %v1288, %v1307
        %v1309 = vrot.slane %v1292, 4
        %v1310 = vsel %vm537, %v1309, %v1268
        %v1311 = vrot.slane %v1268, 4
        %v1312 = vsel %vm537, %v1292, %v1311
        %v1313 = vrot.slane %v1300, 4
        %v1314 = vsel %vm537, %v1313, %v1276
        %v1315 = vrot.slane %v1276, 4
        %v1316 = vsel %vm537, %v1300, %v1315
        %v1317 = vrot.slane %v1304, 4
        %v1318 = vsel %vm537, %v1317, %v1280
        %v1319 = vrot.slane %v1280, 4
        %v1320 = vsel %vm537, %v1304, %v1319
        %v1321 = vrot.slane %v329, 4
        %v1322 = vsel %vm537, %v1321, %v323
        %v1323 = vrot.slane %v323, 4
        %v1324 = vsel %vm537, %v329, %v1323
        %v1326 = vunpack.c.l.s4 1983009808
        %v1327 = vunpack.c.0.s8 %v1326
        %v1328 = vperm.slane %v1322, %v1327
        %v1330 = vunpack.c.l.s4 1983009808
        %v1331 = vunpack.c.0.s8 %v1330
        %v1332 = vperm.slane %v1324, %v1331
        %v1333 = vrot.slane %v332, 4
        %v1334 = vsel %vm537, %v1333, %v326
        %v1335 = vrot.slane %v326, 4
        %v1336 = vsel %vm537, %v332, %v1335
        %v1338 = vunpack.c.l.s4 1983009808
        %v1339 = vunpack.c.0.s8 %v1338
        %v1340 = vperm.slane %v1334, %v1339
        %v1342 = vunpack.c.l.s4 1983009808
        %v1343 = vunpack.c.0.s8 %v1342
        %v1344 = vperm.slane %v1336, %v1343
        %v1345 = vrot.slane %v341, 4
        %v1346 = vsel %vm537, %v1345, %v335
        %v1347 = vrot.slane %v335, 4
        %v1348 = vsel %vm537, %v341, %v1347
        %v1350 = vunpack.c.l.s4 1983009808
        %v1351 = vunpack.c.0.s8 %v1350
        %v1352 = vperm.slane %v1346, %v1351
        %v1354 = vunpack.c.l.s4 1983009808
        %v1355 = vunpack.c.0.s8 %v1354
        %v1356 = vperm.slane %v1348, %v1355
        %v1357 = vrot.slane %v344, 4
        %v1358 = vsel %vm537, %v1357, %v338
        %v1359 = vrot.slane %v338, 4
        %v1360 = vsel %vm537, %v344, %v1359
        %v1362 = vunpack.c.l.s4 1983009808
        %v1363 = vunpack.c.0.s8 %v1362
        %v1364 = vperm.slane %v1358, %v1363
        %v1366 = vunpack.c.l.s4 1983009808
        %v1367 = vunpack.c.0.s8 %v1366
        %v1368 = vperm.slane %v1360, %v1367
        %v1369 = vrot.slane %v1340, 4
        %v1370 = vsel %vm537, %v1369, %v1328
        %v1371 = vrot.slane %v1328, 4
        %v1372 = vsel %vm537, %v1340, %v1371
        %v1374 = vunpack.c.l.s4 1934713408
        %v1375 = vunpack.c.0.s8 %v1374
        %v1376 = vperm.slane %v1370, %v1375
        %v1378 = vunpack.c.l.s4 1934713408
        %v1379 = vunpack.c.0.s8 %v1378
        %v1380 = vperm.slane %v1372, %v1379
        %v1381 = vrot.slane %v1344, 4
        %v1382 = vsel %vm537, %v1381, %v1332
        %v1383 = vrot.slane %v1332, 4
        %v1384 = vsel %vm537, %v1344, %v1383
        %v1386 = vunpack.c.l.s4 1934713408
        %v1387 = vunpack.c.0.s8 %v1386
        %v1388 = vperm.slane %v1382, %v1387
        %v1390 = vunpack.c.l.s4 1934713408
        %v1391 = vunpack.c.0.s8 %v1390
        %v1392 = vperm.slane %v1384, %v1391
        %v1393 = vrot.slane %v1364, 4
        %v1394 = vsel %vm537, %v1393, %v1352
        %v1395 = vrot.slane %v1352, 4
        %v1396 = vsel %vm537, %v1364, %v1395
        %v1398 = vunpack.c.l.s4 1934713408
        %v1399 = vunpack.c.0.s8 %v1398
        %v1400 = vperm.slane %v1394, %v1399
        %v1402 = vunpack.c.l.s4 1934713408
        %v1403 = vunpack.c.0.s8 %v1402
        %v1404 = vperm.slane %v1396, %v1403
        %v1405 = vrot.slane %v1368, 4
        %v1406 = vsel %vm537, %v1405, %v1356
        %v1407 = vrot.slane %v1356, 4
        %v1408 = vsel %vm537, %v1368, %v1407
        %v1410 = vunpack.c.l.s4 1934713408
        %v1411 = vunpack.c.0.s8 %v1410
        %v1412 = vperm.slane %v1406, %v1411
        %v1414 = vunpack.c.l.s4 1934713408
        %v1415 = vunpack.c.0.s8 %v1414
        %v1416 = vperm.slane %v1408, %v1415
        %v1417 = vrot.slane %v1400, 4
        %v1418 = vsel %vm537, %v1417, %v1376
        %v1419 = vrot.slane %v1376, 4
        %v1420 = vsel %vm537, %v1400, %v1419
        %v1421 = vrot.slane %v1404, 4
        %v1422 = vsel %vm537, %v1421, %v1380
        %v1423 = vrot.slane %v1380, 4
        %v1424 = vsel %vm537, %v1404, %v1423
        %v1425 = vrot.slane %v1412, 4
        %v1426 = vsel %vm537, %v1425, %v1388
        %v1427 = vrot.slane %v1388, 4
        %v1428 = vsel %vm537, %v1412, %v1427
        %v1429 = vrot.slane %v1416, 4
        %v1430 = vsel %vm537, %v1429, %v1392
        %v1431 = vrot.slane %v1392, 4
        %v1432 = vsel %vm537, %v1416, %v1431
        %v1433 = vrot.slane %v351, 4
        %v1434 = vsel %vm537, %v1433, %v155
        %v1435 = vrot.slane %v155, 4
        %v1436 = vsel %vm537, %v351, %v1435
        %v1438 = vunpack.c.l.s4 1983009808
        %v1439 = vunpack.c.0.s8 %v1438
        %v1440 = vperm.slane %v1434, %v1439
        %v1442 = vunpack.c.l.s4 1983009808
        %v1443 = vunpack.c.0.s8 %v1442
        %v1444 = vperm.slane %v1436, %v1443
        %v1445 = vrot.slane %v354, 4
        %v1446 = vsel %vm537, %v1445, %v348
        %v1447 = vrot.slane %v348, 4
        %v1448 = vsel %vm537, %v354, %v1447
        %v1450 = vunpack.c.l.s4 1983009808
        %v1451 = vunpack.c.0.s8 %v1450
        %v1452 = vperm.slane %v1446, %v1451
        %v1454 = vunpack.c.l.s4 1983009808
        %v1455 = vunpack.c.0.s8 %v1454
        %v1456 = vperm.slane %v1448, %v1455
        %v1457 = vrot.slane %v363, 4
        %v1458 = vsel %vm537, %v1457, %v357
        %v1459 = vrot.slane %v357, 4
        %v1460 = vsel %vm537, %v363, %v1459
        %v1462 = vunpack.c.l.s4 1983009808
        %v1463 = vunpack.c.0.s8 %v1462
        %v1464 = vperm.slane %v1458, %v1463
        %v1466 = vunpack.c.l.s4 1983009808
        %v1467 = vunpack.c.0.s8 %v1466
        %v1468 = vperm.slane %v1460, %v1467
        %v1469 = vrot.slane %v366, 4
        %v1470 = vsel %vm537, %v1469, %v360
        %v1471 = vrot.slane %v360, 4
        %v1472 = vsel %vm537, %v366, %v1471
        %v1474 = vunpack.c.l.s4 1983009808
        %v1475 = vunpack.c.0.s8 %v1474
        %v1476 = vperm.slane %v1470, %v1475
        %v1478 = vunpack.c.l.s4 1983009808
        %v1479 = vunpack.c.0.s8 %v1478
        %v1480 = vperm.slane %v1472, %v1479
        %v1481 = vrot.slane %v1452, 4
        %v1482 = vsel %vm537, %v1481, %v1440
        %v1483 = vrot.slane %v1440, 4
        %v1484 = vsel %vm537, %v1452, %v1483
        %v1486 = vunpack.c.l.s4 1934713408
        %v1487 = vunpack.c.0.s8 %v1486
        %v1488 = vperm.slane %v1482, %v1487
        %v1490 = vunpack.c.l.s4 1934713408
        %v1491 = vunpack.c.0.s8 %v1490
        %v1492 = vperm.slane %v1484, %v1491
        %v1493 = vrot.slane %v1456, 4
        %v1494 = vsel %vm537, %v1493, %v1444
        %v1495 = vrot.slane %v1444, 4
        %v1496 = vsel %vm537, %v1456, %v1495
        %v1498 = vunpack.c.l.s4 1934713408
        %v1499 = vunpack.c.0.s8 %v1498
        %v1500 = vperm.slane %v1494, %v1499
        %v1502 = vunpack.c.l.s4 1934713408
        %v1503 = vunpack.c.0.s8 %v1502
        %v1504 = vperm.slane %v1496, %v1503
        %v1505 = vrot.slane %v1476, 4
        %v1506 = vsel %vm537, %v1505, %v1464
        %v1507 = vrot.slane %v1464, 4
        %v1508 = vsel %vm537, %v1476, %v1507
        %v1510 = vunpack.c.l.s4 1934713408
        %v1511 = vunpack.c.0.s8 %v1510
        %v1512 = vperm.slane %v1506, %v1511
        %v1514 = vunpack.c.l.s4 1934713408
        %v1515 = vunpack.c.0.s8 %v1514
        %v1516 = vperm.slane %v1508, %v1515
        %v1517 = vrot.slane %v1480, 4
        %v1518 = vsel %vm537, %v1517, %v1468
        %v1519 = vrot.slane %v1468, 4
        %v1520 = vsel %vm537, %v1480, %v1519
        %v1522 = vunpack.c.l.s4 1934713408
        %v1523 = vunpack.c.0.s8 %v1522
        %v1524 = vperm.slane %v1518, %v1523
        %v1526 = vunpack.c.l.s4 1934713408
        %v1527 = vunpack.c.0.s8 %v1526
        %v1528 = vperm.slane %v1520, %v1527
        %v1529 = vrot.slane %v1512, 4
        %v1530 = vsel %vm537, %v1529, %v1488
        %v1531 = vrot.slane %v1488, 4
        %v1532 = vsel %vm537, %v1512, %v1531
        %v1533 = vrot.slane %v1516, 4
        %v1534 = vsel %vm537, %v1533, %v1492
        %v1535 = vrot.slane %v1492, 4
        %v1536 = vsel %vm537, %v1516, %v1535
        %v1537 = vrot.slane %v1524, 4
        %v1538 = vsel %vm537, %v1537, %v1500
        %v1539 = vrot.slane %v1500, 4
        %v1540 = vsel %vm537, %v1524, %v1539
        %v1541 = vrot.slane %v1528, 4
        %v1542 = vsel %vm537, %v1541, %v1504
        %v1543 = vrot.slane %v1504, 4
        %v1544 = vsel %vm537, %v1528, %v1543
        %v1545 = vrot.slane %v375, 4
        %v1546 = vsel %vm537, %v1545, %v369
        %v1547 = vrot.slane %v369, 4
        %v1548 = vsel %vm537, %v375, %v1547
        %v1550 = vunpack.c.l.s4 1983009808
        %v1551 = vunpack.c.0.s8 %v1550
        %v1552 = vperm.slane %v1546, %v1551
        %v1554 = vunpack.c.l.s4 1983009808
        %v1555 = vunpack.c.0.s8 %v1554
        %v1556 = vperm.slane %v1548, %v1555
        %v1557 = vrot.slane %v378, 4
        %v1558 = vsel %vm537, %v1557, %v372
        %v1559 = vrot.slane %v372, 4
        %v1560 = vsel %vm537, %v378, %v1559
        %v1562 = vunpack.c.l.s4 1983009808
        %v1563 = vunpack.c.0.s8 %v1562
        %v1564 = vperm.slane %v1558, %v1563
        %v1566 = vunpack.c.l.s4 1983009808
        %v1567 = vunpack.c.0.s8 %v1566
        %v1568 = vperm.slane %v1560, %v1567
        %v1569 = vrot.slane %v387, 4
        %v1570 = vsel %vm537, %v1569, %v381
        %v1571 = vrot.slane %v381, 4
        %v1572 = vsel %vm537, %v387, %v1571
        %v1574 = vunpack.c.l.s4 1983009808
        %v1575 = vunpack.c.0.s8 %v1574
        %v1576 = vperm.slane %v1570, %v1575
        %v1578 = vunpack.c.l.s4 1983009808
        %v1579 = vunpack.c.0.s8 %v1578
        %v1580 = vperm.slane %v1572, %v1579
        %v1581 = vrot.slane %v390, 4
        %v1582 = vsel %vm537, %v1581, %v384
        %v1583 = vrot.slane %v384, 4
        %v1584 = vsel %vm537, %v390, %v1583
        %v1586 = vunpack.c.l.s4 1983009808
        %v1587 = vunpack.c.0.s8 %v1586
        %v1588 = vperm.slane %v1582, %v1587
        %v1590 = vunpack.c.l.s4 1983009808
        %v1591 = vunpack.c.0.s8 %v1590
        %v1592 = vperm.slane %v1584, %v1591
        %v1593 = vrot.slane %v1564, 4
        %v1594 = vsel %vm537, %v1593, %v1552
        %v1595 = vrot.slane %v1552, 4
        %v1596 = vsel %vm537, %v1564, %v1595
        %v1598 = vunpack.c.l.s4 1934713408
        %v1599 = vunpack.c.0.s8 %v1598
        %v1600 = vperm.slane %v1594, %v1599
        %v1602 = vunpack.c.l.s4 1934713408
        %v1603 = vunpack.c.0.s8 %v1602
        %v1604 = vperm.slane %v1596, %v1603
        %v1605 = vrot.slane %v1568, 4
        %v1606 = vsel %vm537, %v1605, %v1556
        %v1607 = vrot.slane %v1556, 4
        %v1608 = vsel %vm537, %v1568, %v1607
        %v1610 = vunpack.c.l.s4 1934713408
        %v1611 = vunpack.c.0.s8 %v1610
        %v1612 = vperm.slane %v1606, %v1611
        %v1614 = vunpack.c.l.s4 1934713408
        %v1615 = vunpack.c.0.s8 %v1614
        %v1616 = vperm.slane %v1608, %v1615
        %v1617 = vrot.slane %v1588, 4
        %v1618 = vsel %vm537, %v1617, %v1576
        %v1619 = vrot.slane %v1576, 4
        %v1620 = vsel %vm537, %v1588, %v1619
        %v1622 = vunpack.c.l.s4 1934713408
        %v1623 = vunpack.c.0.s8 %v1622
        %v1624 = vperm.slane %v1618, %v1623
        %v1626 = vunpack.c.l.s4 1934713408
        %v1627 = vunpack.c.0.s8 %v1626
        %v1628 = vperm.slane %v1620, %v1627
        %v1629 = vrot.slane %v1592, 4
        %v1630 = vsel %vm537, %v1629, %v1580
        %v1631 = vrot.slane %v1580, 4
        %v1632 = vsel %vm537, %v1592, %v1631
        %v1634 = vunpack.c.l.s4 1934713408
        %v1635 = vunpack.c.0.s8 %v1634
        %v1636 = vperm.slane %v1630, %v1635
        %v1638 = vunpack.c.l.s4 1934713408
        %v1639 = vunpack.c.0.s8 %v1638
        %v1640 = vperm.slane %v1632, %v1639
        %v1641 = vrot.slane %v1624, 4
        %v1642 = vsel %vm537, %v1641, %v1600
        %v1643 = vrot.slane %v1600, 4
        %v1644 = vsel %vm537, %v1624, %v1643
        %v1645 = vrot.slane %v1628, 4
        %v1646 = vsel %vm537, %v1645, %v1604
        %v1647 = vrot.slane %v1604, 4
        %v1648 = vsel %vm537, %v1628, %v1647
        %v1649 = vrot.slane %v1636, 4
        %v1650 = vsel %vm537, %v1649, %v1612
        %v1651 = vrot.slane %v1612, 4
        %v1652 = vsel %vm537, %v1636, %v1651
        %v1653 = vrot.slane %v1640, 4
        %v1654 = vsel %vm537, %v1653, %v1616
        %v1655 = vrot.slane %v1616, 4
        %v1656 = vsel %vm537, %v1640, %v1655
        %v1657 = vrot.slane %v399, 4
        %v1658 = vsel %vm537, %v1657, %v393
        %v1659 = vrot.slane %v393, 4
        %v1660 = vsel %vm537, %v399, %v1659
        %v1662 = vunpack.c.l.s4 1983009808
        %v1663 = vunpack.c.0.s8 %v1662
        %v1664 = vperm.slane %v1658, %v1663
        %v1666 = vunpack.c.l.s4 1983009808
        %v1667 = vunpack.c.0.s8 %v1666
        %v1668 = vperm.slane %v1660, %v1667
        %v1669 = vrot.slane %v402, 4
        %v1670 = vsel %vm537, %v1669, %v396
        %v1671 = vrot.slane %v396, 4
        %v1672 = vsel %vm537, %v402, %v1671
        %v1674 = vunpack.c.l.s4 1983009808
        %v1675 = vunpack.c.0.s8 %v1674
        %v1676 = vperm.slane %v1670, %v1675
        %v1678 = vunpack.c.l.s4 1983009808
        %v1679 = vunpack.c.0.s8 %v1678
        %v1680 = vperm.slane %v1672, %v1679
        %v1681 = vrot.slane %v411, 4
        %v1682 = vsel %vm537, %v1681, %v405
        %v1683 = vrot.slane %v405, 4
        %v1684 = vsel %vm537, %v411, %v1683
        %v1686 = vunpack.c.l.s4 1983009808
        %v1687 = vunpack.c.0.s8 %v1686
        %v1688 = vperm.slane %v1682, %v1687
        %v1690 = vunpack.c.l.s4 1983009808
        %v1691 = vunpack.c.0.s8 %v1690
        %v1692 = vperm.slane %v1684, %v1691
        %v1693 = vrot.slane %v414, 4
        %v1694 = vsel %vm537, %v1693, %v408
        %v1695 = vrot.slane %v408, 4
        %v1696 = vsel %vm537, %v414, %v1695
        %v1698 = vunpack.c.l.s4 1983009808
        %v1699 = vunpack.c.0.s8 %v1698
        %v1700 = vperm.slane %v1694, %v1699
        %v1702 = vunpack.c.l.s4 1983009808
        %v1703 = vunpack.c.0.s8 %v1702
        %v1704 = vperm.slane %v1696, %v1703
        %v1705 = vrot.slane %v1676, 4
        %v1706 = vsel %vm537, %v1705, %v1664
        %v1707 = vrot.slane %v1664, 4
        %v1708 = vsel %vm537, %v1676, %v1707
        %v1710 = vunpack.c.l.s4 1934713408
        %v1711 = vunpack.c.0.s8 %v1710
        %v1712 = vperm.slane %v1706, %v1711
        %v1714 = vunpack.c.l.s4 1934713408
        %v1715 = vunpack.c.0.s8 %v1714
        %v1716 = vperm.slane %v1708, %v1715
        %v1717 = vrot.slane %v1680, 4
        %v1718 = vsel %vm537, %v1717, %v1668
        %v1719 = vrot.slane %v1668, 4
        %v1720 = vsel %vm537, %v1680, %v1719
        %v1722 = vunpack.c.l.s4 1934713408
        %v1723 = vunpack.c.0.s8 %v1722
        %v1724 = vperm.slane %v1718, %v1723
        %v1726 = vunpack.c.l.s4 1934713408
        %v1727 = vunpack.c.0.s8 %v1726
        %v1728 = vperm.slane %v1720, %v1727
        %v1729 = vrot.slane %v1700, 4
        %v1730 = vsel %vm537, %v1729, %v1688
        %v1731 = vrot.slane %v1688, 4
        %v1732 = vsel %vm537, %v1700, %v1731
        %v1734 = vunpack.c.l.s4 1934713408
        %v1735 = vunpack.c.0.s8 %v1734
        %v1736 = vperm.slane %v1730, %v1735
        %v1738 = vunpack.c.l.s4 1934713408
        %v1739 = vunpack.c.0.s8 %v1738
        %v1740 = vperm.slane %v1732, %v1739
        %v1741 = vrot.slane %v1704, 4
        %v1742 = vsel %vm537, %v1741, %v1692
        %v1743 = vrot.slane %v1692, 4
        %v1744 = vsel %vm537, %v1704, %v1743
        %v1746 = vunpack.c.l.s4 1934713408
        %v1747 = vunpack.c.0.s8 %v1746
        %v1748 = vperm.slane %v1742, %v1747
        %v1750 = vunpack.c.l.s4 1934713408
        %v1751 = vunpack.c.0.s8 %v1750
        %v1752 = vperm.slane %v1744, %v1751
        %v1753 = vrot.slane %v1736, 4
        %v1754 = vsel %vm537, %v1753, %v1712
        %v1755 = vrot.slane %v1712, 4
        %v1756 = vsel %vm537, %v1736, %v1755
        %v1757 = vrot.slane %v1740, 4
        %v1758 = vsel %vm537, %v1757, %v1716
        %v1759 = vrot.slane %v1716, 4
        %v1760 = vsel %vm537, %v1740, %v1759
        %v1761 = vrot.slane %v1748, 4
        %v1762 = vsel %vm537, %v1761, %v1724
        %v1763 = vrot.slane %v1724, 4
        %v1764 = vsel %vm537, %v1748, %v1763
        %v1765 = vrot.slane %v1752, 4
        %v1766 = vsel %vm537, %v1765, %v1728
        %v1767 = vrot.slane %v1728, 4
        %v1768 = vsel %vm537, %v1752, %v1767
        %v1769 = vrot.slane %v423, 4
        %v1770 = vsel %vm537, %v1769, %v417
        %v1771 = vrot.slane %v417, 4
        %v1772 = vsel %vm537, %v423, %v1771
        %v1774 = vunpack.c.l.s4 1983009808
        %v1775 = vunpack.c.0.s8 %v1774
        %v1776 = vperm.slane %v1770, %v1775
        %v1778 = vunpack.c.l.s4 1983009808
        %v1779 = vunpack.c.0.s8 %v1778
        %v1780 = vperm.slane %v1772, %v1779
        %v1781 = vrot.slane %v426, 4
        %v1782 = vsel %vm537, %v1781, %v420
        %v1783 = vrot.slane %v420, 4
        %v1784 = vsel %vm537, %v426, %v1783
        %v1786 = vunpack.c.l.s4 1983009808
        %v1787 = vunpack.c.0.s8 %v1786
        %v1788 = vperm.slane %v1782, %v1787
        %v1790 = vunpack.c.l.s4 1983009808
        %v1791 = vunpack.c.0.s8 %v1790
        %v1792 = vperm.slane %v1784, %v1791
        %v1793 = vrot.slane %v435, 4
        %v1794 = vsel %vm537, %v1793, %v429
        %v1795 = vrot.slane %v429, 4
        %v1796 = vsel %vm537, %v435, %v1795
        %v1798 = vunpack.c.l.s4 1983009808
        %v1799 = vunpack.c.0.s8 %v1798
        %v1800 = vperm.slane %v1794, %v1799
        %v1802 = vunpack.c.l.s4 1983009808
        %v1803 = vunpack.c.0.s8 %v1802
        %v1804 = vperm.slane %v1796, %v1803
        %v1805 = vrot.slane %v438, 4
        %v1806 = vsel %vm537, %v1805, %v432
        %v1807 = vrot.slane %v432, 4
        %v1808 = vsel %vm537, %v438, %v1807
        %v1810 = vunpack.c.l.s4 1983009808
        %v1811 = vunpack.c.0.s8 %v1810
        %v1812 = vperm.slane %v1806, %v1811
        %v1814 = vunpack.c.l.s4 1983009808
        %v1815 = vunpack.c.0.s8 %v1814
        %v1816 = vperm.slane %v1808, %v1815
        %v1817 = vrot.slane %v1788, 4
        %v1818 = vsel %vm537, %v1817, %v1776
        %v1819 = vrot.slane %v1776, 4
        %v1820 = vsel %vm537, %v1788, %v1819
        %v1822 = vunpack.c.l.s4 1934713408
        %v1823 = vunpack.c.0.s8 %v1822
        %v1824 = vperm.slane %v1818, %v1823
        %v1826 = vunpack.c.l.s4 1934713408
        %v1827 = vunpack.c.0.s8 %v1826
        %v1828 = vperm.slane %v1820, %v1827
        %v1829 = vrot.slane %v1792, 4
        %v1830 = vsel %vm537, %v1829, %v1780
        %v1831 = vrot.slane %v1780, 4
        %v1832 = vsel %vm537, %v1792, %v1831
        %v1834 = vunpack.c.l.s4 1934713408
        %v1835 = vunpack.c.0.s8 %v1834
        %v1836 = vperm.slane %v1830, %v1835
        %v1838 = vunpack.c.l.s4 1934713408
        %v1839 = vunpack.c.0.s8 %v1838
        %v1840 = vperm.slane %v1832, %v1839
        %v1841 = vrot.slane %v1812, 4
        %v1842 = vsel %vm537, %v1841, %v1800
        %v1843 = vrot.slane %v1800, 4
        %v1844 = vsel %vm537, %v1812, %v1843
        %v1846 = vunpack.c.l.s4 1934713408
        %v1847 = vunpack.c.0.s8 %v1846
        %v1848 = vperm.slane %v1842, %v1847
        %v1850 = vunpack.c.l.s4 1934713408
        %v1851 = vunpack.c.0.s8 %v1850
        %v1852 = vperm.slane %v1844, %v1851
        %v1853 = vrot.slane %v1816, 4
        %v1854 = vsel %vm537, %v1853, %v1804
        %v1855 = vrot.slane %v1804, 4
        %v1856 = vsel %vm537, %v1816, %v1855
        %v1858 = vunpack.c.l.s4 1934713408
        %v1859 = vunpack.c.0.s8 %v1858
        %v1860 = vperm.slane %v1854, %v1859
        %v1862 = vunpack.c.l.s4 1934713408
        %v1863 = vunpack.c.0.s8 %v1862
        %v1864 = vperm.slane %v1856, %v1863
        %v1865 = vrot.slane %v1848, 4
        %v1866 = vsel %vm537, %v1865, %v1824
        %v1867 = vrot.slane %v1824, 4
        %v1868 = vsel %vm537, %v1848, %v1867
        %v1869 = vrot.slane %v1852, 4
        %v1870 = vsel %vm537, %v1869, %v1828
        %v1871 = vrot.slane %v1828, 4
        %v1872 = vsel %vm537, %v1852, %v1871
        %v1873 = vrot.slane %v1860, 4
        %v1874 = vsel %vm537, %v1873, %v1836
        %v1875 = vrot.slane %v1836, 4
        %v1876 = vsel %vm537, %v1860, %v1875
        %v1877 = vrot.slane %v1864, 4
        %v1878 = vsel %vm537, %v1877, %v1840
        %v1879 = vrot.slane %v1840, 4
        %v1880 = vsel %vm537, %v1864, %v1879
        %v1881 = vrot.slane %v447, 4
        %v1882 = vsel %vm537, %v1881, %v441
        %v1883 = vrot.slane %v441, 4
        %v1884 = vsel %vm537, %v447, %v1883
        %v1886 = vunpack.c.l.s4 1983009808
        %v1887 = vunpack.c.0.s8 %v1886
        %v1888 = vperm.slane %v1882, %v1887
        %v1890 = vunpack.c.l.s4 1983009808
        %v1891 = vunpack.c.0.s8 %v1890
        %v1892 = vperm.slane %v1884, %v1891
        %v1893 = vrot.slane %v450, 4
        %v1894 = vsel %vm537, %v1893, %v444
        %v1895 = vrot.slane %v444, 4
        %v1896 = vsel %vm537, %v450, %v1895
        %v1898 = vunpack.c.l.s4 1983009808
        %v1899 = vunpack.c.0.s8 %v1898
        %v1900 = vperm.slane %v1894, %v1899
        %v1902 = vunpack.c.l.s4 1983009808
        %v1903 = vunpack.c.0.s8 %v1902
        %v1904 = vperm.slane %v1896, %v1903
        %v1905 = vrot.slane %v459, 4
        %v1906 = vsel %vm537, %v1905, %v453
        %v1907 = vrot.slane %v453, 4
        %v1908 = vsel %vm537, %v459, %v1907
        %v1910 = vunpack.c.l.s4 1983009808
        %v1911 = vunpack.c.0.s8 %v1910
        %v1912 = vperm.slane %v1906, %v1911
        %v1914 = vunpack.c.l.s4 1983009808
        %v1915 = vunpack.c.0.s8 %v1914
        %v1916 = vperm.slane %v1908, %v1915
        %v1917 = vrot.slane %v462, 4
        %v1918 = vsel %vm537, %v1917, %v456
        %v1919 = vrot.slane %v456, 4
        %v1920 = vsel %vm537, %v462, %v1919
        %v1922 = vunpack.c.l.s4 1983009808
        %v1923 = vunpack.c.0.s8 %v1922
        %v1924 = vperm.slane %v1918, %v1923
        %v1926 = vunpack.c.l.s4 1983009808
        %v1927 = vunpack.c.0.s8 %v1926
        %v1928 = vperm.slane %v1920, %v1927
        %v1929 = vrot.slane %v1900, 4
        %v1930 = vsel %vm537, %v1929, %v1888
        %v1931 = vrot.slane %v1888, 4
        %v1932 = vsel %vm537, %v1900, %v1931
        %v1934 = vunpack.c.l.s4 1934713408
        %v1935 = vunpack.c.0.s8 %v1934
        %v1936 = vperm.slane %v1930, %v1935
        %v1938 = vunpack.c.l.s4 1934713408
        %v1939 = vunpack.c.0.s8 %v1938
        %v1940 = vperm.slane %v1932, %v1939
        %v1941 = vrot.slane %v1904, 4
        %v1942 = vsel %vm537, %v1941, %v1892
        %v1943 = vrot.slane %v1892, 4
        %v1944 = vsel %vm537, %v1904, %v1943
        %v1946 = vunpack.c.l.s4 1934713408
        %v1947 = vunpack.c.0.s8 %v1946
        %v1948 = vperm.slane %v1942, %v1947
        %v1950 = vunpack.c.l.s4 1934713408
        %v1951 = vunpack.c.0.s8 %v1950
        %v1952 = vperm.slane %v1944, %v1951
        %v1953 = vrot.slane %v1924, 4
        %v1954 = vsel %vm537, %v1953, %v1912
        %v1955 = vrot.slane %v1912, 4
        %v1956 = vsel %vm537, %v1924, %v1955
        %v1958 = vunpack.c.l.s4 1934713408
        %v1959 = vunpack.c.0.s8 %v1958
        %v1960 = vperm.slane %v1954, %v1959
        %v1962 = vunpack.c.l.s4 1934713408
        %v1963 = vunpack.c.0.s8 %v1962
        %v1964 = vperm.slane %v1956, %v1963
        %v1965 = vrot.slane %v1928, 4
        %v1966 = vsel %vm537, %v1965, %v1916
        %v1967 = vrot.slane %v1916, 4
        %v1968 = vsel %vm537, %v1928, %v1967
        %v1970 = vunpack.c.l.s4 1934713408
        %v1971 = vunpack.c.0.s8 %v1970
        %v1972 = vperm.slane %v1966, %v1971
        %v1974 = vunpack.c.l.s4 1934713408
        %v1975 = vunpack.c.0.s8 %v1974
        %v1976 = vperm.slane %v1968, %v1975
        %v1977 = vrot.slane %v1960, 4
        %v1978 = vsel %vm537, %v1977, %v1936
        %v1979 = vrot.slane %v1936, 4
        %v1980 = vsel %vm537, %v1960, %v1979
        %v1981 = vrot.slane %v1964, 4
        %v1982 = vsel %vm537, %v1981, %v1940
        %v1983 = vrot.slane %v1940, 4
        %v1984 = vsel %vm537, %v1964, %v1983
        %v1985 = vrot.slane %v1972, 4
        %v1986 = vsel %vm537, %v1985, %v1948
        %v1987 = vrot.slane %v1948, 4
        %v1988 = vsel %vm537, %v1972, %v1987
        %v1989 = vrot.slane %v1976, 4
        %v1990 = vsel %vm537, %v1989, %v1952
        %v1991 = vrot.slane %v1952, 4
        %v1992 = vsel %vm537, %v1976, %v1991
        %v1993 = vrot.slane %v471, 4
        %v1994 = vsel %vm537, %v1993, %v465
        %v1995 = vrot.slane %v465, 4
        %v1996 = vsel %vm537, %v471, %v1995
        %v1998 = vunpack.c.l.s4 1983009808
        %v1999 = vunpack.c.0.s8 %v1998
        %v2000 = vperm.slane %v1994, %v1999
        %v2002 = vunpack.c.l.s4 1983009808
        %v2003 = vunpack.c.0.s8 %v2002
        %v2004 = vperm.slane %v1996, %v2003
        %v2005 = vrot.slane %v474, 4
        %v2006 = vsel %vm537, %v2005, %v468
        %v2007 = vrot.slane %v468, 4
        %v2008 = vsel %vm537, %v474, %v2007
        %v2010 = vunpack.c.l.s4 1983009808
        %v2011 = vunpack.c.0.s8 %v2010
        %v2012 = vperm.slane %v2006, %v2011
        %v2014 = vunpack.c.l.s4 1983009808
        %v2015 = vunpack.c.0.s8 %v2014
        %v2016 = vperm.slane %v2008, %v2015
        %v2017 = vrot.slane %v483, 4
        %v2018 = vsel %vm537, %v2017, %v477
        %v2019 = vrot.slane %v477, 4
        %v2020 = vsel %vm537, %v483, %v2019
        %v2022 = vunpack.c.l.s4 1983009808
        %v2023 = vunpack.c.0.s8 %v2022
        %v2024 = vperm.slane %v2018, %v2023
        %v2026 = vunpack.c.l.s4 1983009808
        %v2027 = vunpack.c.0.s8 %v2026
        %v2028 = vperm.slane %v2020, %v2027
        %v2029 = vrot.slane %v486, 4
        %v2030 = vsel %vm537, %v2029, %v480
        %v2031 = vrot.slane %v480, 4
        %v2032 = vsel %vm537, %v486, %v2031
        %v2034 = vunpack.c.l.s4 1983009808
        %v2035 = vunpack.c.0.s8 %v2034
        %v2036 = vperm.slane %v2030, %v2035
        %v2038 = vunpack.c.l.s4 1983009808
        %v2039 = vunpack.c.0.s8 %v2038
        %v2040 = vperm.slane %v2032, %v2039
        %v2041 = vrot.slane %v2012, 4
        %v2042 = vsel %vm537, %v2041, %v2000
        %v2043 = vrot.slane %v2000, 4
        %v2044 = vsel %vm537, %v2012, %v2043
        %v2046 = vunpack.c.l.s4 1934713408
        %v2047 = vunpack.c.0.s8 %v2046
        %v2048 = vperm.slane %v2042, %v2047
        %v2050 = vunpack.c.l.s4 1934713408
        %v2051 = vunpack.c.0.s8 %v2050
        %v2052 = vperm.slane %v2044, %v2051
        %v2053 = vrot.slane %v2016, 4
        %v2054 = vsel %vm537, %v2053, %v2004
        %v2055 = vrot.slane %v2004, 4
        %v2056 = vsel %vm537, %v2016, %v2055
        %v2058 = vunpack.c.l.s4 1934713408
        %v2059 = vunpack.c.0.s8 %v2058
        %v2060 = vperm.slane %v2054, %v2059
        %v2062 = vunpack.c.l.s4 1934713408
        %v2063 = vunpack.c.0.s8 %v2062
        %v2064 = vperm.slane %v2056, %v2063
        %v2065 = vrot.slane %v2036, 4
        %v2066 = vsel %vm537, %v2065, %v2024
        %v2067 = vrot.slane %v2024, 4
        %v2068 = vsel %vm537, %v2036, %v2067
        %v2070 = vunpack.c.l.s4 1934713408
        %v2071 = vunpack.c.0.s8 %v2070
        %v2072 = vperm.slane %v2066, %v2071
        %v2074 = vunpack.c.l.s4 1934713408
        %v2075 = vunpack.c.0.s8 %v2074
        %v2076 = vperm.slane %v2068, %v2075
        %v2077 = vrot.slane %v2040, 4
        %v2078 = vsel %vm537, %v2077, %v2028
        %v2079 = vrot.slane %v2028, 4
        %v2080 = vsel %vm537, %v2040, %v2079
        %v2082 = vunpack.c.l.s4 1934713408
        %v2083 = vunpack.c.0.s8 %v2082
        %v2084 = vperm.slane %v2078, %v2083
        %v2086 = vunpack.c.l.s4 1934713408
        %v2087 = vunpack.c.0.s8 %v2086
        %v2088 = vperm.slane %v2080, %v2087
        %v2089 = vrot.slane %v2072, 4
        %v2090 = vsel %vm537, %v2089, %v2048
        %v2091 = vrot.slane %v2048, 4
        %v2092 = vsel %vm537, %v2072, %v2091
        %v2093 = vrot.slane %v2076, 4
        %v2094 = vsel %vm537, %v2093, %v2052
        %v2095 = vrot.slane %v2052, 4
        %v2096 = vsel %vm537, %v2076, %v2095
        %v2097 = vrot.slane %v2084, 4
        %v2098 = vsel %vm537, %v2097, %v2060
        %v2099 = vrot.slane %v2060, 4
        %v2100 = vsel %vm537, %v2084, %v2099
        %v2101 = vrot.slane %v2088, 4
        %v2102 = vsel %vm537, %v2101, %v2064
        %v2103 = vrot.slane %v2064, 4
        %v2104 = vsel %vm537, %v2088, %v2103
        %v2105 = vrot.slane %v495, 4
        %v2106 = vsel %vm537, %v2105, %v489
        %v2107 = vrot.slane %v489, 4
        %v2108 = vsel %vm537, %v495, %v2107
        %v2110 = vunpack.c.l.s4 1983009808
        %v2111 = vunpack.c.0.s8 %v2110
        %v2112 = vperm.slane %v2106, %v2111
        %v2114 = vunpack.c.l.s4 1983009808
        %v2115 = vunpack.c.0.s8 %v2114
        %v2116 = vperm.slane %v2108, %v2115
        %v2117 = vrot.slane %v498, 4
        %v2118 = vsel %vm537, %v2117, %v492
        %v2119 = vrot.slane %v492, 4
        %v2120 = vsel %vm537, %v498, %v2119
        %v2122 = vunpack.c.l.s4 1983009808
        %v2123 = vunpack.c.0.s8 %v2122
        %v2124 = vperm.slane %v2118, %v2123
        %v2126 = vunpack.c.l.s4 1983009808
        %v2127 = vunpack.c.0.s8 %v2126
        %v2128 = vperm.slane %v2120, %v2127
        %v2129 = vrot.slane %v507, 4
        %v2130 = vsel %vm537, %v2129, %v501
        %v2131 = vrot.slane %v501, 4
        %v2132 = vsel %vm537, %v507, %v2131
        %v2134 = vunpack.c.l.s4 1983009808
        %v2135 = vunpack.c.0.s8 %v2134
        %v2136 = vperm.slane %v2130, %v2135
        %v2138 = vunpack.c.l.s4 1983009808
        %v2139 = vunpack.c.0.s8 %v2138
        %v2140 = vperm.slane %v2132, %v2139
        %v2141 = vrot.slane %v510, 4
        %v2142 = vsel %vm537, %v2141, %v504
        %v2143 = vrot.slane %v504, 4
        %v2144 = vsel %vm537, %v510, %v2143
        %v2146 = vunpack.c.l.s4 1983009808
        %v2147 = vunpack.c.0.s8 %v2146
        %v2148 = vperm.slane %v2142, %v2147
        %v2150 = vunpack.c.l.s4 1983009808
        %v2151 = vunpack.c.0.s8 %v2150
        %v2152 = vperm.slane %v2144, %v2151
        %v2153 = vrot.slane %v2124, 4
        %v2154 = vsel %vm537, %v2153, %v2112
        %v2155 = vrot.slane %v2112, 4
        %v2156 = vsel %vm537, %v2124, %v2155
        %v2158 = vunpack.c.l.s4 1934713408
        %v2159 = vunpack.c.0.s8 %v2158
        %v2160 = vperm.slane %v2154, %v2159
        %v2162 = vunpack.c.l.s4 1934713408
        %v2163 = vunpack.c.0.s8 %v2162
        %v2164 = vperm.slane %v2156, %v2163
        %v2165 = vrot.slane %v2128, 4
        %v2166 = vsel %vm537, %v2165, %v2116
        %v2167 = vrot.slane %v2116, 4
        %v2168 = vsel %vm537, %v2128, %v2167
        %v2170 = vunpack.c.l.s4 1934713408
        %v2171 = vunpack.c.0.s8 %v2170
        %v2172 = vperm.slane %v2166, %v2171
        %v2174 = vunpack.c.l.s4 1934713408
        %v2175 = vunpack.c.0.s8 %v2174
        %v2176 = vperm.slane %v2168, %v2175
        %v2177 = vrot.slane %v2148, 4
        %v2178 = vsel %vm537, %v2177, %v2136
        %v2179 = vrot.slane %v2136, 4
        %v2180 = vsel %vm537, %v2148, %v2179
        %v2182 = vunpack.c.l.s4 1934713408
        %v2183 = vunpack.c.0.s8 %v2182
        %v2184 = vperm.slane %v2178, %v2183
        %v2186 = vunpack.c.l.s4 1934713408
        %v2187 = vunpack.c.0.s8 %v2186
        %v2188 = vperm.slane %v2180, %v2187
        %v2189 = vrot.slane %v2152, 4
        %v2190 = vsel %vm537, %v2189, %v2140
        %v2191 = vrot.slane %v2140, 4
        %v2192 = vsel %vm537, %v2152, %v2191
        %v2194 = vunpack.c.l.s4 1934713408
        %v2195 = vunpack.c.0.s8 %v2194
        %v2196 = vperm.slane %v2190, %v2195
        %v2198 = vunpack.c.l.s4 1934713408
        %v2199 = vunpack.c.0.s8 %v2198
        %v2200 = vperm.slane %v2192, %v2199
        %v2201 = vrot.slane %v2184, 4
        %v2202 = vsel %vm537, %v2201, %v2160
        %v2203 = vrot.slane %v2160, 4
        %v2204 = vsel %vm537, %v2184, %v2203
        %v2205 = vrot.slane %v2188, 4
        %v2206 = vsel %vm537, %v2205, %v2164
        %v2207 = vrot.slane %v2164, 4
        %v2208 = vsel %vm537, %v2188, %v2207
        %v2209 = vrot.slane %v2196, 4
        %v2210 = vsel %vm537, %v2209, %v2172
        %v2211 = vrot.slane %v2172, 4
        %v2212 = vsel %vm537, %v2196, %v2211
        %v2213 = vrot.slane %v2200, 4
        %v2214 = vsel %vm537, %v2213, %v2176
        %v2215 = vrot.slane %v2176, 4
        %v2216 = vsel %vm537, %v2200, %v2215
        %v2217 = vrot.slane %v519, 4
        %v2218 = vsel %vm537, %v2217, %v513
        %v2219 = vrot.slane %v513, 4
        %v2220 = vsel %vm537, %v519, %v2219
        %v2222 = vunpack.c.l.s4 1983009808
        %v2223 = vunpack.c.0.s8 %v2222
        %v2224 = vperm.slane %v2218, %v2223
        %v2226 = vunpack.c.l.s4 1983009808
        %v2227 = vunpack.c.0.s8 %v2226
        %v2228 = vperm.slane %v2220, %v2227
        %v2229 = vrot.slane %v522, 4
        %v2230 = vsel %vm537, %v2229, %v516
        %v2231 = vrot.slane %v516, 4
        %v2232 = vsel %vm537, %v522, %v2231
        %v2234 = vunpack.c.l.s4 1983009808
        %v2235 = vunpack.c.0.s8 %v2234
        %v2236 = vperm.slane %v2230, %v2235
        %v2238 = vunpack.c.l.s4 1983009808
        %v2239 = vunpack.c.0.s8 %v2238
        %v2240 = vperm.slane %v2232, %v2239
        %v2241 = vrot.slane %v531, 4
        %v2242 = vsel %vm537, %v2241, %v525
        %v2243 = vrot.slane %v525, 4
        %v2244 = vsel %vm537, %v531, %v2243
        %v2246 = vunpack.c.l.s4 1983009808
        %v2247 = vunpack.c.0.s8 %v2246
        %v2248 = vperm.slane %v2242, %v2247
        %v2250 = vunpack.c.l.s4 1983009808
        %v2251 = vunpack.c.0.s8 %v2250
        %v2252 = vperm.slane %v2244, %v2251
        %v2253 = vrot.slane %v534, 4
        %v2254 = vsel %vm537, %v2253, %v528
        %v2255 = vrot.slane %v528, 4
        %v2256 = vsel %vm537, %v534, %v2255
        %v2258 = vunpack.c.l.s4 1983009808
        %v2259 = vunpack.c.0.s8 %v2258
        %v2260 = vperm.slane %v2254, %v2259
        %v2262 = vunpack.c.l.s4 1983009808
        %v2263 = vunpack.c.0.s8 %v2262
        %v2264 = vperm.slane %v2256, %v2263
        %v2265 = vrot.slane %v2236, 4
        %v2266 = vsel %vm537, %v2265, %v2224
        %v2267 = vrot.slane %v2224, 4
        %v2268 = vsel %vm537, %v2236, %v2267
        %v2270 = vunpack.c.l.s4 1934713408
        %v2271 = vunpack.c.0.s8 %v2270
        %v2272 = vperm.slane %v2266, %v2271
        %v2274 = vunpack.c.l.s4 1934713408
        %v2275 = vunpack.c.0.s8 %v2274
        %v2276 = vperm.slane %v2268, %v2275
        %v2277 = vrot.slane %v2240, 4
        %v2278 = vsel %vm537, %v2277, %v2228
        %v2279 = vrot.slane %v2228, 4
        %v2280 = vsel %vm537, %v2240, %v2279
        %v2282 = vunpack.c.l.s4 1934713408
        %v2283 = vunpack.c.0.s8 %v2282
        %v2284 = vperm.slane %v2278, %v2283
        %v2286 = vunpack.c.l.s4 1934713408
        %v2287 = vunpack.c.0.s8 %v2286
        %v2288 = vperm.slane %v2280, %v2287
        %v2289 = vrot.slane %v2260, 4
        %v2290 = vsel %vm537, %v2289, %v2248
        %v2291 = vrot.slane %v2248, 4
        %v2292 = vsel %vm537, %v2260, %v2291
        %v2294 = vunpack.c.l.s4 1934713408
        %v2295 = vunpack.c.0.s8 %v2294
        %v2296 = vperm.slane %v2290, %v2295
        %v2298 = vunpack.c.l.s4 1934713408
        %v2299 = vunpack.c.0.s8 %v2298
        %v2300 = vperm.slane %v2292, %v2299
        %v2301 = vrot.slane %v2264, 4
        %v2302 = vsel %vm537, %v2301, %v2252
        %v2303 = vrot.slane %v2252, 4
        %v2304 = vsel %vm537, %v2264, %v2303
        %v2306 = vunpack.c.l.s4 1934713408
        %v2307 = vunpack.c.0.s8 %v2306
        %v2308 = vperm.slane %v2302, %v2307
        %v2310 = vunpack.c.l.s4 1934713408
        %v2311 = vunpack.c.0.s8 %v2310
        %v2312 = vperm.slane %v2304, %v2311
        %v2313 = vrot.slane %v2296, 4
        %v2314 = vsel %vm537, %v2313, %v2272
        %v2315 = vrot.slane %v2272, 4
        %v2316 = vsel %vm537, %v2296, %v2315
        %v2317 = vrot.slane %v2300, 4
        %v2318 = vsel %vm537, %v2317, %v2276
        %v2319 = vrot.slane %v2276, 4
        %v2320 = vsel %vm537, %v2300, %v2319
        %v2321 = vrot.slane %v2308, 4
        %v2322 = vsel %vm537, %v2321, %v2284
        %v2323 = vrot.slane %v2284, 4
        %v2324 = vsel %vm537, %v2308, %v2323
        %v2325 = vrot.slane %v2312, 4
        %v2326 = vsel %vm537, %v2325, %v2288
        %v2327 = vrot.slane %v2288, 4
        %v2328 = vsel %vm537, %v2312, %v2327
        %2457 = vrot.lane.b32.xlu0 %v634, 127
        %v2458 = vpop.permute.xlu0 %2457
        %2459 = vrot.lane.b32.xlu0 %v746, 127
        %v2460 = vpop.permute.xlu0 %2459
        %2461 = vrot.lane.b32.xlu0 %v858, 127
        %v2462 = vpop.permute.xlu0 %2461
        %2463 = vrot.lane.b32.xlu0 %v970, 127
        %v2464 = vpop.permute.xlu0 %2463
        %2465 = vrot.lane.b32.xlu0 %v1082, 127
        %v2466 = vpop.permute.xlu0 %2465
        %2467 = vrot.lane.b32.xlu0 %v1194, 127
        %v2468 = vpop.permute.xlu0 %2467
        %2469 = vrot.lane.b32.xlu0 %v1306, 127
        %v2470 = vpop.permute.xlu0 %2469
        %2471 = vrot.lane.b32.xlu0 %v1418, 127
        %v2472 = vpop.permute.xlu0 %2471
        %2473 = vrot.lane.b32.xlu0 %v1530, 127
        %v2474 = vpop.permute.xlu0 %2473
        %2475 = vrot.lane.b32.xlu0 %v1642, 127
        %v2476 = vpop.permute.xlu0 %2475
        %2477 = vrot.lane.b32.xlu0 %v1754, 127
        %v2478 = vpop.permute.xlu0 %2477
        %2479 = vrot.lane.b32.xlu0 %v1866, 127
        %v2480 = vpop.permute.xlu0 %2479
        %2481 = vrot.lane.b32.xlu0 %v1978, 127
        %v2482 = vpop.permute.xlu0 %2481
        %2483 = vrot.lane.b32.xlu0 %v2090, 127
        %v2484 = vpop.permute.xlu0 %2483
        %2485 = vrot.lane.b32.xlu0 %v2202, 127
        %v2486 = vpop.permute.xlu0 %2485
        %2487 = vrot.lane.b32.xlu0 %v2314, 127
        %v2488 = vpop.permute.xlu0 %2487
        %2489 = vrot.lane.b32.xlu0 %v636, 127
        %v2490 = vpop.permute.xlu0 %2489
        %2491 = vrot.lane.b32.xlu0 %v748, 127
        %v2492 = vpop.permute.xlu0 %2491
        %2493 = vrot.lane.b32.xlu0 %v860, 127
        %v2494 = vpop.permute.xlu0 %2493
        %2495 = vrot.lane.b32.xlu0 %v972, 127
        %v2496 = vpop.permute.xlu0 %2495
        %2497 = vrot.lane.b32.xlu0 %v1084, 127
        %v2498 = vpop.permute.xlu0 %2497
        %2499 = vrot.lane.b32.xlu0 %v1196, 127
        %v2500 = vpop.permute.xlu0 %2499
        %2501 = vrot.lane.b32.xlu0 %v1308, 127
        %v2502 = vpop.permute.xlu0 %2501
        %2503 = vrot.lane.b32.xlu0 %v1420, 127
        %v2504 = vpop.permute.xlu0 %2503
        %2505 = vrot.lane.b32.xlu0 %v1532, 127
        %v2506 = vpop.permute.xlu0 %2505
        %2507 = vrot.lane.b32.xlu0 %v1644, 127
        %v2508 = vpop.permute.xlu0 %2507
        %2509 = vrot.lane.b32.xlu0 %v1756, 127
        %v2510 = vpop.permute.xlu0 %2509
        %2511 = vrot.lane.b32.xlu0 %v1868, 127
        %v2512 = vpop.permute.xlu0 %2511
        %2513 = vrot.lane.b32.xlu0 %v1980, 127
        %v2514 = vpop.permute.xlu0 %2513
        %2515 = vrot.lane.b32.xlu0 %v2092, 127
        %v2516 = vpop.permute.xlu0 %2515
        %2517 = vrot.lane.b32.xlu0 %v2204, 127
        %v2518 = vpop.permute.xlu0 %2517
        %2519 = vrot.lane.b32.xlu0 %v2316, 127
        %v2520 = vpop.permute.xlu0 %2519
        %2521 = vrot.lane.b32.xlu0 %v638, 127
        %v2522 = vpop.permute.xlu0 %2521
        %2523 = vrot.lane.b32.xlu0 %v750, 127
        %v2524 = vpop.permute.xlu0 %2523
        %2525 = vrot.lane.b32.xlu0 %v862, 127
        %v2526 = vpop.permute.xlu0 %2525
        %2527 = vrot.lane.b32.xlu0 %v974, 127
        %v2528 = vpop.permute.xlu0 %2527
        %2529 = vrot.lane.b32.xlu0 %v1086, 127
        %v2530 = vpop.permute.xlu0 %2529
        %2531 = vrot.lane.b32.xlu0 %v1198, 127
        %v2532 = vpop.permute.xlu0 %2531
        %2533 = vrot.lane.b32.xlu0 %v1310, 127
        %v2534 = vpop.permute.xlu0 %2533
        %2535 = vrot.lane.b32.xlu0 %v1422, 127
        %v2536 = vpop.permute.xlu0 %2535
        %2537 = vrot.lane.b32.xlu0 %v1534, 127
        %v2538 = vpop.permute.xlu0 %2537
        %2539 = vrot.lane.b32.xlu0 %v1646, 127
        %v2540 = vpop.permute.xlu0 %2539
        %2541 = vrot.lane.b32.xlu0 %v1758, 127
        %v2542 = vpop.permute.xlu0 %2541
        %2543 = vrot.lane.b32.xlu0 %v1870, 127
        %v2544 = vpop.permute.xlu0 %2543
        %2545 = vrot.lane.b32.xlu0 %v1982, 127
        %v2546 = vpop.permute.xlu0 %2545
        %2547 = vrot.lane.b32.xlu0 %v2094, 127
        %v2548 = vpop.permute.xlu0 %2547
        %2549 = vrot.lane.b32.xlu0 %v2206, 127
        %v2550 = vpop.permute.xlu0 %2549
        %2551 = vrot.lane.b32.xlu0 %v2318, 127
        %v2552 = vpop.permute.xlu0 %2551
        %2553 = vrot.lane.b32.xlu0 %v640, 127
        %v2554 = vpop.permute.xlu0 %2553
        %2555 = vrot.lane.b32.xlu0 %v752, 127
        %v2556 = vpop.permute.xlu0 %2555
        %2557 = vrot.lane.b32.xlu0 %v864, 127
        %v2558 = vpop.permute.xlu0 %2557
        %2559 = vrot.lane.b32.xlu0 %v976, 127
        %v2560 = vpop.permute.xlu0 %2559
        %2561 = vrot.lane.b32.xlu0 %v1088, 127
        %v2562 = vpop.permute.xlu0 %2561
        %2563 = vrot.lane.b32.xlu0 %v1200, 127
        %v2564 = vpop.permute.xlu0 %2563
        %2565 = vrot.lane.b32.xlu0 %v1312, 127
        %v2566 = vpop.permute.xlu0 %2565
        %2567 = vrot.lane.b32.xlu0 %v1424, 127
        %v2568 = vpop.permute.xlu0 %2567
        %2569 = vrot.lane.b32.xlu0 %v1536, 127
        %v2570 = vpop.permute.xlu0 %2569
        %2571 = vrot.lane.b32.xlu0 %v1648, 127
        %v2572 = vpop.permute.xlu0 %2571
        %2573 = vrot.lane.b32.xlu0 %v1760, 127
        %v2574 = vpop.permute.xlu0 %2573
        %2575 = vrot.lane.b32.xlu0 %v1872, 127
        %v2576 = vpop.permute.xlu0 %2575
        %2577 = vrot.lane.b32.xlu0 %v1984, 127
        %v2578 = vpop.permute.xlu0 %2577
        %2579 = vrot.lane.b32.xlu0 %v2096, 127
        %v2580 = vpop.permute.xlu0 %2579
        %2581 = vrot.lane.b32.xlu0 %v2208, 127
        %v2582 = vpop.permute.xlu0 %2581
        %2583 = vrot.lane.b32.xlu0 %v2320, 127
        %v2584 = vpop.permute.xlu0 %2583
        %2585 = vrot.lane.b32.xlu0 %v642, 127
        %v2586 = vpop.permute.xlu0 %2585
        %2587 = vrot.lane.b32.xlu0 %v754, 127
        %v2588 = vpop.permute.xlu0 %2587
        %2589 = vrot.lane.b32.xlu0 %v866, 127
        %v2590 = vpop.permute.xlu0 %2589
        %2591 = vrot.lane.b32.xlu0 %v978, 127
        %v2592 = vpop.permute.xlu0 %2591
        %2593 = vrot.lane.b32.xlu0 %v1090, 127
        %v2594 = vpop.permute.xlu0 %2593
        %2595 = vrot.lane.b32.xlu0 %v1202, 127
        %v2596 = vpop.permute.xlu0 %2595
        %2597 = vrot.lane.b32.xlu0 %v1314, 127
        %v2598 = vpop.permute.xlu0 %2597
        %2599 = vrot.lane.b32.xlu0 %v1426, 127
        %v2600 = vpop.permute.xlu0 %2599
        %2601 = vrot.lane.b32.xlu0 %v1538, 127
        %v2602 = vpop.permute.xlu0 %2601
        %2603 = vrot.lane.b32.xlu0 %v1650, 127
        %v2604 = vpop.permute.xlu0 %2603
        %2605 = vrot.lane.b32.xlu0 %v1762, 127
        %v2606 = vpop.permute.xlu0 %2605
        %2607 = vrot.lane.b32.xlu0 %v1874, 127
        %v2608 = vpop.permute.xlu0 %2607
        %2609 = vrot.lane.b32.xlu0 %v1986, 127
        %v2610 = vpop.permute.xlu0 %2609
        %2611 = vrot.lane.b32.xlu0 %v2098, 127
        %v2612 = vpop.permute.xlu0 %2611
        %2613 = vrot.lane.b32.xlu0 %v2210, 127
        %v2614 = vpop.permute.xlu0 %2613
        %2615 = vrot.lane.b32.xlu0 %v2322, 127
        %v2616 = vpop.permute.xlu0 %2615
        %2617 = vrot.lane.b32.xlu0 %v644, 127
        %v2618 = vpop.permute.xlu0 %2617
        %2619 = vrot.lane.b32.xlu0 %v756, 127
        %v2620 = vpop.permute.xlu0 %2619
        %2621 = vrot.lane.b32.xlu0 %v868, 127
        %v2622 = vpop.permute.xlu0 %2621
        %2623 = vrot.lane.b32.xlu0 %v980, 127
        %v2624 = vpop.permute.xlu0 %2623
        %2625 = vrot.lane.b32.xlu0 %v1092, 127
        %v2626 = vpop.permute.xlu0 %2625
        %2627 = vrot.lane.b32.xlu0 %v1204, 127
        %v2628 = vpop.permute.xlu0 %2627
        %2629 = vrot.lane.b32.xlu0 %v1316, 127
        %v2630 = vpop.permute.xlu0 %2629
        %2631 = vrot.lane.b32.xlu0 %v1428, 127
        %v2632 = vpop.permute.xlu0 %2631
        %2633 = vrot.lane.b32.xlu0 %v1540, 127
        %v2634 = vpop.permute.xlu0 %2633
        %2635 = vrot.lane.b32.xlu0 %v1652, 127
        %v2636 = vpop.permute.xlu0 %2635
        %2637 = vrot.lane.b32.xlu0 %v1764, 127
        %v2638 = vpop.permute.xlu0 %2637
        %2639 = vrot.lane.b32.xlu0 %v1876, 127
        %v2640 = vpop.permute.xlu0 %2639
        %2641 = vrot.lane.b32.xlu0 %v1988, 127
        %v2642 = vpop.permute.xlu0 %2641
        %2643 = vrot.lane.b32.xlu0 %v2100, 127
        %v2644 = vpop.permute.xlu0 %2643
        %2645 = vrot.lane.b32.xlu0 %v2212, 127
        %v2646 = vpop.permute.xlu0 %2645
        %2647 = vrot.lane.b32.xlu0 %v2324, 127
        %v2648 = vpop.permute.xlu0 %2647
        %2649 = vrot.lane.b32.xlu0 %v646, 127
        %v2650 = vpop.permute.xlu0 %2649
        %2651 = vrot.lane.b32.xlu0 %v758, 127
        %v2652 = vpop.permute.xlu0 %2651
        %2653 = vrot.lane.b32.xlu0 %v870, 127
        %v2654 = vpop.permute.xlu0 %2653
        %2655 = vrot.lane.b32.xlu0 %v982, 127
        %v2656 = vpop.permute.xlu0 %2655
        %2657 = vrot.lane.b32.xlu0 %v1094, 127
        %v2658 = vpop.permute.xlu0 %2657
        %2659 = vrot.lane.b32.xlu0 %v1206, 127
        %v2660 = vpop.permute.xlu0 %2659
        %2661 = vrot.lane.b32.xlu0 %v1318, 127
        %v2662 = vpop.permute.xlu0 %2661
        %2663 = vrot.lane.b32.xlu0 %v1430, 127
        %v2664 = vpop.permute.xlu0 %2663
        %2665 = vrot.lane.b32.xlu0 %v1542, 127
        %v2666 = vpop.permute.xlu0 %2665
        %2667 = vrot.lane.b32.xlu0 %v1654, 127
        %v2668 = vpop.permute.xlu0 %2667
        %2669 = vrot.lane.b32.xlu0 %v1766, 127
        %v2670 = vpop.permute.xlu0 %2669
        %2671 = vrot.lane.b32.xlu0 %v1878, 127
        %v2672 = vpop.permute.xlu0 %2671
        %2673 = vrot.lane.b32.xlu0 %v1990, 127
        %v2674 = vpop.permute.xlu0 %2673
        %2675 = vrot.lane.b32.xlu0 %v2102, 127
        %v2676 = vpop.permute.xlu0 %2675
        %2677 = vrot.lane.b32.xlu0 %v2214, 127
        %v2678 = vpop.permute.xlu0 %2677
        %2679 = vrot.lane.b32.xlu0 %v2326, 127
        %v2680 = vpop.permute.xlu0 %2679
        %2681 = vrot.lane.b32.xlu0 %v648, 127
        %v2682 = vpop.permute.xlu0 %2681
        %2683 = vrot.lane.b32.xlu0 %v760, 127
        %v2684 = vpop.permute.xlu0 %2683
        %2685 = vrot.lane.b32.xlu0 %v872, 127
        %v2686 = vpop.permute.xlu0 %2685
        %2687 = vrot.lane.b32.xlu0 %v984, 127
        %v2688 = vpop.permute.xlu0 %2687
        %2689 = vrot.lane.b32.xlu0 %v1096, 127
        %v2690 = vpop.permute.xlu0 %2689
        %2691 = vrot.lane.b32.xlu0 %v1208, 127
        %v2692 = vpop.permute.xlu0 %2691
        %2693 = vrot.lane.b32.xlu0 %v1320, 127
        %v2694 = vpop.permute.xlu0 %2693
        %2695 = vrot.lane.b32.xlu0 %v1432, 127
        %v2696 = vpop.permute.xlu0 %2695
        %2697 = vrot.lane.b32.xlu0 %v1544, 127
        %v2698 = vpop.permute.xlu0 %2697
        %2699 = vrot.lane.b32.xlu0 %v1656, 127
        %v2700 = vpop.permute.xlu0 %2699
        %2701 = vrot.lane.b32.xlu0 %v1768, 127
        %v2702 = vpop.permute.xlu0 %2701
        %2703 = vrot.lane.b32.xlu0 %v1880, 127
        %v2704 = vpop.permute.xlu0 %2703
        %2705 = vrot.lane.b32.xlu0 %v1992, 127
        %v2706 = vpop.permute.xlu0 %2705
        %2707 = vrot.lane.b32.xlu0 %v2104, 127
        %v2708 = vpop.permute.xlu0 %2707
        %2709 = vrot.lane.b32.xlu0 %v2216, 127
        %v2710 = vpop.permute.xlu0 %2709
        %2711 = vrot.lane.b32.xlu0 %v2328, 127
        %v2712 = vpop.permute.xlu0 %2711
        %v2841 = vsub.f32 %v634, %v2458
        %v2842 = vsub.f32 %v746, %v2460
        %v2843 = vsub.f32 %v858, %v2462
        %v2844 = vsub.f32 %v970, %v2464
        %v2845 = vsub.f32 %v1082, %v2466
        %v2846 = vsub.f32 %v1194, %v2468
        %v2847 = vsub.f32 %v1306, %v2470
        %v2848 = vsub.f32 %v1418, %v2472
        %v2849 = vsub.f32 %v1530, %v2474
        %v2850 = vsub.f32 %v1642, %v2476
        %v2851 = vsub.f32 %v1754, %v2478
        %v2852 = vsub.f32 %v1866, %v2480
        %v2853 = vsub.f32 %v1978, %v2482
        %v2854 = vsub.f32 %v2090, %v2484
        %v2855 = vsub.f32 %v2202, %v2486
        %v2856 = vsub.f32 %v2314, %v2488
        %v2857 = vsub.f32 %v636, %v2490
        %v2858 = vsub.f32 %v748, %v2492
        %v2859 = vsub.f32 %v860, %v2494
        %v2860 = vsub.f32 %v972, %v2496
        %v2861 = vsub.f32 %v1084, %v2498
        %v2862 = vsub.f32 %v1196, %v2500
        %v2863 = vsub.f32 %v1308, %v2502
        %v2864 = vsub.f32 %v1420, %v2504
        %v2865 = vsub.f32 %v1532, %v2506
        %v2866 = vsub.f32 %v1644, %v2508
        %v2867 = vsub.f32 %v1756, %v2510
        %v2868 = vsub.f32 %v1868, %v2512
        %v2869 = vsub.f32 %v1980, %v2514
        %v2870 = vsub.f32 %v2092, %v2516
        %v2871 = vsub.f32 %v2204, %v2518
        %v2872 = vsub.f32 %v2316, %v2520
        %v2873 = vsub.f32 %v638, %v2522
        %v2874 = vsub.f32 %v750, %v2524
        %v2875 = vsub.f32 %v862, %v2526
        %v2876 = vsub.f32 %v974, %v2528
        %v2877 = vsub.f32 %v1086, %v2530
        %v2878 = vsub.f32 %v1198, %v2532
        %v2879 = vsub.f32 %v1310, %v2534
        %v2880 = vsub.f32 %v1422, %v2536
        %v2881 = vsub.f32 %v1534, %v2538
        %v2882 = vsub.f32 %v1646, %v2540
        %v2883 = vsub.f32 %v1758, %v2542
        %v2884 = vsub.f32 %v1870, %v2544
        %v2885 = vsub.f32 %v1982, %v2546
        %v2886 = vsub.f32 %v2094, %v2548
        %v2887 = vsub.f32 %v2206, %v2550
        %v2888 = vsub.f32 %v2318, %v2552
        %v2889 = vsub.f32 %v640, %v2554
        %v2890 = vsub.f32 %v752, %v2556
        %v2891 = vsub.f32 %v864, %v2558
        %v2892 = vsub.f32 %v976, %v2560
        %v2893 = vsub.f32 %v1088, %v2562
        %v2894 = vsub.f32 %v1200, %v2564
        %v2895 = vsub.f32 %v1312, %v2566
        %v2896 = vsub.f32 %v1424, %v2568
        %v2897 = vsub.f32 %v1536, %v2570
        %v2898 = vsub.f32 %v1648, %v2572
        %v2899 = vsub.f32 %v1760, %v2574
        %v2900 = vsub.f32 %v1872, %v2576
        %v2901 = vsub.f32 %v1984, %v2578
        %v2902 = vsub.f32 %v2096, %v2580
        %v2903 = vsub.f32 %v2208, %v2582
        %v2904 = vsub.f32 %v2320, %v2584
        %v2905 = vsub.f32 %v642, %v2586
        %v2906 = vsub.f32 %v754, %v2588
        %v2907 = vsub.f32 %v866, %v2590
        %v2908 = vsub.f32 %v978, %v2592
        %v2909 = vsub.f32 %v1090, %v2594
        %v2910 = vsub.f32 %v1202, %v2596
        %v2911 = vsub.f32 %v1314, %v2598
        %v2912 = vsub.f32 %v1426, %v2600
        %v2913 = vsub.f32 %v1538, %v2602
        %v2914 = vsub.f32 %v1650, %v2604
        %v2915 = vsub.f32 %v1762, %v2606
        %v2916 = vsub.f32 %v1874, %v2608
        %v2917 = vsub.f32 %v1986, %v2610
        %v2918 = vsub.f32 %v2098, %v2612
        %v2919 = vsub.f32 %v2210, %v2614
        %v2920 = vsub.f32 %v2322, %v2616
        %v2921 = vsub.f32 %v644, %v2618
        %v2922 = vsub.f32 %v756, %v2620
        %v2923 = vsub.f32 %v868, %v2622
        %v2924 = vsub.f32 %v980, %v2624
        %v2925 = vsub.f32 %v1092, %v2626
        %v2926 = vsub.f32 %v1204, %v2628
        %v2927 = vsub.f32 %v1316, %v2630
        %v2928 = vsub.f32 %v1428, %v2632
        %v2929 = vsub.f32 %v1540, %v2634
        %v2930 = vsub.f32 %v1652, %v2636
        %v2931 = vsub.f32 %v1764, %v2638
        %v2932 = vsub.f32 %v1876, %v2640
        %v2933 = vsub.f32 %v1988, %v2642
        %v2934 = vsub.f32 %v2100, %v2644
        %v2935 = vsub.f32 %v2212, %v2646
        %v2936 = vsub.f32 %v2324, %v2648
        %v2937 = vsub.f32 %v646, %v2650
        %v2938 = vsub.f32 %v758, %v2652
        %v2939 = vsub.f32 %v870, %v2654
        %v2940 = vsub.f32 %v982, %v2656
        %v2941 = vsub.f32 %v1094, %v2658
        %v2942 = vsub.f32 %v1206, %v2660
        %v2943 = vsub.f32 %v1318, %v2662
        %v2944 = vsub.f32 %v1430, %v2664
        %v2945 = vsub.f32 %v1542, %v2666
        %v2946 = vsub.f32 %v1654, %v2668
        %v2947 = vsub.f32 %v1766, %v2670
        %v2948 = vsub.f32 %v1878, %v2672
        %v2949 = vsub.f32 %v1990, %v2674
        %v2950 = vsub.f32 %v2102, %v2676
        %v2951 = vsub.f32 %v2214, %v2678
        %v2952 = vsub.f32 %v2326, %v2680
        %v2953 = vsub.f32 %v648, %v2682
        %v2954 = vsub.f32 %v760, %v2684
        %v2955 = vsub.f32 %v872, %v2686
        %v2956 = vsub.f32 %v984, %v2688
        %v2957 = vsub.f32 %v1096, %v2690
        %v2958 = vsub.f32 %v1208, %v2692
        %v2959 = vsub.f32 %v1320, %v2694
        %v2960 = vsub.f32 %v1432, %v2696
        %v2961 = vsub.f32 %v1544, %v2698
        %v2962 = vsub.f32 %v1656, %v2700
        %v2963 = vsub.f32 %v1768, %v2702
        %v2964 = vsub.f32 %v1880, %v2704
        %v2965 = vsub.f32 %v1992, %v2706
        %v2966 = vsub.f32 %v2104, %v2708
        %v2967 = vsub.f32 %v2216, %v2710
        %v2968 = vsub.f32 %v2328, %v2712
        %3097 = vset.pattern.permute.xlu0 0
        %3098 = vperm.xlu0 %3097, %v2841
        %v3099 = vpop.permute.xlu0 %3098
        %3100 = vset.pattern.permute.xlu0 0
        %3101 = vperm.xlu0 %3100, %v2842
        %v3102 = vpop.permute.xlu0 %3101
        %3103 = vset.pattern.permute.xlu0 0
        %3104 = vperm.xlu0 %3103, %v2843
        %v3105 = vpop.permute.xlu0 %3104
        %3106 = vset.pattern.permute.xlu0 0
        %3107 = vperm.xlu0 %3106, %v2844
        %v3108 = vpop.permute.xlu0 %3107
        %3109 = vset.pattern.permute.xlu0 0
        %3110 = vperm.xlu0 %3109, %v2845
        %v3111 = vpop.permute.xlu0 %3110
        %3112 = vset.pattern.permute.xlu0 0
        %3113 = vperm.xlu0 %3112, %v2846
        %v3114 = vpop.permute.xlu0 %3113
        %3115 = vset.pattern.permute.xlu0 0
        %3116 = vperm.xlu0 %3115, %v2847
        %v3117 = vpop.permute.xlu0 %3116
        %3118 = vset.pattern.permute.xlu0 0
        %3119 = vperm.xlu0 %3118, %v2848
        %v3120 = vpop.permute.xlu0 %3119
        %3121 = vset.pattern.permute.xlu0 0
        %3122 = vperm.xlu0 %3121, %v2849
        %v3123 = vpop.permute.xlu0 %3122
        %3124 = vset.pattern.permute.xlu0 0
        %3125 = vperm.xlu0 %3124, %v2850
        %v3126 = vpop.permute.xlu0 %3125
        %3127 = vset.pattern.permute.xlu0 0
        %3128 = vperm.xlu0 %3127, %v2851
        %v3129 = vpop.permute.xlu0 %3128
        %3130 = vset.pattern.permute.xlu0 0
        %3131 = vperm.xlu0 %3130, %v2852
        %v3132 = vpop.permute.xlu0 %3131
        %3133 = vset.pattern.permute.xlu0 0
        %3134 = vperm.xlu0 %3133, %v2853
        %v3135 = vpop.permute.xlu0 %3134
        %3136 = vset.pattern.permute.xlu0 0
        %3137 = vperm.xlu0 %3136, %v2854
        %v3138 = vpop.permute.xlu0 %3137
        %3139 = vset.pattern.permute.xlu0 0
        %3140 = vperm.xlu0 %3139, %v2855
        %v3141 = vpop.permute.xlu0 %3140
        %3142 = vset.pattern.permute.xlu0 0
        %3143 = vperm.xlu0 %3142, %v2856
        %v3144 = vpop.permute.xlu0 %3143
        %3145 = vset.pattern.permute.xlu0 0
        %3146 = vperm.xlu0 %3145, %v2857
        %v3147 = vpop.permute.xlu0 %3146
        %3148 = vset.pattern.permute.xlu0 0
        %3149 = vperm.xlu0 %3148, %v2858
        %v3150 = vpop.permute.xlu0 %3149
        %3151 = vset.pattern.permute.xlu0 0
        %3152 = vperm.xlu0 %3151, %v2859
        %v3153 = vpop.permute.xlu0 %3152
        %3154 = vset.pattern.permute.xlu0 0
        %3155 = vperm.xlu0 %3154, %v2860
        %v3156 = vpop.permute.xlu0 %3155
        %3157 = vset.pattern.permute.xlu0 0
        %3158 = vperm.xlu0 %3157, %v2861
        %v3159 = vpop.permute.xlu0 %3158
        %3160 = vset.pattern.permute.xlu0 0
        %3161 = vperm.xlu0 %3160, %v2862
        %v3162 = vpop.permute.xlu0 %3161
        %3163 = vset.pattern.permute.xlu0 0
        %3164 = vperm.xlu0 %3163, %v2863
        %v3165 = vpop.permute.xlu0 %3164
        %3166 = vset.pattern.permute.xlu0 0
        %3167 = vperm.xlu0 %3166, %v2864
        %v3168 = vpop.permute.xlu0 %3167
        %3169 = vset.pattern.permute.xlu0 0
        %3170 = vperm.xlu0 %3169, %v2865
        %v3171 = vpop.permute.xlu0 %3170
        %3172 = vset.pattern.permute.xlu0 0
        %3173 = vperm.xlu0 %3172, %v2866
        %v3174 = vpop.permute.xlu0 %3173
        %3175 = vset.pattern.permute.xlu0 0
        %3176 = vperm.xlu0 %3175, %v2867
        %v3177 = vpop.permute.xlu0 %3176
        %3178 = vset.pattern.permute.xlu0 0
        %3179 = vperm.xlu0 %3178, %v2868
        %v3180 = vpop.permute.xlu0 %3179
        %3181 = vset.pattern.permute.xlu0 0
        %3182 = vperm.xlu0 %3181, %v2869
        %v3183 = vpop.permute.xlu0 %3182
        %3184 = vset.pattern.permute.xlu0 0
        %3185 = vperm.xlu0 %3184, %v2870
        %v3186 = vpop.permute.xlu0 %3185
        %3187 = vset.pattern.permute.xlu0 0
        %3188 = vperm.xlu0 %3187, %v2871
        %v3189 = vpop.permute.xlu0 %3188
        %3190 = vset.pattern.permute.xlu0 0
        %3191 = vperm.xlu0 %3190, %v2872
        %v3192 = vpop.permute.xlu0 %3191
        %3193 = vset.pattern.permute.xlu0 0
        %3194 = vperm.xlu0 %3193, %v2873
        %v3195 = vpop.permute.xlu0 %3194
        %3196 = vset.pattern.permute.xlu0 0
        %3197 = vperm.xlu0 %3196, %v2874
        %v3198 = vpop.permute.xlu0 %3197
        %3199 = vset.pattern.permute.xlu0 0
        %3200 = vperm.xlu0 %3199, %v2875
        %v3201 = vpop.permute.xlu0 %3200
        %3202 = vset.pattern.permute.xlu0 0
        %3203 = vperm.xlu0 %3202, %v2876
        %v3204 = vpop.permute.xlu0 %3203
        %3205 = vset.pattern.permute.xlu0 0
        %3206 = vperm.xlu0 %3205, %v2877
        %v3207 = vpop.permute.xlu0 %3206
        %3208 = vset.pattern.permute.xlu0 0
        %3209 = vperm.xlu0 %3208, %v2878
        %v3210 = vpop.permute.xlu0 %3209
        %3211 = vset.pattern.permute.xlu0 0
        %3212 = vperm.xlu0 %3211, %v2879
        %v3213 = vpop.permute.xlu0 %3212
        %3214 = vset.pattern.permute.xlu0 0
        %3215 = vperm.xlu0 %3214, %v2880
        %v3216 = vpop.permute.xlu0 %3215
        %3217 = vset.pattern.permute.xlu0 0
        %3218 = vperm.xlu0 %3217, %v2881
        %v3219 = vpop.permute.xlu0 %3218
        %3220 = vset.pattern.permute.xlu0 0
        %3221 = vperm.xlu0 %3220, %v2882
        %v3222 = vpop.permute.xlu0 %3221
        %3223 = vset.pattern.permute.xlu0 0
        %3224 = vperm.xlu0 %3223, %v2883
        %v3225 = vpop.permute.xlu0 %3224
        %3226 = vset.pattern.permute.xlu0 0
        %3227 = vperm.xlu0 %3226, %v2884
        %v3228 = vpop.permute.xlu0 %3227
        %3229 = vset.pattern.permute.xlu0 0
        %3230 = vperm.xlu0 %3229, %v2885
        %v3231 = vpop.permute.xlu0 %3230
        %3232 = vset.pattern.permute.xlu0 0
        %3233 = vperm.xlu0 %3232, %v2886
        %v3234 = vpop.permute.xlu0 %3233
        %3235 = vset.pattern.permute.xlu0 0
        %3236 = vperm.xlu0 %3235, %v2887
        %v3237 = vpop.permute.xlu0 %3236
        %3238 = vset.pattern.permute.xlu0 0
        %3239 = vperm.xlu0 %3238, %v2888
        %v3240 = vpop.permute.xlu0 %3239
        %3241 = vset.pattern.permute.xlu0 0
        %3242 = vperm.xlu0 %3241, %v2889
        %v3243 = vpop.permute.xlu0 %3242
        %3244 = vset.pattern.permute.xlu0 0
        %3245 = vperm.xlu0 %3244, %v2890
        %v3246 = vpop.permute.xlu0 %3245
        %3247 = vset.pattern.permute.xlu0 0
        %3248 = vperm.xlu0 %3247, %v2891
        %v3249 = vpop.permute.xlu0 %3248
        %3250 = vset.pattern.permute.xlu0 0
        %3251 = vperm.xlu0 %3250, %v2892
        %v3252 = vpop.permute.xlu0 %3251
        %3253 = vset.pattern.permute.xlu0 0
        %3254 = vperm.xlu0 %3253, %v2893
        %v3255 = vpop.permute.xlu0 %3254
        %3256 = vset.pattern.permute.xlu0 0
        %3257 = vperm.xlu0 %3256, %v2894
        %v3258 = vpop.permute.xlu0 %3257
        %3259 = vset.pattern.permute.xlu0 0
        %3260 = vperm.xlu0 %3259, %v2895
        %v3261 = vpop.permute.xlu0 %3260
        %3262 = vset.pattern.permute.xlu0 0
        %3263 = vperm.xlu0 %3262, %v2896
        %v3264 = vpop.permute.xlu0 %3263
        %3265 = vset.pattern.permute.xlu0 0
        %3266 = vperm.xlu0 %3265, %v2897
        %v3267 = vpop.permute.xlu0 %3266
        %3268 = vset.pattern.permute.xlu0 0
        %3269 = vperm.xlu0 %3268, %v2898
        %v3270 = vpop.permute.xlu0 %3269
        %3271 = vset.pattern.permute.xlu0 0
        %3272 = vperm.xlu0 %3271, %v2899
        %v3273 = vpop.permute.xlu0 %3272
        %3274 = vset.pattern.permute.xlu0 0
        %3275 = vperm.xlu0 %3274, %v2900
        %v3276 = vpop.permute.xlu0 %3275
        %3277 = vset.pattern.permute.xlu0 0
        %3278 = vperm.xlu0 %3277, %v2901
        %v3279 = vpop.permute.xlu0 %3278
        %3280 = vset.pattern.permute.xlu0 0
        %3281 = vperm.xlu0 %3280, %v2902
        %v3282 = vpop.permute.xlu0 %3281
        %3283 = vset.pattern.permute.xlu0 0
        %3284 = vperm.xlu0 %3283, %v2903
        %v3285 = vpop.permute.xlu0 %3284
        %3286 = vset.pattern.permute.xlu0 0
        %3287 = vperm.xlu0 %3286, %v2904
        %v3288 = vpop.permute.xlu0 %3287
        %3289 = vset.pattern.permute.xlu0 0
        %3290 = vperm.xlu0 %3289, %v2905
        %v3291 = vpop.permute.xlu0 %3290
        %3292 = vset.pattern.permute.xlu0 0
        %3293 = vperm.xlu0 %3292, %v2906
        %v3294 = vpop.permute.xlu0 %3293
        %3295 = vset.pattern.permute.xlu0 0
        %3296 = vperm.xlu0 %3295, %v2907
        %v3297 = vpop.permute.xlu0 %3296
        %3298 = vset.pattern.permute.xlu0 0
        %3299 = vperm.xlu0 %3298, %v2908
        %v3300 = vpop.permute.xlu0 %3299
        %3301 = vset.pattern.permute.xlu0 0
        %3302 = vperm.xlu0 %3301, %v2909
        %v3303 = vpop.permute.xlu0 %3302
        %3304 = vset.pattern.permute.xlu0 0
        %3305 = vperm.xlu0 %3304, %v2910
        %v3306 = vpop.permute.xlu0 %3305
        %3307 = vset.pattern.permute.xlu0 0
        %3308 = vperm.xlu0 %3307, %v2911
        %v3309 = vpop.permute.xlu0 %3308
        %3310 = vset.pattern.permute.xlu0 0
        %3311 = vperm.xlu0 %3310, %v2912
        %v3312 = vpop.permute.xlu0 %3311
        %3313 = vset.pattern.permute.xlu0 0
        %3314 = vperm.xlu0 %3313, %v2913
        %v3315 = vpop.permute.xlu0 %3314
        %3316 = vset.pattern.permute.xlu0 0
        %3317 = vperm.xlu0 %3316, %v2914
        %v3318 = vpop.permute.xlu0 %3317
        %3319 = vset.pattern.permute.xlu0 0
        %3320 = vperm.xlu0 %3319, %v2915
        %v3321 = vpop.permute.xlu0 %3320
        %3322 = vset.pattern.permute.xlu0 0
        %3323 = vperm.xlu0 %3322, %v2916
        %v3324 = vpop.permute.xlu0 %3323
        %3325 = vset.pattern.permute.xlu0 0
        %3326 = vperm.xlu0 %3325, %v2917
        %v3327 = vpop.permute.xlu0 %3326
        %3328 = vset.pattern.permute.xlu0 0
        %3329 = vperm.xlu0 %3328, %v2918
        %v3330 = vpop.permute.xlu0 %3329
        %3331 = vset.pattern.permute.xlu0 0
        %3332 = vperm.xlu0 %3331, %v2919
        %v3333 = vpop.permute.xlu0 %3332
        %3334 = vset.pattern.permute.xlu0 0
        %3335 = vperm.xlu0 %3334, %v2920
        %v3336 = vpop.permute.xlu0 %3335
        %3337 = vset.pattern.permute.xlu0 0
        %3338 = vperm.xlu0 %3337, %v2921
        %v3339 = vpop.permute.xlu0 %3338
        %3340 = vset.pattern.permute.xlu0 0
        %3341 = vperm.xlu0 %3340, %v2922
        %v3342 = vpop.permute.xlu0 %3341
        %3343 = vset.pattern.permute.xlu0 0
        %3344 = vperm.xlu0 %3343, %v2923
        %v3345 = vpop.permute.xlu0 %3344
        %3346 = vset.pattern.permute.xlu0 0
        %3347 = vperm.xlu0 %3346, %v2924
        %v3348 = vpop.permute.xlu0 %3347
        %3349 = vset.pattern.permute.xlu0 0
        %3350 = vperm.xlu0 %3349, %v2925
        %v3351 = vpop.permute.xlu0 %3350
        %3352 = vset.pattern.permute.xlu0 0
        %3353 = vperm.xlu0 %3352, %v2926
        %v3354 = vpop.permute.xlu0 %3353
        %3355 = vset.pattern.permute.xlu0 0
        %3356 = vperm.xlu0 %3355, %v2927
        %v3357 = vpop.permute.xlu0 %3356
        %3358 = vset.pattern.permute.xlu0 0
        %3359 = vperm.xlu0 %3358, %v2928
        %v3360 = vpop.permute.xlu0 %3359
        %3361 = vset.pattern.permute.xlu0 0
        %3362 = vperm.xlu0 %3361, %v2929
        %v3363 = vpop.permute.xlu0 %3362
        %3364 = vset.pattern.permute.xlu0 0
        %3365 = vperm.xlu0 %3364, %v2930
        %v3366 = vpop.permute.xlu0 %3365
        %3367 = vset.pattern.permute.xlu0 0
        %3368 = vperm.xlu0 %3367, %v2931
        %v3369 = vpop.permute.xlu0 %3368
        %3370 = vset.pattern.permute.xlu0 0
        %3371 = vperm.xlu0 %3370, %v2932
        %v3372 = vpop.permute.xlu0 %3371
        %3373 = vset.pattern.permute.xlu0 0
        %3374 = vperm.xlu0 %3373, %v2933
        %v3375 = vpop.permute.xlu0 %3374
        %3376 = vset.pattern.permute.xlu0 0
        %3377 = vperm.xlu0 %3376, %v2934
        %v3378 = vpop.permute.xlu0 %3377
        %3379 = vset.pattern.permute.xlu0 0
        %3380 = vperm.xlu0 %3379, %v2935
        %v3381 = vpop.permute.xlu0 %3380
        %3382 = vset.pattern.permute.xlu0 0
        %3383 = vperm.xlu0 %3382, %v2936
        %v3384 = vpop.permute.xlu0 %3383
        %3385 = vset.pattern.permute.xlu0 0
        %3386 = vperm.xlu0 %3385, %v2937
        %v3387 = vpop.permute.xlu0 %3386
        %3388 = vset.pattern.permute.xlu0 0
        %3389 = vperm.xlu0 %3388, %v2938
        %v3390 = vpop.permute.xlu0 %3389
        %3391 = vset.pattern.permute.xlu0 0
        %3392 = vperm.xlu0 %3391, %v2939
        %v3393 = vpop.permute.xlu0 %3392
        %3394 = vset.pattern.permute.xlu0 0
        %3395 = vperm.xlu0 %3394, %v2940
        %v3396 = vpop.permute.xlu0 %3395
        %3397 = vset.pattern.permute.xlu0 0
        %3398 = vperm.xlu0 %3397, %v2941
        %v3399 = vpop.permute.xlu0 %3398
        %3400 = vset.pattern.permute.xlu0 0
        %3401 = vperm.xlu0 %3400, %v2942
        %v3402 = vpop.permute.xlu0 %3401
        %3403 = vset.pattern.permute.xlu0 0
        %3404 = vperm.xlu0 %3403, %v2943
        %v3405 = vpop.permute.xlu0 %3404
        %3406 = vset.pattern.permute.xlu0 0
        %3407 = vperm.xlu0 %3406, %v2944
        %v3408 = vpop.permute.xlu0 %3407
        %3409 = vset.pattern.permute.xlu0 0
        %3410 = vperm.xlu0 %3409, %v2945
        %v3411 = vpop.permute.xlu0 %3410
        %3412 = vset.pattern.permute.xlu0 0
        %3413 = vperm.xlu0 %3412, %v2946
        %v3414 = vpop.permute.xlu0 %3413
        %3415 = vset.pattern.permute.xlu0 0
        %3416 = vperm.xlu0 %3415, %v2947
        %v3417 = vpop.permute.xlu0 %3416
        %3418 = vset.pattern.permute.xlu0 0
        %3419 = vperm.xlu0 %3418, %v2948
        %v3420 = vpop.permute.xlu0 %3419
        %3421 = vset.pattern.permute.xlu0 0
        %3422 = vperm.xlu0 %3421, %v2949
        %v3423 = vpop.permute.xlu0 %3422
        %3424 = vset.pattern.permute.xlu0 0
        %3425 = vperm.xlu0 %3424, %v2950
        %v3426 = vpop.permute.xlu0 %3425
        %3427 = vset.pattern.permute.xlu0 0
        %3428 = vperm.xlu0 %3427, %v2951
        %v3429 = vpop.permute.xlu0 %3428
        %3430 = vset.pattern.permute.xlu0 0
        %3431 = vperm.xlu0 %3430, %v2952
        %v3432 = vpop.permute.xlu0 %3431
        %3433 = vset.pattern.permute.xlu0 0
        %3434 = vperm.xlu0 %3433, %v2953
        %v3435 = vpop.permute.xlu0 %3434
        %3436 = vset.pattern.permute.xlu0 0
        %3437 = vperm.xlu0 %3436, %v2954
        %v3438 = vpop.permute.xlu0 %3437
        %3439 = vset.pattern.permute.xlu0 0
        %3440 = vperm.xlu0 %3439, %v2955
        %v3441 = vpop.permute.xlu0 %3440
        %3442 = vset.pattern.permute.xlu0 0
        %3443 = vperm.xlu0 %3442, %v2956
        %v3444 = vpop.permute.xlu0 %3443
        %3445 = vset.pattern.permute.xlu0 0
        %3446 = vperm.xlu0 %3445, %v2957
        %v3447 = vpop.permute.xlu0 %3446
        %3448 = vset.pattern.permute.xlu0 0
        %3449 = vperm.xlu0 %3448, %v2958
        %v3450 = vpop.permute.xlu0 %3449
        %3451 = vset.pattern.permute.xlu0 0
        %3452 = vperm.xlu0 %3451, %v2959
        %v3453 = vpop.permute.xlu0 %3452
        %3454 = vset.pattern.permute.xlu0 0
        %3455 = vperm.xlu0 %3454, %v2960
        %v3456 = vpop.permute.xlu0 %3455
        %3457 = vset.pattern.permute.xlu0 0
        %3458 = vperm.xlu0 %3457, %v2961
        %v3459 = vpop.permute.xlu0 %3458
        %3460 = vset.pattern.permute.xlu0 0
        %3461 = vperm.xlu0 %3460, %v2962
        %v3462 = vpop.permute.xlu0 %3461
        %3463 = vset.pattern.permute.xlu0 0
        %3464 = vperm.xlu0 %3463, %v2963
        %v3465 = vpop.permute.xlu0 %3464
        %3466 = vset.pattern.permute.xlu0 0
        %3467 = vperm.xlu0 %3466, %v2964
        %v3468 = vpop.permute.xlu0 %3467
        %3469 = vset.pattern.permute.xlu0 0
        %3470 = vperm.xlu0 %3469, %v2965
        %v3471 = vpop.permute.xlu0 %3470
        %3472 = vset.pattern.permute.xlu0 0
        %3473 = vperm.xlu0 %3472, %v2966
        %v3474 = vpop.permute.xlu0 %3473
        %3475 = vset.pattern.permute.xlu0 0
        %3476 = vperm.xlu0 %3475, %v2967
        %v3477 = vpop.permute.xlu0 %3476
        %3478 = vset.pattern.permute.xlu0 0
        %3479 = vperm.xlu0 %3478, %v2968
        %v3480 = vpop.permute.xlu0 %3479
        %v3481 = vlaneseq
        %v3482 = vand.u32 %v3481, 127
        %v3483 = vperm.slane %v3099, %v3482
        %v3484 = vadd.s32 %v3482, 4294967288
        %v3485 = vperm.slane %v3102, %v3484
        %vm3486 = vcmask 130112
        %v3487 = vsel %vm3486, %v3485, %v3483
        %v3488 = vadd.s32 %v3482, 4294967280
        %v3489 = vperm.slane %v3105, %v3488
        %vm3490 = vcmask 195712
        %v3491 = vsel %vm3490, %v3489, %v3487
        %v3492 = vadd.s32 %v3482, 4294967272
        %v3493 = vperm.slane %v3108, %v3492
        %vm3494 = vcmask 261312
        %v3495 = vsel %vm3494, %v3493, %v3491
        %v3496 = vadd.s32 %v3482, 4294967264
        %v3497 = vperm.slane %v3111, %v3496
        %vm3498 = vcmask 326912
        %v3499 = vsel %vm3498, %v3497, %v3495
        %v3500 = vadd.s32 %v3482, 4294967256
        %v3501 = vperm.slane %v3114, %v3500
        %vm3502 = vcmask 392512
        %v3503 = vsel %vm3502, %v3501, %v3499
        %v3504 = vadd.s32 %v3482, 4294967248
        %v3505 = vperm.slane %v3117, %v3504
        %vm3506 = vcmask 458112
        %v3507 = vsel %vm3506, %v3505, %v3503
        %v3508 = vadd.s32 %v3482, 4294967240
        %v3509 = vperm.slane %v3120, %v3508
        %vm3510 = vcmask 523712
        %v3511 = vsel %vm3510, %v3509, %v3507
        %v3512 = vadd.s32 %v3482, 4294967232
        %v3513 = vperm.slane %v3123, %v3512
        %vm3514 = vcmask 589312
        %v3515 = vsel %vm3514, %v3513, %v3511
        %v3516 = vadd.s32 %v3482, 4294967224
        %v3517 = vperm.slane %v3126, %v3516
        %vm3518 = vcmask 654912
        %v3519 = vsel %vm3518, %v3517, %v3515
        %v3520 = vadd.s32 %v3482, 4294967216
        %v3521 = vperm.slane %v3129, %v3520
        %vm3522 = vcmask 720512
        %v3523 = vsel %vm3522, %v3521, %v3519
        %v3524 = vadd.s32 %v3482, 4294967208
        %v3525 = vperm.slane %v3132, %v3524
        %vm3526 = vcmask 786112
        %v3527 = vsel %vm3526, %v3525, %v3523
        %v3528 = vadd.s32 %v3482, 4294967200
        %v3529 = vperm.slane %v3135, %v3528
        %vm3530 = vcmask 851712
        %v3531 = vsel %vm3530, %v3529, %v3527
        %v3532 = vadd.s32 %v3482, 4294967192
        %v3533 = vperm.slane %v3138, %v3532
        %vm3534 = vcmask 917312
        %v3535 = vsel %vm3534, %v3533, %v3531
        %v3536 = vadd.s32 %v3482, 4294967184
        %v3537 = vperm.slane %v3141, %v3536
        %vm3538 = vcmask 982912
        %v3539 = vsel %vm3538, %v3537, %v3535
        %v3540 = vadd.s32 %v3482, 4294967176
        %v3541 = vperm.slane %v3144, %v3540
        %vm3542 = vcmask 1048512
        %v3543 = vsel %vm3542, %v3541, %v3539
        %v3544 = vperm.slane %v3147, %v3482
        %v3545 = vperm.slane %v3150, %v3484
        %v3546 = vsel %vm3486, %v3545, %v3544
        %v3547 = vperm.slane %v3153, %v3488
        %v3548 = vsel %vm3490, %v3547, %v3546
        %v3549 = vperm.slane %v3156, %v3492
        %v3550 = vsel %vm3494, %v3549, %v3548
        %v3551 = vperm.slane %v3159, %v3496
        %v3552 = vsel %vm3498, %v3551, %v3550
        %v3553 = vperm.slane %v3162, %v3500
        %v3554 = vsel %vm3502, %v3553, %v3552
        %v3555 = vperm.slane %v3165, %v3504
        %v3556 = vsel %vm3506, %v3555, %v3554
        %v3557 = vperm.slane %v3168, %v3508
        %v3558 = vsel %vm3510, %v3557, %v3556
        %v3559 = vperm.slane %v3171, %v3512
        %v3560 = vsel %vm3514, %v3559, %v3558
        %v3561 = vperm.slane %v3174, %v3516
        %v3562 = vsel %vm3518, %v3561, %v3560
        %v3563 = vperm.slane %v3177, %v3520
        %v3564 = vsel %vm3522, %v3563, %v3562
        %v3565 = vperm.slane %v3180, %v3524
        %v3566 = vsel %vm3526, %v3565, %v3564
        %v3567 = vperm.slane %v3183, %v3528
        %v3568 = vsel %vm3530, %v3567, %v3566
        %v3569 = vperm.slane %v3186, %v3532
        %v3570 = vsel %vm3534, %v3569, %v3568
        %v3571 = vperm.slane %v3189, %v3536
        %v3572 = vsel %vm3538, %v3571, %v3570
        %v3573 = vperm.slane %v3192, %v3540
        %v3574 = vsel %vm3542, %v3573, %v3572
        %v3575 = vperm.slane %v3195, %v3482
        %v3576 = vperm.slane %v3198, %v3484
        %v3577 = vsel %vm3486, %v3576, %v3575
        %v3578 = vperm.slane %v3201, %v3488
        %v3579 = vsel %vm3490, %v3578, %v3577
        %v3580 = vperm.slane %v3204, %v3492
        %v3581 = vsel %vm3494, %v3580, %v3579
        %v3582 = vperm.slane %v3207, %v3496
        %v3583 = vsel %vm3498, %v3582, %v3581
        %v3584 = vperm.slane %v3210, %v3500
        %v3585 = vsel %vm3502, %v3584, %v3583
        %v3586 = vperm.slane %v3213, %v3504
        %v3587 = vsel %vm3506, %v3586, %v3585
        %v3588 = vperm.slane %v3216, %v3508
        %v3589 = vsel %vm3510, %v3588, %v3587
        %v3590 = vperm.slane %v3219, %v3512
        %v3591 = vsel %vm3514, %v3590, %v3589
        %v3592 = vperm.slane %v3222, %v3516
        %v3593 = vsel %vm3518, %v3592, %v3591
        %v3594 = vperm.slane %v3225, %v3520
        %v3595 = vsel %vm3522, %v3594, %v3593
        %v3596 = vperm.slane %v3228, %v3524
        %v3597 = vsel %vm3526, %v3596, %v3595
        %v3598 = vperm.slane %v3231, %v3528
        %v3599 = vsel %vm3530, %v3598, %v3597
        %v3600 = vperm.slane %v3234, %v3532
        %v3601 = vsel %vm3534, %v3600, %v3599
        %v3602 = vperm.slane %v3237, %v3536
        %v3603 = vsel %vm3538, %v3602, %v3601
        %v3604 = vperm.slane %v3240, %v3540
        %v3605 = vsel %vm3542, %v3604, %v3603
        %v3606 = vperm.slane %v3243, %v3482
        %v3607 = vperm.slane %v3246, %v3484
        %v3608 = vsel %vm3486, %v3607, %v3606
        %v3609 = vperm.slane %v3249, %v3488
        %v3610 = vsel %vm3490, %v3609, %v3608
        %v3611 = vperm.slane %v3252, %v3492
        %v3612 = vsel %vm3494, %v3611, %v3610
        %v3613 = vperm.slane %v3255, %v3496
        %v3614 = vsel %vm3498, %v3613, %v3612
        %v3615 = vperm.slane %v3258, %v3500
        %v3616 = vsel %vm3502, %v3615, %v3614
        %v3617 = vperm.slane %v3261, %v3504
        %v3618 = vsel %vm3506, %v3617, %v3616
        %v3619 = vperm.slane %v3264, %v3508
        %v3620 = vsel %vm3510, %v3619, %v3618
        %v3621 = vperm.slane %v3267, %v3512
        %v3622 = vsel %vm3514, %v3621, %v3620
        %v3623 = vperm.slane %v3270, %v3516
        %v3624 = vsel %vm3518, %v3623, %v3622
        %v3625 = vperm.slane %v3273, %v3520
        %v3626 = vsel %vm3522, %v3625, %v3624
        %v3627 = vperm.slane %v3276, %v3524
        %v3628 = vsel %vm3526, %v3627, %v3626
        %v3629 = vperm.slane %v3279, %v3528
        %v3630 = vsel %vm3530, %v3629, %v3628
        %v3631 = vperm.slane %v3282, %v3532
        %v3632 = vsel %vm3534, %v3631, %v3630
        %v3633 = vperm.slane %v3285, %v3536
        %v3634 = vsel %vm3538, %v3633, %v3632
        %v3635 = vperm.slane %v3288, %v3540
        %v3636 = vsel %vm3542, %v3635, %v3634
        %v3637 = vperm.slane %v3291, %v3482
        %v3638 = vperm.slane %v3294, %v3484
        %v3639 = vsel %vm3486, %v3638, %v3637
        %v3640 = vperm.slane %v3297, %v3488
        %v3641 = vsel %vm3490, %v3640, %v3639
        %v3642 = vperm.slane %v3300, %v3492
        %v3643 = vsel %vm3494, %v3642, %v3641
        %v3644 = vperm.slane %v3303, %v3496
        %v3645 = vsel %vm3498, %v3644, %v3643
        %v3646 = vperm.slane %v3306, %v3500
        %v3647 = vsel %vm3502, %v3646, %v3645
        %v3648 = vperm.slane %v3309, %v3504
        %v3649 = vsel %vm3506, %v3648, %v3647
        %v3650 = vperm.slane %v3312, %v3508
        %v3651 = vsel %vm3510, %v3650, %v3649
        %v3652 = vperm.slane %v3315, %v3512
        %v3653 = vsel %vm3514, %v3652, %v3651
        %v3654 = vperm.slane %v3318, %v3516
        %v3655 = vsel %vm3518, %v3654, %v3653
        %v3656 = vperm.slane %v3321, %v3520
        %v3657 = vsel %vm3522, %v3656, %v3655
        %v3658 = vperm.slane %v3324, %v3524
        %v3659 = vsel %vm3526, %v3658, %v3657
        %v3660 = vperm.slane %v3327, %v3528
        %v3661 = vsel %vm3530, %v3660, %v3659
        %v3662 = vperm.slane %v3330, %v3532
        %v3663 = vsel %vm3534, %v3662, %v3661
        %v3664 = vperm.slane %v3333, %v3536
        %v3665 = vsel %vm3538, %v3664, %v3663
        %v3666 = vperm.slane %v3336, %v3540
        %v3667 = vsel %vm3542, %v3666, %v3665
        %v3668 = vperm.slane %v3339, %v3482
        %v3669 = vperm.slane %v3342, %v3484
        %v3670 = vsel %vm3486, %v3669, %v3668
        %v3671 = vperm.slane %v3345, %v3488
        %v3672 = vsel %vm3490, %v3671, %v3670
        %v3673 = vperm.slane %v3348, %v3492
        %v3674 = vsel %vm3494, %v3673, %v3672
        %v3675 = vperm.slane %v3351, %v3496
        %v3676 = vsel %vm3498, %v3675, %v3674
        %v3677 = vperm.slane %v3354, %v3500
        %v3678 = vsel %vm3502, %v3677, %v3676
        %v3679 = vperm.slane %v3357, %v3504
        %v3680 = vsel %vm3506, %v3679, %v3678
        %v3681 = vperm.slane %v3360, %v3508
        %v3682 = vsel %vm3510, %v3681, %v3680
        %v3683 = vperm.slane %v3363, %v3512
        %v3684 = vsel %vm3514, %v3683, %v3682
        %v3685 = vperm.slane %v3366, %v3516
        %v3686 = vsel %vm3518, %v3685, %v3684
        %v3687 = vperm.slane %v3369, %v3520
        %v3688 = vsel %vm3522, %v3687, %v3686
        %v3689 = vperm.slane %v3372, %v3524
        %v3690 = vsel %vm3526, %v3689, %v3688
        %v3691 = vperm.slane %v3375, %v3528
        %v3692 = vsel %vm3530, %v3691, %v3690
        %v3693 = vperm.slane %v3378, %v3532
        %v3694 = vsel %vm3534, %v3693, %v3692
        %v3695 = vperm.slane %v3381, %v3536
        %v3696 = vsel %vm3538, %v3695, %v3694
        %v3697 = vperm.slane %v3384, %v3540
        %v3698 = vsel %vm3542, %v3697, %v3696
        %v3699 = vperm.slane %v3387, %v3482
        %v3700 = vperm.slane %v3390, %v3484
        %v3701 = vsel %vm3486, %v3700, %v3699
        %v3702 = vperm.slane %v3393, %v3488
        %v3703 = vsel %vm3490, %v3702, %v3701
        %v3704 = vperm.slane %v3396, %v3492
        %v3705 = vsel %vm3494, %v3704, %v3703
        %v3706 = vperm.slane %v3399, %v3496
        %v3707 = vsel %vm3498, %v3706, %v3705
        %v3708 = vperm.slane %v3402, %v3500
        %v3709 = vsel %vm3502, %v3708, %v3707
        %v3710 = vperm.slane %v3405, %v3504
        %v3711 = vsel %vm3506, %v3710, %v3709
        %v3712 = vperm.slane %v3408, %v3508
        %v3713 = vsel %vm3510, %v3712, %v3711
        %v3714 = vperm.slane %v3411, %v3512
        %v3715 = vsel %vm3514, %v3714, %v3713
        %v3716 = vperm.slane %v3414, %v3516
        %v3717 = vsel %vm3518, %v3716, %v3715
        %v3718 = vperm.slane %v3417, %v3520
        %v3719 = vsel %vm3522, %v3718, %v3717
        %v3720 = vperm.slane %v3420, %v3524
        %v3721 = vsel %vm3526, %v3720, %v3719
        %v3722 = vperm.slane %v3423, %v3528
        %v3723 = vsel %vm3530, %v3722, %v3721
        %v3724 = vperm.slane %v3426, %v3532
        %v3725 = vsel %vm3534, %v3724, %v3723
        %v3726 = vperm.slane %v3429, %v3536
        %v3727 = vsel %vm3538, %v3726, %v3725
        %v3728 = vperm.slane %v3432, %v3540
        %v3729 = vsel %vm3542, %v3728, %v3727
        %v3730 = vperm.slane %v3435, %v3482
        %v3731 = vperm.slane %v3438, %v3484
        %v3732 = vsel %vm3486, %v3731, %v3730
        %v3733 = vperm.slane %v3441, %v3488
        %v3734 = vsel %vm3490, %v3733, %v3732
        %v3735 = vperm.slane %v3444, %v3492
        %v3736 = vsel %vm3494, %v3735, %v3734
        %v3737 = vperm.slane %v3447, %v3496
        %v3738 = vsel %vm3498, %v3737, %v3736
        %v3739 = vperm.slane %v3450, %v3500
        %v3740 = vsel %vm3502, %v3739, %v3738
        %v3741 = vperm.slane %v3453, %v3504
        %v3742 = vsel %vm3506, %v3741, %v3740
        %v3743 = vperm.slane %v3456, %v3508
        %v3744 = vsel %vm3510, %v3743, %v3742
        %v3745 = vperm.slane %v3459, %v3512
        %v3746 = vsel %vm3514, %v3745, %v3744
        %v3747 = vperm.slane %v3462, %v3516
        %v3748 = vsel %vm3518, %v3747, %v3746
        %v3749 = vperm.slane %v3465, %v3520
        %v3750 = vsel %vm3522, %v3749, %v3748
        %v3751 = vperm.slane %v3468, %v3524
        %v3752 = vsel %vm3526, %v3751, %v3750
        %v3753 = vperm.slane %v3471, %v3528
        %v3754 = vsel %vm3530, %v3753, %v3752
        %v3755 = vperm.slane %v3474, %v3532
        %v3756 = vsel %vm3534, %v3755, %v3754
        %v3757 = vperm.slane %v3477, %v3536
        %v3758 = vsel %vm3538, %v3757, %v3756
        %v3759 = vperm.slane %v3480, %v3540
        %v3760 = vsel %vm3542, %v3759, %v3758
        %vm3761 = vcmask 1041409
        %v3762 = vsel %vm3761, %v3574, %v3543
        %vm3763 = vcmask 1042434
        %v3764 = vsel %vm3763, %v3605, %v3762
        %vm3765 = vcmask 1043459
        %v3766 = vsel %vm3765, %v3636, %v3764
        %vm3767 = vcmask 1044484
        %v3768 = vsel %vm3767, %v3667, %v3766
        %vm3769 = vcmask 1045509
        %v3770 = vsel %vm3769, %v3698, %v3768
        %vm3771 = vcmask 1046534
        %v3772 = vsel %vm3771, %v3729, %v3770
        %vm3773 = vcmask 1047559
        %v3774 = vsel %vm3773, %v3760, %v3772
        %3776 = vst [vmem:[%s152] sm:$0xff] %v3774
        %s3777 = sand.u32 %s68, 1
        %s3778 = scalar_lea.sflag [#allocation4], %s3777
        %s3779 = sand.u32 %s68, 1
        %s3780 = smul.addr %s3779, 8
        %s3781 = scalar_lea.vmem [#allocation5], %s3780
        // Predicated region
        $region29: #{tpu_custom_call.1} parent=23 // pred_check
          %p3782 = pneg %p78
        $region30: #{tpu_custom_call.1} parent=23 // pred_check_branch
          %3784 = sbr.rel (%p3782) target = $region32
        $region31: #{tpu_custom_call.1} parent=23 // pred_region
          %3786 = vsyncadd %s3778, 0
          %s3787 = smul.addr %s22, 4
          %s3788 = sadd.s32 %s23, %s3787
          %s3789 = smul.addr %s3788, 8
          %s3790 = scalar_lea.hbm %s1, %s3789
          %s3792 = sshll.u32 %s3781, 4
          %s3793 = int_to_ptr.vmem [resolvable:$true] %s3792
          %s3794 = sshll.u32 %s3790, 4
          %s3795 = int_to_ptr.hbm [resolvable:$true] %s3794
          %3797 = dma.vmem_to_hbm [thread:$0]  %s3793, 128, %s3795, %s3778
        $region32: #{tpu_custom_call.1} parent=23 // pred_fallthru
          _
      $region24: #{tpu_custom_call.1} parent=5 // pred_fallthru
        _
      %p3798 = scmp.le.s32.totalorder 2, %s13
      // Predicated region
      $region33: #{tpu_custom_call.1} parent=5 // pred_check
        %p3799 = pneg %p3798
      $region34: #{tpu_custom_call.1} parent=5 // pred_check_branch
        %3801 = sbr.rel (%p3799) target = $region36
      $region35: #{tpu_custom_call.1} parent=5 // pred_region
        %s3802 = ssub.s32 %s13, 2
        // Predicated region
        $region37: #{tpu_custom_call.1} parent=35 // pred_check
          %p3803 = pneg %p84
        $region38: #{tpu_custom_call.1} parent=35 // pred_check_branch
          %3805 = sbr.rel (%p3803) target = $region40
        $region39: #{tpu_custom_call.1} parent=35 // pred_region
          %s3806 = sand.u32 %s69, 1
          %s3807 = scalar_lea.sflag [#allocation4], %s3806
          %s3808 = sand.u32 %s69, 1
          %s3809 = smul.addr %s3808, 8
          %s3810 = scalar_lea.vmem [#allocation5], %s3809
          %3812 = dma.done %s3807, 128
        $region40: #{tpu_custom_call.1} parent=35 // pred_fallthru
          _
      $region36: #{tpu_custom_call.1} parent=5 // pred_fallthru
        _
    $region6: #{tpu_custom_call.1} parent=1 // loop_footer
      %s17 = sadd.s32 1, %s13
    $region7: #{tpu_custom_call.1} parent=1 // loop_footer_branch
      %12 = sbr.rel target = $region3
    $region8: #{tpu_custom_call.1} parent=1 // loop_exit
      _
    %3813 = vsyncpa [#allocation3], 1
    %s3814 = scalar_lea.sflag [#allocation3], 1
    %3815 = vsyncpa %s3814, 1
    %3816 = vsyncpa [#allocation4], 1
    %s3817 = scalar_lea.sflag [#allocation4], 1
    %3818 = vsyncpa %s3817, 1

// kernel: tpu_custom_call.1
$region0: #{tpu_custom_call.1}
  #allocation0 [shape = 'u32[]', space=smem, size = 0x4, offset = 0x4, fixed_abs, tag = 'smem constant byte address 0x4 - core index']
  #allocation1 [shape = 'u32[72,128]{1,0:T(1,128)}', space=vmem, size = 0x9000, scoped, tag = 'internal scratch']
  %s0 = inlined_call_operand.hbm [shape: f32[2,8,8192], index: 0, kind: input, shape index: {}]
  %s1 = inlined_call_operand.hbm [shape: f32[8,8192], index: 1, kind: output, shape index: {}]
  %s2 = sld [smem:[#allocation0]]
  $region41: #{tpu_custom_call.1} parent=0
    _
  %s4 = ssub.s32 1, %s2
  %s5 = scalar_select 0, %s4, %s2
  $region1: #{tpu_custom_call.1} parent=0
    #allocation2 [shape = 'u8[524288]{0}', space=vmem, size = 0x80000, scoped, tag = 'input window, operand 0']
    #allocation3 [shape = 's32[2]{0}', space=sflag, size = 0x8, scoped, tag = 'scoped memory for tpu_custom_call.1']
    #allocation4 [shape = 's32[2]{0}', space=sflag, size = 0x8, scoped, tag = 'scoped memory for tpu_custom_call.1']
    #allocation5 [shape = 'u8[262144]{0}', space=vmem, size = 0x40000, scoped, tag = 'output window, operand 0']
    %6 = vsyncpa [#allocation3], 0
    %s7 = scalar_lea.sflag [#allocation3], 1
    %8 = vsyncpa %s7, 0
    %9 = vsyncpa [#allocation4], 0
    %s10 = scalar_lea.sflag [#allocation4], 1
    %11 = vsyncpa %s10, 0
    loop: start=0, step=1, limit=4
    $region2: #{tpu_custom_call.1} parent=1 // loop_pre_header
      _
    $region3: #{tpu_custom_call.1} parent=1 // loop_header
      %s13 = sphi 0, %s17
      %p14 = scmp.ge.s32.totalorder %s13, 4
      %s20 = sphi 0, %s32
      %s21 = sphi 0, %s28
      %s22 = sphi 0, %s20
      %s23 = sphi 0, %s21
      %s24 = sphi 0, %s22
      %s25 = sphi 0, %s23
      %s37 = sphi 0, %s39
      %s40 = sphi 0, %s37
      %s41 = sphi 0, %s40
      %s57 = sphi 0, %s41
      %s65 = sphi 0, %s67
      %s68 = sphi 0, %s65
      %s69 = sphi 0, %s68
      %s85 = sphi 0, %s69
    $region4: #{tpu_custom_call.1} parent=1 // loop_header_branch
      %16 = sbr.rel (%p14) target = $region8
    $region5: #{tpu_custom_call.1} parent=1 // loop_body
      %s18 = ssub.s32 %s13, 1
      %s19 = ssub.s32 %s13, 2
      %s26 = sadd.s32 1, %s21
      %p27 = scmp.ge.s32.totalorder %s26, 2
      %s28 = scalar_select %p27, 0, %s26
      %s29 = sadd.s32 1, %s20
      %s30 = scalar_select %p27, %s29, %s20
      %p31 = scmp.ge.s32.totalorder %s30, 1
      %s32 = scalar_select %p31, 0, %s30
      %s33 = ssub.s32 %s20, %s32
      %s34 = ssub.s32 %s21, %s28
      %s35 = sor.u32 %s33, %s34
      %p36 = scmp.eq.s32.totalorder %s35, 0
      %s38 = sadd.s32 %s37, 1
      %s39 = scalar_select %p36, %s37, %s38
      %p42 = pneg %p36
      %p43 = scmp.eq.s32.totalorder %s13, 1
      %p44 = por %p42, %p43
      %p45 = scmp.ne.s32.totalorder %s37, %s40
      %p46 = scmp.eq.s32.totalorder %s13, 0
      %p47 = por %p45, %p46
      %p48 = scmp.ne.s32.totalorder %s37, %s40
      %p49 = scmp.eq.s32.totalorder %s18, 1
      %p50 = por %p48, %p49
      %p51 = scmp.ne.s32.totalorder %s40, %s41
      %p52 = scmp.eq.s32.totalorder %s18, 0
      %p53 = por %p51, %p52
      %p54 = scmp.ne.s32.totalorder %s40, %s41
      %p55 = scmp.eq.s32.totalorder %s19, 1
      %p56 = por %p54, %p55
      %p58 = scmp.ne.s32.totalorder %s41, %s57
      %p59 = scmp.eq.s32.totalorder %s19, 0
      %p60 = por %p58, %p59
      %s61 = ssub.s32 %s20, %s32
      %s62 = ssub.s32 %s21, %s28
      %s63 = sor.u32 %s61, %s62
      %p64 = scmp.eq.s32.totalorder %s63, 0
      %s66 = sadd.s32 %s65, 1
      %s67 = scalar_select %p64, %s65, %s66
      %p70 = pneg %p64
      %p71 = scmp.eq.s32.totalorder %s13, 1
      %p72 = por %p70, %p71
      %p73 = scmp.ne.s32.totalorder %s65, %s68
      %p74 = scmp.eq.s32.totalorder %s13, 0
      %p75 = por %p73, %p74
      %p76 = scmp.ne.s32.totalorder %s65, %s68
      %p77 = scmp.eq.s32.totalorder %s18, 1
      %p78 = por %p76, %p77
      %p79 = scmp.ne.s32.totalorder %s68, %s69
      %p80 = scmp.eq.s32.totalorder %s18, 0
      %p81 = por %p79, %p80
      %p82 = scmp.ne.s32.totalorder %s68, %s69
      %p83 = scmp.eq.s32.totalorder %s19, 1
      %p84 = por %p82, %p83
      %p86 = scmp.ne.s32.totalorder %s69, %s85
      %p87 = scmp.eq.s32.totalorder %s19, 0
      %p88 = por %p86, %p87
      %p89 = scmp.le.s32.totalorder 1, %s13
      %p90 = scmp.lt.s32.totalorder %s13, 3
      %p91 = pnand %p89, %p90
      %p92 = pneg %p91
      // Predicated region
      $region9: #{tpu_custom_call.1} parent=5 // pred_check
        _
      $region10: #{tpu_custom_call.1} parent=5 // pred_check_branch
        %94 = sbr.rel (%p91) target = $region12
      $region11: #{tpu_custom_call.1} parent=5 // pred_region
        %s95 = ssub.s32 %s13, 1
      $region12: #{tpu_custom_call.1} parent=5 // pred_fallthru
        _
      %p96 = scmp.lt.s32.totalorder %s13, 2
      // Predicated region
      $region13: #{tpu_custom_call.1} parent=5 // pred_check
        %p97 = pneg %p96
      $region14: #{tpu_custom_call.1} parent=5 // pred_check_branch
        %99 = sbr.rel (%p97) target = $region16
      $region15: #{tpu_custom_call.1} parent=5 // pred_region
        // Predicated region
        $region17: #{tpu_custom_call.1} parent=15 // pred_check
          %p100 = pneg %p47
        $region18: #{tpu_custom_call.1} parent=15 // pred_check_branch
          %102 = sbr.rel (%p100) target = $region20
        $region19: #{tpu_custom_call.1} parent=15 // pred_region
          %s103 = sand.u32 %s37, 1
          %s104 = scalar_lea.sflag [#allocation3], %s103
          %s105 = sand.u32 %s37, 1
          %s106 = smul.addr %s105, 512
          %s107 = scalar_lea.vmem [#allocation2], %s106
          %s108 = smul.u32 32, %s21
          %110 = vsyncadd %s104, 0
          %s111 = smul.addr %s20, 64
          %s112 = sadd.s32 %s108, %s111
          %s113 = smul.addr %s112, 8
          %s114 = scalar_lea.hbm %s0, %s113
          %s115 = sshll.u32 %s114, 4
          %s116 = int_to_ptr.hbm [resolvable:$true] %s115
          %s117 = sshll.u32 %s107, 4
          %s118 = int_to_ptr.vmem [resolvable:$true] %s117
          %123 = dma.hbm_to_vmem [thread:$0]  %s116, 8192, %s118, %s104, 8192, 4096, 256
        $region20: #{tpu_custom_call.1} parent=15 // pred_fallthru
          _
      $region16: #{tpu_custom_call.1} parent=5 // pred_fallthru
        _
      %p124 = scmp.le.s32.totalorder 1, %s13
      %p125 = scmp.lt.s32.totalorder %s13, 3
      %p126 = pnand %p124, %p125
      %p127 = pneg %p126
      // Predicated region
      $region21: #{tpu_custom_call.1} parent=5 // pred_check
        _
      $region22: #{tpu_custom_call.1} parent=5 // pred_check_branch
        %129 = sbr.rel (%p126) target = $region24
      $region23: #{tpu_custom_call.1} parent=5 // pred_region
        %s130 = ssub.s32 %s13, 1
        %s131 = sand.u32 %s40, 1
        %s132 = scalar_lea.sflag [#allocation3], %s131
        %s133 = sand.u32 %s40, 1
        %s134 = smul.addr %s133, 512
        %s135 = scalar_lea.vmem [#allocation2], %s134
        // Predicated region
        $region25: #{tpu_custom_call.1} parent=23 // pred_check
          %p136 = pneg %p53
        $region26: #{tpu_custom_call.1} parent=23 // pred_check_branch
          %138 = sbr.rel (%p136) target = $region28
        $region27: #{tpu_custom_call.1} parent=23 // pred_region
          %140 = dma.done %s132, 8192
        $region28: #{tpu_custom_call.1} parent=23 // pred_fallthru
          _
        %s141 = sand.u32 %s40, 1
        %s142 = scalar_lea.sflag [#allocation3], %s141
        %s143 = sand.u32 %s40, 1
        %s144 = smul.addr %s143, 512
        %s145 = scalar_lea.vmem [#allocation2], %s144
        %p146 = pneg %p53
        %p147 = pneg %p50
        %p148 = pneg %p81
        %p149 = pneg %p78
        %s150 = sand.u32 %s68, 1
        %s151 = scalar_lea.sflag [#allocation4], %s150
        %s152 = sand.u32 %s68, 1
        %s153 = smul.addr %s152, 256
        %s154 = scalar_lea.vmem [#allocation5], %s153
        %s155 = smul.u32 32, %s23
        %s156 = smul.u32 32, %s23
        %v157 = vld [vmem:[%s135] sm:$0xff]
        %v158 = vld [vmem:[%s135 + $0x8] sm:$0xff]
        %v159 = vld [vmem:[%s135 + $0x10] sm:$0xff]
        %v160 = vld [vmem:[%s135 + $0x18] sm:$0xff]
        %v161 = vld [vmem:[%s135 + $0x20] sm:$0xff]
        %v162 = vld [vmem:[%s135 + $0x28] sm:$0xff]
        %v163 = vld [vmem:[%s135 + $0x30] sm:$0xff]
        %v164 = vld [vmem:[%s135 + $0x38] sm:$0xff]
        %v165 = vld [vmem:[%s135 + $0x40] sm:$0xff]
        %v166 = vld [vmem:[%s135 + $0x48] sm:$0xff]
        %v167 = vld [vmem:[%s135 + $0x50] sm:$0xff]
        %v168 = vld [vmem:[%s135 + $0x58] sm:$0xff]
        %v169 = vld [vmem:[%s135 + $0x60] sm:$0xff]
        %v170 = vld [vmem:[%s135 + $0x68] sm:$0xff]
        %v171 = vld [vmem:[%s135 + $0x70] sm:$0xff]
        %v172 = vld [vmem:[%s135 + $0x78] sm:$0xff]
        %v173 = vld [vmem:[%s135 + $0x80] sm:$0xff]
        %v174 = vld [vmem:[%s135 + $0x88] sm:$0xff]
        %v175 = vld [vmem:[%s135 + $0x90] sm:$0xff]
        %v176 = vld [vmem:[%s135 + $0x98] sm:$0xff]
        %v177 = vld [vmem:[%s135 + $0xa0] sm:$0xff]
        %v178 = vld [vmem:[%s135 + $0xa8] sm:$0xff]
        %v179 = vld [vmem:[%s135 + $0xb0] sm:$0xff]
        %v180 = vld [vmem:[%s135 + $0xb8] sm:$0xff]
        %v181 = vld [vmem:[%s135 + $0xc0] sm:$0xff]
        %v182 = vld [vmem:[%s135 + $0xc8] sm:$0xff]
        %v183 = vld [vmem:[%s135 + $0xd0] sm:$0xff]
        %v184 = vld [vmem:[%s135 + $0xd8] sm:$0xff]
        %v185 = vld [vmem:[%s135 + $0xe0] sm:$0xff]
        %v186 = vld [vmem:[%s135 + $0xe8] sm:$0xff]
        %v187 = vld [vmem:[%s135 + $0xf0] sm:$0xff]
        %v188 = vld [vmem:[%s135 + $0xf8] sm:$0xff]
        %s189 = scalar_lea.vmem %s135, 256 [#allocation2]
        %v190 = vld [vmem:[%s189] sm:$0xff]
        %v191 = vld [vmem:[%s189 + $0x8] sm:$0xff]
        %v192 = vld [vmem:[%s189 + $0x10] sm:$0xff]
        %v193 = vld [vmem:[%s189 + $0x18] sm:$0xff]
        %v194 = vld [vmem:[%s189 + $0x20] sm:$0xff]
        %v195 = vld [vmem:[%s189 + $0x28] sm:$0xff]
        %v196 = vld [vmem:[%s189 + $0x30] sm:$0xff]
        %v197 = vld [vmem:[%s189 + $0x38] sm:$0xff]
        %v198 = vld [vmem:[%s189 + $0x40] sm:$0xff]
        %v199 = vld [vmem:[%s189 + $0x48] sm:$0xff]
        %v200 = vld [vmem:[%s189 + $0x50] sm:$0xff]
        %v201 = vld [vmem:[%s189 + $0x58] sm:$0xff]
        %v202 = vld [vmem:[%s189 + $0x60] sm:$0xff]
        %v203 = vld [vmem:[%s189 + $0x68] sm:$0xff]
        %v204 = vld [vmem:[%s189 + $0x70] sm:$0xff]
        %v205 = vld [vmem:[%s189 + $0x78] sm:$0xff]
        %v206 = vld [vmem:[%s189 + $0x80] sm:$0xff]
        %v207 = vld [vmem:[%s189 + $0x88] sm:$0xff]
        %v208 = vld [vmem:[%s189 + $0x90] sm:$0xff]
        %v209 = vld [vmem:[%s189 + $0x98] sm:$0xff]
        %v210 = vld [vmem:[%s189 + $0xa0] sm:$0xff]
        %v211 = vld [vmem:[%s189 + $0xa8] sm:$0xff]
        %v212 = vld [vmem:[%s189 + $0xb0] sm:$0xff]
        %v213 = vld [vmem:[%s189 + $0xb8] sm:$0xff]
        %v214 = vld [vmem:[%s189 + $0xc0] sm:$0xff]
        %v215 = vld [vmem:[%s189 + $0xc8] sm:$0xff]
        %v216 = vld [vmem:[%s189 + $0xd0] sm:$0xff]
        %v217 = vld [vmem:[%s189 + $0xd8] sm:$0xff]
        %v218 = vld [vmem:[%s189 + $0xe0] sm:$0xff]
        %v219 = vld [vmem:[%s189 + $0xe8] sm:$0xff]
        %v220 = vld [vmem:[%s189 + $0xf0] sm:$0xff]
        %v221 = vld [vmem:[%s189 + $0xf8] sm:$0xff]
        %v222 = vsub.f32 %v157, %v190
        %v223 = vsub.f32 %v158, %v191
        %v224 = vsub.f32 %v159, %v192
        %v225 = vsub.f32 %v160, %v193
        %v226 = vsub.f32 %v161, %v194
        %v227 = vsub.f32 %v162, %v195
        %v228 = vsub.f32 %v163, %v196
        %v229 = vsub.f32 %v164, %v197
        %v230 = vsub.f32 %v165, %v198
        %v231 = vsub.f32 %v166, %v199
        %v232 = vsub.f32 %v167, %v200
        %v233 = vsub.f32 %v168, %v201
        %v234 = vsub.f32 %v169, %v202
        %v235 = vsub.f32 %v170, %v203
        %v236 = vsub.f32 %v171, %v204
        %v237 = vsub.f32 %v172, %v205
        %v238 = vsub.f32 %v173, %v206
        %v239 = vsub.f32 %v174, %v207
        %v240 = vsub.f32 %v175, %v208
        %v241 = vsub.f32 %v176, %v209
        %v242 = vsub.f32 %v177, %v210
        %v243 = vsub.f32 %v178, %v211
        %v244 = vsub.f32 %v179, %v212
        %v245 = vsub.f32 %v180, %v213
        %v246 = vsub.f32 %v181, %v214
        %v247 = vsub.f32 %v182, %v215
        %v248 = vsub.f32 %v183, %v216
        %v249 = vsub.f32 %v184, %v217
        %v250 = vsub.f32 %v185, %v218
        %v251 = vsub.f32 %v186, %v219
        %v252 = vsub.f32 %v187, %v220
        %v253 = vsub.f32 %v188, %v221
        %254 = vst [vmem:[%s154] sm:$0xff] %v222
        %255 = vst [vmem:[%s154 + $0x8] sm:$0xff] %v223
        %256 = vst [vmem:[%s154 + $0x10] sm:$0xff] %v224
        %257 = vst [vmem:[%s154 + $0x18] sm:$0xff] %v225
        %258 = vst [vmem:[%s154 + $0x20] sm:$0xff] %v226
        %259 = vst [vmem:[%s154 + $0x28] sm:$0xff] %v227
        %260 = vst [vmem:[%s154 + $0x30] sm:$0xff] %v228
        %261 = vst [vmem:[%s154 + $0x38] sm:$0xff] %v229
        %262 = vst [vmem:[%s154 + $0x40] sm:$0xff] %v230
        %263 = vst [vmem:[%s154 + $0x48] sm:$0xff] %v231
        %264 = vst [vmem:[%s154 + $0x50] sm:$0xff] %v232
        %265 = vst [vmem:[%s154 + $0x58] sm:$0xff] %v233
        %266 = vst [vmem:[%s154 + $0x60] sm:$0xff] %v234
        %267 = vst [vmem:[%s154 + $0x68] sm:$0xff] %v235
        %268 = vst [vmem:[%s154 + $0x70] sm:$0xff] %v236
        %269 = vst [vmem:[%s154 + $0x78] sm:$0xff] %v237
        %270 = vst [vmem:[%s154 + $0x80] sm:$0xff] %v238
        %271 = vst [vmem:[%s154 + $0x88] sm:$0xff] %v239
        %272 = vst [vmem:[%s154 + $0x90] sm:$0xff] %v240
        %273 = vst [vmem:[%s154 + $0x98] sm:$0xff] %v241
        %274 = vst [vmem:[%s154 + $0xa0] sm:$0xff] %v242
        %275 = vst [vmem:[%s154 + $0xa8] sm:$0xff] %v243
        %276 = vst [vmem:[%s154 + $0xb0] sm:$0xff] %v244
        %277 = vst [vmem:[%s154 + $0xb8] sm:$0xff] %v245
        %278 = vst [vmem:[%s154 + $0xc0] sm:$0xff] %v246
        %279 = vst [vmem:[%s154 + $0xc8] sm:$0xff] %v247
        %280 = vst [vmem:[%s154 + $0xd0] sm:$0xff] %v248
        %281 = vst [vmem:[%s154 + $0xd8] sm:$0xff] %v249
        %282 = vst [vmem:[%s154 + $0xe0] sm:$0xff] %v250
        %283 = vst [vmem:[%s154 + $0xe8] sm:$0xff] %v251
        %284 = vst [vmem:[%s154 + $0xf0] sm:$0xff] %v252
        %285 = vst [vmem:[%s154 + $0xf8] sm:$0xff] %v253
        %s286 = sand.u32 %s68, 1
        %s287 = scalar_lea.sflag [#allocation4], %s286
        %s288 = sand.u32 %s68, 1
        %s289 = smul.addr %s288, 256
        %s290 = scalar_lea.vmem [#allocation5], %s289
        // Predicated region
        $region29: #{tpu_custom_call.1} parent=23 // pred_check
          %p291 = pneg %p78
        $region30: #{tpu_custom_call.1} parent=23 // pred_check_branch
          %293 = sbr.rel (%p291) target = $region32
        $region31: #{tpu_custom_call.1} parent=23 // pred_region
          %s294 = smul.u32 32, %s23
          %296 = vsyncadd %s287, 0
          %s297 = smul.addr %s22, 64
          %s298 = sadd.s32 %s294, %s297
          %s299 = smul.addr %s298, 8
          %s300 = scalar_lea.hbm %s1, %s299
          %s302 = sshll.u32 %s290, 4
          %s303 = int_to_ptr.vmem [resolvable:$true] %s302
          %s304 = sshll.u32 %s300, 4
          %s305 = int_to_ptr.hbm [resolvable:$true] %s304
          %307 = dma.vmem_to_hbm [thread:$0]  %s303, 4096, %s305, %s287
        $region32: #{tpu_custom_call.1} parent=23 // pred_fallthru
          _
      $region24: #{tpu_custom_call.1} parent=5 // pred_fallthru
        _
      %p308 = scmp.le.s32.totalorder 2, %s13
      // Predicated region
      $region33: #{tpu_custom_call.1} parent=5 // pred_check
        %p309 = pneg %p308
      $region34: #{tpu_custom_call.1} parent=5 // pred_check_branch
        %311 = sbr.rel (%p309) target = $region36
      $region35: #{tpu_custom_call.1} parent=5 // pred_region
        %s312 = ssub.s32 %s13, 2
        // Predicated region
        $region37: #{tpu_custom_call.1} parent=35 // pred_check
          %p313 = pneg %p84
        $region38: #{tpu_custom_call.1} parent=35 // pred_check_branch
          %315 = sbr.rel (%p313) target = $region40
        $region39: #{tpu_custom_call.1} parent=35 // pred_region
          %s316 = sand.u32 %s69, 1
          %s317 = scalar_lea.sflag [#allocation4], %s316
          %s318 = sand.u32 %s69, 1
          %s319 = smul.addr %s318, 256
          %s320 = scalar_lea.vmem [#allocation5], %s319
          %322 = dma.done %s317, 4096
        $region40: #{tpu_custom_call.1} parent=35 // pred_fallthru
          _
      $region36: #{tpu_custom_call.1} parent=5 // pred_fallthru
        _
    $region6: #{tpu_custom_call.1} parent=1 // loop_footer
      %s17 = sadd.s32 1, %s13
    $region7: #{tpu_custom_call.1} parent=1 // loop_footer_branch
      %12 = sbr.rel target = $region3
    $region8: #{tpu_custom_call.1} parent=1 // loop_exit
      _
    %323 = vsyncpa [#allocation3], 1
    %s324 = scalar_lea.sflag [#allocation3], 1
    %325 = vsyncpa %s324, 1
    %326 = vsyncpa [#allocation4], 1
    %s327 = scalar_lea.sflag [#allocation4], 1
    %328 = vsyncpa %s327, 1

</llo_original>
